<compile_context>
chip_gen: v5e
topology: v5e:2x2
jax: 0.10.0
libtpu: 0.0.40
codegen_flags: <defaults>
</compile_context>

<pallas_src>
import functools

import numpy as np

import jax
import jax.numpy as jnp
from jax.experimental import pallas as pl
from jax.experimental.pallas import tpu as pltpu


_LANE = 128                      # TPU lane width
_NEG_INF = -1e30                 # pad-logit bias so padded classes vanish from softmax
_VMEM_LIMIT = 32 * 1024 * 1024   # well inside every generation's physical VMEM


def _round_up(n, m):
    return ((n + m - 1) // m) * m


def _batch_tile(b, tmax):
    """Pick a batch tile (multiple of 8) giving >=2 grid steps when possible."""
    bp = _round_up(max(b, 1), 8)
    tile = min(tmax, bp)
    if bp >= 16 and tile > bp // 2:          # guarantee >=2 steps for v7x megacore
        tile = max(8, (bp // 2) // 8 * 8)
    bp = _round_up(bp, tile)
    return bp, tile


# ----------------------------- Pallas kernels ------------------------------ #

def _conv_pool_relu_kernel(xe_ref, xo_ref, wt_ref, b_ref, o_ref, r0_ref, r1_ref, *, hp):
    """relu(max_pool2x2(conv5x5(x)) + bias) for one batch tile.

    xe_ref/xo_ref: (TB, HH, 128) bf16 even/odd input rows, lanes = w*cin_stride + c
    wt_ref:        (128, 10*128) bf16 width-expanded conv weights; lane block
                   (kh, dw) holds the row-convolution of kernel row kh evaluated
                   at output column 2*wp + dw, laid out as wp*cout_stride + co.
    b_ref:         (1, 1, 128)  f32 bias broadcast over the (wp, co) lane layout
    o_ref:         (TB, HP, 128) bf16 pooled/ReLU output, lanes = wp*cout_stride + co
    r0/r1:         (TB, HH, 10*128) f32 scratch holding per-input-row row-convs
    """
    tb, hh, _ = xe_ref.shape
    wt = wt_ref[...]
    nw = wt.shape[-1]

    # Step 1: one streaming MXU matmul per row-parity (K padded to 128 lanes).
    r0_ref[...] = jnp.dot(xe_ref[...].reshape(tb * hh, _LANE), wt,
                          preferred_element_type=jnp.float32).reshape(tb, hh, nw)
    r1_ref[...] = jnp.dot(xo_ref[...].reshape(tb * hh, _LANE), wt,
                          preferred_element_type=jnp.float32).reshape(tb, hh, nw)

    # Step 2: assemble the 4 pool-position conv maps from static slices of the
    # row-conv scratch (input row 2*hp + dh + kh lives at sublane hp + e//2 of
    # parity e%2, with e = dh + kh), then 2x2-pool via elementwise max.
    rows = (r0_ref, r1_ref)
    pooled = None
    for dh in (0, 1):
        for dw in (0, 1):
            acc = None
            for kh in range(5):
                e = dh + kh
                cs = (kh * 2 + dw) * _LANE
                term = rows[e % 2][:, e // 2:e // 2 + hp, cs:cs + _LANE]
                acc = term if acc is None else acc + term
            pooled = acc if pooled is None else jnp.maximum(pooled, acc)

    # Bias hoisted out of the max (exact), ReLU, bf16 store (lane-dense 128).
    o_ref[...] = jnp.maximum(pooled + b_ref[...], 0.0).astype(o_ref.dtype)


def _fc_head_kernel(x_ref, w1_ref, b1_ref, w2_ref, b2_ref, w3_ref, b3_ref, o_ref):
    """fc1+relu -> fc2+relu -> fc3 -> log_softmax for one batch tile (bf16 MXU)."""
    h = jnp.dot(x_ref[...], w1_ref[...], preferred_element_type=jnp.float32) + b1_ref[...]
    h = jnp.maximum(h, 0.0).astype(jnp.bfloat16)
    h = jnp.dot(h, w2_ref[...], preferred_element_type=jnp.float32) + b2_ref[...]
    h = jnp.maximum(h, 0.0).astype(jnp.bfloat16)
    y = jnp.dot(h, w3_ref[...], preferred_element_type=jnp.float32) + b3_ref[...]
    m = jnp.max(y, axis=-1, keepdims=True)
    z = y - m
    lse = jnp.log(jnp.sum(jnp.exp(z), axis=-1, keepdims=True))
    o_ref[...] = z - lse


# ------------------------------ layer wrappers ----------------------------- #

def conv_pool_relu(x_even, x_odd, wt, bias_lanes, *, hp, tile):
    """x_even/x_odd: (Bp, HH, 128) bf16 parity slabs.  Returns (Bp, hp, 128) bf16."""
    bp, hh, _ = x_even.shape
    nw = wt.shape[-1]
    return pl.pallas_call(
        functools.partial(_conv_pool_relu_kernel, hp=hp),
        out_shape=jax.ShapeDtypeStruct((bp, hp, _LANE), jnp.bfloat16),
        grid=(bp // tile,),
        in_specs=[
            pl.BlockSpec((tile, hh, _LANE), lambda i: (i, 0, 0)),
            pl.BlockSpec((tile, hh, _LANE), lambda i: (i, 0, 0)),
            pl.BlockSpec((_LANE, nw), lambda i: (0, 0)),
            pl.BlockSpec((1, 1, _LANE), lambda i: (0, 0, 0)),
        ],
        out_specs=pl.BlockSpec((tile, hp, _LANE), lambda i: (i, 0, 0)),
        scratch_shapes=[
            pltpu.VMEM((tile, hh, nw), jnp.float32),
            pltpu.VMEM((tile, hh, nw), jnp.float32),
        ],
        compiler_params=pltpu.CompilerParams(
            dimension_semantics=("parallel",),
            vmem_limit_bytes=_VMEM_LIMIT,
        ),
    )(x_even, x_odd, wt, bias_lanes)


def fc_head(x2, packed, batch):
    """x2: (Bp0, 640) bf16 flattened conv2 features.  Returns (batch, 10) f32."""
    bp0, k_in = x2.shape
    bp, tile = _batch_tile(bp0, 512)
    if bp != bp0:
        x2 = jnp.pad(x2, ((0, bp - bp0), (0, 0)))

    args = (x2, packed["fc1_w"], packed["fc1_b"], packed["fc2_w"], packed["fc2_b"],
            packed["fc3_w"], packed["fc3_b"])

    def pinned(shape):
        nd = len(shape)
        return pl.BlockSpec(shape, lambda i, _nd=nd: (0,) * _nd)

    out = pl.pallas_call(
        _fc_head_kernel,
        out_shape=jax.ShapeDtypeStruct((bp, _LANE), jnp.float32),
        grid=(bp // tile,),
        in_specs=[pl.BlockSpec((tile, k_in), lambda i: (i, 0))]
                 + [pinned(a.shape) for a in args[1:]],
        out_specs=pl.BlockSpec((tile, _LANE), lambda i: (i, 0)),
        compiler_params=pltpu.CompilerParams(
            dimension_semantics=("parallel",),
            vmem_limit_bytes=_VMEM_LIMIT,
        ),
    )(*args)
    return out[:batch, :10]


# ------------------------ parameter prep (outside jit) ---------------------- #

def _expanded_conv_weight(w_hwio, cin_stride, cout_stride, wp_count):
    """Width-direction Toeplitz expansion of a 5x5 conv weight.

    out[(2*wp + dw + kw)*cin_stride + c, (kh*2 + dw)*128 + wp*cout_stride + co]
        = w_hwio[kh, kw, c, co]
    """
    kh_n, kw_n, cin, cout = w_hwio.shape
    w = np.asarray(w_hwio, np.float32)
    out = np.zeros((_LANE, kh_n * 2 * _LANE), np.float32)
    for kh in range(kh_n):
        for dw in range(2):
            base = (kh * 2 + dw) * _LANE
            for wp in range(wp_count):
                col = base + wp * cout_stride
                for kw in range(kw_n):
                    j0 = (2 * wp + dw + kw) * cin_stride
                    out[j0:j0 + cin, col:col + cout] += w[kh, kw, :, :]
    return out


def _bias_lanes(b, cout_stride, wp_count):
    out = np.zeros((1, 1, _LANE), np.float32)
    bb = np.asarray(b, np.float32)
    for wp in range(wp_count):
        out[0, 0, wp * cout_stride: wp * cout_stride + bb.shape[0]] = bb
    return out


def pack_params(params):
    """Repack parameters into TPU-friendly constants (runs once, outside jit)."""
    p = {}
    # conv1: input lanes j = w*3 + c (w<32), output lanes wp*8 + co (wp<14, co<6)
    p["conv1_wt"] = jnp.asarray(_expanded_conv_weight(params["conv1_w"], 3, 8, 14), jnp.bfloat16)
    p["conv1_b"] = jnp.asarray(_bias_lanes(params["conv1_b"], 8, 14))
    # conv2: input lanes j = w*8 + c (w<14, c<6), output lanes wp*16 + co (wp<5, co<16)
    p["conv2_wt"] = jnp.asarray(_expanded_conv_weight(params["conv2_w"], 8, 16, 5), jnp.bfloat16)
    p["conv2_b"] = jnp.asarray(_bias_lanes(params["conv2_b"], 16, 5))

    # fc1: permute rows once so the conv2 output's natural flatten order
    # (hp*128 + wp*16 + co) matches PyTorch's NCHW view order (co*25 + hp*5 + wp).
    w1 = np.zeros((5 * _LANE, _LANE), np.float32)
    src = np.asarray(params["fc1_w"], np.float32)            # (400, 120)
    for hp in range(5):
        for wp in range(5):
            for co in range(16):
                w1[hp * _LANE + wp * 16 + co, :120] = src[co * 25 + hp * 5 + wp, :]
    p["fc1_w"] = jnp.asarray(w1, jnp.bfloat16)
    p["fc1_b"] = jnp.asarray(np.pad(np.asarray(params["fc1_b"], np.float32), (0, 8)).reshape(1, _LANE))

    w2 = np.zeros((_LANE, _LANE), np.float32)
    w2[:120, :84] = np.asarray(params["fc2_w"], np.float32)
    p["fc2_w"] = jnp.asarray(w2, jnp.bfloat16)
    p["fc2_b"] = jnp.asarray(np.pad(np.asarray(params["fc2_b"], np.float32), (0, _LANE - 84)).reshape(1, _LANE))

    w3 = np.zeros((_LANE, _LANE), np.float32)
    w3[:84, :10] = np.asarray(params["fc3_w"], np.float32)
    p["fc3_w"] = jnp.asarray(w3, jnp.bfloat16)
    b3 = np.full((_LANE,), _NEG_INF, np.float32)
    b3[:10] = np.asarray(params["fc3_b"], np.float32)
    p["fc3_b"] = jnp.asarray(b3.reshape(1, _LANE))
    return p


# ------------------------------ params / forward --------------------------- #

def init_params(key):
    ks = jax.random.split(key, 10)

    def t(k, shape, scale):
        return jax.random.normal(k, shape, jnp.float32) * scale

    return {
        # PyTorch conv weight layout is [Cout, Cin, kh, kw]; stored [kh, kw, Cin, Cout]
        "conv1_w": jnp.transpose(t(ks[0], (6, 3, 5, 5), 0.1), (2, 3, 1, 0)),
        "conv1_b": t(ks[1], (6,), 0.1),
        "conv2_w": jnp.transpose(t(ks[2], (16, 6, 5, 5), 0.1), (2, 3, 1, 0)),
        "conv2_b": t(ks[3], (16,), 0.1),
        # PyTorch Linear weight layout is [out, in]; stored transposed [in, out]
        "fc1_w": t(ks[4], (120, 16 * 5 * 5), 0.05).T,
        "fc1_b": t(ks[5], (120,), 0.05),
        "fc2_w": t(ks[6], (84, 120), 0.05).T,
        "fc2_b": t(ks[7], (84,), 0.05),
        "fc3_w": t(ks[8], (10, 84), 0.05).T,
        "fc3_b": t(ks[9], (10,), 0.05),
    }


def net_forward(packed, x_nchw):
    B = x_nchw.shape[0]
    bp, tile = _batch_tile(B, 32)

    # conv1 input prep (cheap XLA passes over the raw ~12 KB/image input):
    # NCHW -> NHWC -> (B, 32, w*3+c) -> pad lanes to 128 -> bf16 -> row-parity split.
    x = jnp.transpose(x_nchw.astype(jnp.float32), (0, 2, 3, 1)).reshape(B, 32, 96)
    x = jnp.pad(x, ((0, bp - B), (0, 0), (0, _LANE - 96))).astype(jnp.bfloat16)
    x_e, x_o = x[:, 0::2, :], x[:, 1::2, :]                            # (bp, 16, 128)

    y1 = conv_pool_relu(x_e, x_o, packed["conv1_wt"], packed["conv1_b"],
                        hp=14, tile=tile)                              # (bp, 14, 128) bf16

    # conv2 input prep: parity-split conv1's output rows, pad 7 -> 8 rows.
    y1e = jnp.pad(y1[:, 0::2, :], ((0, 0), (0, 1), (0, 0)))            # (bp, 8, 128)
    y1o = jnp.pad(y1[:, 1::2, :], ((0, 0), (0, 1), (0, 0)))

    y2 = conv_pool_relu(y1e, y1o, packed["conv2_wt"], packed["conv2_b"],
                        hp=5, tile=tile)                               # (bp, 5, 128) bf16

    # Natural flatten (hp, wp*16+co); fc1 weight rows were pre-permuted to match.
    x2 = y2.reshape(bp, 5 * _LANE)
    return fc_head(x2, packed, B)


def reference_forward(params, x_nchw):
    """Pure-JAX f32 reference matching the PyTorch module."""
    x = jnp.transpose(x_nchw, (0, 2, 3, 1)).astype(jnp.float32)

    def conv_block(x, w, b):
        y = jax.lax.conv_general_dilated(
            x, w, (1, 1), "VALID", dimension_numbers=("NHWC", "HWIO", "NHWC")) + b
        y = jax.lax.reduce_window(y, -jnp.inf, jax.lax.max,
                                  (1, 2, 2, 1), (1, 2, 2, 1), "VALID")
        return jnp.maximum(y, 0.0)

    x = conv_block(x, params["conv1_w"], params["conv1_b"])
    x = conv_block(x, params["conv2_w"], params["conv2_b"])
    B = x.shape[0]
    x = jnp.transpose(x, (0, 3, 1, 2)).reshape(B, 400)                  # NCHW flatten
    x = jnp.maximum(x @ params["fc1_w"] + params["fc1_b"], 0.0)
    x = jnp.maximum(x @ params["fc2_w"] + params["fc2_b"], 0.0)
    x = x @ params["fc3_w"] + params["fc3_b"]
    return jax.nn.log_softmax(x, axis=-1)


if __name__ == "__main__":
    key = jax.random.PRNGKey(0)
    pkey, xkey = jax.random.split(key)
    params = init_params(pkey)
    packed = pack_params(params)

    # The 16*5*5 flatten implies 32x32 spatial input (LeNet on CIFAR-size images).
    x = jax.random.normal(xkey, (2, 3, 32, 32), jnp.float32)

    out = jax.jit(net_forward)(packed, x)
    out = jax.block_until_ready(out)

    assert out.shape == (2, 10), out.shape
    assert bool(jnp.all(jnp.isfinite(out)))
    # rows of log_softmax must exp-sum to 1
    assert bool(jnp.allclose(jnp.sum(jnp.exp(out), axis=1), 1.0, atol=1e-4))
    # matches the f32 reference up to bf16 matmul precision
    ref = reference_forward(params, x)
    assert bool(jnp.allclose(out, ref, atol=0.15, rtol=0.1)), "mismatch vs reference"
    print("KERNEL_OK")
</pallas_src>

<mosaic_0001>
module attributes {stable_mosaic.version = 11 : i64} {
  func.func @_conv_pool_relu_kernel(%arg0: i32, %arg1: memref<8x16x128xbf16, #tpu.memory_space<vmem>>, %arg2: memref<8x16x128xbf16, #tpu.memory_space<vmem>>, %arg3: memref<128x1280xbf16, #tpu.memory_space<vmem>>, %arg4: memref<1x1x128xf32, #tpu.memory_space<vmem>>, %arg5: memref<8x14x128xbf16, #tpu.memory_space<vmem>>, %arg6: memref<8x16x1280xf32, #tpu.memory_space<vmem>>, %arg7: memref<8x16x1280xf32, #tpu.memory_space<vmem>>) attributes {dimension_semantics = [#tpu.dimension_semantics<parallel>], iteration_bounds = array<i64: 1>, scalar_prefetch = 0 : i64, scratch_operands = 2 : i64, tpu.core_type = #tpu.core_type<tc>, window_params = [{transform_indices = @transform_0, window_bounds = array<i64: 8, 16, 128>}, {transform_indices = @transform_1, window_bounds = array<i64: 8, 16, 128>}, {pipeline_mode = #tpu.pipeline_mode<synchronous>, transform_indices = @transform_2, window_bounds = array<i64: 128, 1280>}, {pipeline_mode = #tpu.pipeline_mode<synchronous>, transform_indices = @transform_3, window_bounds = array<i64: 1, 1, 128>}, {transform_indices = @transform_4, window_bounds = array<i64: 8, 14, 128>}]} {
    %c0 = arith.constant 0 : index
    %c0_0 = arith.constant 0 : index
    %0 = vector.load %arg3[%c0, %c0_0] : memref<128x1280xbf16, #tpu.memory_space<vmem>>, vector<128x1280xbf16>
    %c0_1 = arith.constant 0 : index
    %c0_2 = arith.constant 0 : index
    %c0_3 = arith.constant 0 : index
    %1 = vector.load %arg1[%c0_1, %c0_2, %c0_3] : memref<8x16x128xbf16, #tpu.memory_space<vmem>>, vector<8x16x128xbf16>
    %2 = vector.shape_cast %1 : vector<8x16x128xbf16> to vector<128x128xbf16>
    %cst = arith.constant dense<0.000000e+00> : vector<128x1280xf32>
    %3 = tpu.matmul %2, %0, %cst {dimension_numbers = #tpu.dot_dimension_numbers<[1], [0], [0], [1], [0, 0, 1, 1], [], []>} : vector<128x128xbf16>, vector<128x1280xbf16>, vector<128x1280xf32> -> vector<128x1280xf32>
    %4 = vector.shape_cast %3 : vector<128x1280xf32> to vector<8x16x1280xf32>
    %c0_4 = arith.constant 0 : index
    %c0_5 = arith.constant 0 : index
    %c0_6 = arith.constant 0 : index
    %5 = vector.load %arg6[%c0_4, %c0_5, %c0_6] : memref<8x16x1280xf32, #tpu.memory_space<vmem>>, vector<8x16x1280xf32>
    tpu.vector_store %arg6[%c0_4, %c0_5, %c0_6], %4 {strides = array<i32>} : memref<8x16x1280xf32, #tpu.memory_space<vmem>>, vector<8x16x1280xf32>,
    %c0_7 = arith.constant 0 : index
    %c0_8 = arith.constant 0 : index
    %c0_9 = arith.constant 0 : index
    %6 = vector.load %arg2[%c0_7, %c0_8, %c0_9] : memref<8x16x128xbf16, #tpu.memory_space<vmem>>, vector<8x16x128xbf16>
    %7 = vector.shape_cast %6 : vector<8x16x128xbf16> to vector<128x128xbf16>
    %cst_10 = arith.constant dense<0.000000e+00> : vector<128x1280xf32>
    %8 = tpu.matmul %7, %0, %cst_10 {dimension_numbers = #tpu.dot_dimension_numbers<[1], [0], [0], [1], [0, 0, 1, 1], [], []>} : vector<128x128xbf16>, vector<128x1280xbf16>, vector<128x1280xf32> -> vector<128x1280xf32>
    %9 = vector.shape_cast %8 : vector<128x1280xf32> to vector<8x16x1280xf32>
    %c0_11 = arith.constant 0 : index
    %c0_12 = arith.constant 0 : index
    %c0_13 = arith.constant 0 : index
    %10 = vector.load %arg7[%c0_11, %c0_12, %c0_13] : memref<8x16x1280xf32, #tpu.memory_space<vmem>>, vector<8x16x1280xf32>
    tpu.vector_store %arg7[%c0_11, %c0_12, %c0_13], %9 {strides = array<i32>} : memref<8x16x1280xf32, #tpu.memory_space<vmem>>, vector<8x16x1280xf32>,
    %c0_14 = arith.constant 0 : index
    %c0_15 = arith.constant 0 : index
    %c0_16 = arith.constant 0 : index
    %11 = vector.load %arg6[%c0_14, %c0_15, %c0_16] : memref<8x16x1280xf32, #tpu.memory_space<vmem>>, vector<8x14x128xf32>
    %c0_17 = arith.constant 0 : index
    %c0_18 = arith.constant 0 : index
    %c256 = arith.constant 256 : index
    %12 = vector.load %arg7[%c0_17, %c0_18, %c256] : memref<8x16x1280xf32, #tpu.memory_space<vmem>>, vector<8x14x128xf32>
    %13 = arith.addf %11, %12 : vector<8x14x128xf32>
    %c0_19 = arith.constant 0 : index
    %c1 = arith.constant 1 : index
    %c512 = arith.constant 512 : index
    %14 = vector.load %arg6[%c0_19, %c1, %c512] : memref<8x16x1280xf32, #tpu.memory_space<vmem>>, vector<8x14x128xf32>
    %15 = arith.addf %13, %14 : vector<8x14x128xf32>
    %c0_20 = arith.constant 0 : index
    %c1_21 = arith.constant 1 : index
    %c768 = arith.constant 768 : index
    %16 = vector.load %arg7[%c0_20, %c1_21, %c768] : memref<8x16x1280xf32, #tpu.memory_space<vmem>>, vector<8x14x128xf32>
    %17 = arith.addf %15, %16 : vector<8x14x128xf32>
    %c0_22 = arith.constant 0 : index
    %c2 = arith.constant 2 : index
    %c1024 = arith.constant 1024 : index
    %18 = vector.load %arg6[%c0_22, %c2, %c1024] : memref<8x16x1280xf32, #tpu.memory_space<vmem>>, vector<8x14x128xf32>
    %19 = arith.addf %17, %18 : vector<8x14x128xf32>
    %c0_23 = arith.constant 0 : index
    %c0_24 = arith.constant 0 : index
    %c128 = arith.constant 128 : index
    %20 = vector.load %arg6[%c0_23, %c0_24, %c128] : memref<8x16x1280xf32, #tpu.memory_space<vmem>>, vector<8x14x128xf32>
    %c0_25 = arith.constant 0 : index
    %c0_26 = arith.constant 0 : index
    %c384 = arith.constant 384 : index
    %21 = vector.load %arg7[%c0_25, %c0_26, %c384] : memref<8x16x1280xf32, #tpu.memory_space<vmem>>, vector<8x14x128xf32>
    %22 = arith.addf %20, %21 : vector<8x14x128xf32>
    %c0_27 = arith.constant 0 : index
    %c1_28 = arith.constant 1 : index
    %c640 = arith.constant 640 : index
    %23 = vector.load %arg6[%c0_27, %c1_28, %c640] : memref<8x16x1280xf32, #tpu.memory_space<vmem>>, vector<8x14x128xf32>
    %24 = arith.addf %22, %23 : vector<8x14x128xf32>
    %c0_29 = arith.constant 0 : index
    %c1_30 = arith.constant 1 : index
    %c896 = arith.constant 896 : index
    %25 = vector.load %arg7[%c0_29, %c1_30, %c896] : memref<8x16x1280xf32, #tpu.memory_space<vmem>>, vector<8x14x128xf32>
    %26 = arith.addf %24, %25 : vector<8x14x128xf32>
    %c0_31 = arith.constant 0 : index
    %c2_32 = arith.constant 2 : index
    %c1152 = arith.constant 1152 : index
    %27 = vector.load %arg6[%c0_31, %c2_32, %c1152] : memref<8x16x1280xf32, #tpu.memory_space<vmem>>, vector<8x14x128xf32>
    %28 = arith.addf %26, %27 : vector<8x14x128xf32>
    %29 = arith.maximumf %19, %28 : vector<8x14x128xf32>
    %c0_33 = arith.constant 0 : index
    %c0_34 = arith.constant 0 : index
    %c0_35 = arith.constant 0 : index
    %30 = vector.load %arg7[%c0_33, %c0_34, %c0_35] : memref<8x16x1280xf32, #tpu.memory_space<vmem>>, vector<8x14x128xf32>
    %c0_36 = arith.constant 0 : index
    %c1_37 = arith.constant 1 : index
    %c256_38 = arith.constant 256 : index
    %31 = vector.load %arg6[%c0_36, %c1_37, %c256_38] : memref<8x16x1280xf32, #tpu.memory_space<vmem>>, vector<8x14x128xf32>
    %32 = arith.addf %30, %31 : vector<8x14x128xf32>
    %c0_39 = arith.constant 0 : index
    %c1_40 = arith.constant 1 : index
    %c512_41 = arith.constant 512 : index
    %33 = vector.load %arg7[%c0_39, %c1_40, %c512_41] : memref<8x16x1280xf32, #tpu.memory_space<vmem>>, vector<8x14x128xf32>
    %34 = arith.addf %32, %33 : vector<8x14x128xf32>
    %c0_42 = arith.constant 0 : index
    %c2_43 = arith.constant 2 : index
    %c768_44 = arith.constant 768 : index
    %35 = vector.load %arg6[%c0_42, %c2_43, %c768_44] : memref<8x16x1280xf32, #tpu.memory_space<vmem>>, vector<8x14x128xf32>
    %36 = arith.addf %34, %35 : vector<8x14x128xf32>
    %c0_45 = arith.constant 0 : index
    %c2_46 = arith.constant 2 : index
    %c1024_47 = arith.constant 1024 : index
    %37 = vector.load %arg7[%c0_45, %c2_46, %c1024_47] : memref<8x16x1280xf32, #tpu.memory_space<vmem>>, vector<8x14x128xf32>
    %38 = arith.addf %36, %37 : vector<8x14x128xf32>
    %39 = arith.maximumf %29, %38 : vector<8x14x128xf32>
    %c0_48 = arith.constant 0 : index
    %c0_49 = arith.constant 0 : index
    %c128_50 = arith.constant 128 : index
    %40 = vector.load %arg7[%c0_48, %c0_49, %c128_50] : memref<8x16x1280xf32, #tpu.memory_space<vmem>>, vector<8x14x128xf32>
    %c0_51 = arith.constant 0 : index
    %c1_52 = arith.constant 1 : index
    %c384_53 = arith.constant 384 : index
    %41 = vector.load %arg6[%c0_51, %c1_52, %c384_53] : memref<8x16x1280xf32, #tpu.memory_space<vmem>>, vector<8x14x128xf32>
    %42 = arith.addf %40, %41 : vector<8x14x128xf32>
    %c0_54 = arith.constant 0 : index
    %c1_55 = arith.constant 1 : index
    %c640_56 = arith.constant 640 : index
    %43 = vector.load %arg7[%c0_54, %c1_55, %c640_56] : memref<8x16x1280xf32, #tpu.memory_space<vmem>>, vector<8x14x128xf32>
    %44 = arith.addf %42, %43 : vector<8x14x128xf32>
    %c0_57 = arith.constant 0 : index
    %c2_58 = arith.constant 2 : index
    %c896_59 = arith.constant 896 : index
    %45 = vector.load %arg6[%c0_57, %c2_58, %c896_59] : memref<8x16x1280xf32, #tpu.memory_space<vmem>>, vector<8x14x128xf32>
    %46 = arith.addf %44, %45 : vector<8x14x128xf32>
    %c0_60 = arith.constant 0 : index
    %c2_61 = arith.constant 2 : index
    %c1152_62 = arith.constant 1152 : index
    %47 = vector.load %arg7[%c0_60, %c2_61, %c1152_62] : memref<8x16x1280xf32, #tpu.memory_space<vmem>>, vector<8x14x128xf32>
    %48 = arith.addf %46, %47 : vector<8x14x128xf32>
    %49 = arith.maximumf %39, %48 : vector<8x14x128xf32>
    %c0_63 = arith.constant 0 : index
    %c0_64 = arith.constant 0 : index
    %c0_65 = arith.constant 0 : index
    %50 = vector.load %arg4[%c0_63, %c0_64, %c0_65] : memref<1x1x128xf32, #tpu.memory_space<vmem>>, vector<1x1x128xf32>
    %51 = vector.broadcast %50 : vector<1x1x128xf32> to vector<8x14x128xf32>
    %52 = arith.addf %49, %51 : vector<8x14x128xf32>
    %cst_66 = arith.constant 0.000000e+00 : f32
    %53 = vector.broadcast %cst_66 : f32 to vector<8x14x128xf32>
    %54 = arith.maximumf %52, %53 : vector<8x14x128xf32>
    %55 = arith.truncf %54 : vector<8x14x128xf32> to vector<8x14x128xbf16>
    %c0_67 = arith.constant 0 : index
    %c0_68 = arith.constant 0 : index
    %c0_69 = arith.constant 0 : index
    %56 = vector.load %arg5[%c0_67, %c0_68, %c0_69] : memref<8x14x128xbf16, #tpu.memory_space<vmem>>, vector<8x14x128xbf16>
    tpu.vector_store %arg5[%c0_67, %c0_68, %c0_69], %55 {strides = array<i32>} : memref<8x14x128xbf16, #tpu.memory_space<vmem>>, vector<8x14x128xbf16>,
    return
  }
  func.func @transform_0(%arg0: i32) -> (i32, i32, i32) {
    %c0_i32 = arith.constant 0 : i32
    %c0_i32_0 = arith.constant 0 : i32
    %c0_i32_1 = arith.constant 0 : i32
    return %arg0, %c0_i32, %c0_i32_0 : i32, i32, i32
  }
  func.func @transform_1(%arg0: i32) -> (i32, i32, i32) {
    %c0_i32 = arith.constant 0 : i32
    %c0_i32_0 = arith.constant 0 : i32
    %c0_i32_1 = arith.constant 0 : i32
    return %arg0, %c0_i32, %c0_i32_0 : i32, i32, i32
  }
  func.func @transform_2(%arg0: i32) -> (i32, i32) {
    %c0_i32 = arith.constant 0 : i32
    %c0_i32_0 = arith.constant 0 : i32
    %c0_i32_1 = arith.constant 0 : i32
    return %c0_i32, %c0_i32_0 : i32, i32
  }
  func.func @transform_3(%arg0: i32) -> (i32, i32, i32) {
    %c0_i32 = arith.constant 0 : i32
    %c0_i32_0 = arith.constant 0 : i32
    %c0_i32_1 = arith.constant 0 : i32
    %c0_i32_2 = arith.constant 0 : i32
    return %c0_i32, %c0_i32_0, %c0_i32_1 : i32, i32, i32
  }
  func.func @transform_4(%arg0: i32) -> (i32, i32, i32) {
    %c0_i32 = arith.constant 0 : i32
    %c0_i32_0 = arith.constant 0 : i32
    %c0_i32_1 = arith.constant 0 : i32
    return %arg0, %c0_i32, %c0_i32_0 : i32, i32, i32
  }
}

module attributes {stable_mosaic.version = 11 : i64} {
  func.func @_conv_pool_relu_kernel(%arg0: i32, %arg1: memref<8x8x128xbf16, #tpu.memory_space<vmem>>, %arg2: memref<8x8x128xbf16, #tpu.memory_space<vmem>>, %arg3: memref<128x1280xbf16, #tpu.memory_space<vmem>>, %arg4: memref<1x1x128xf32, #tpu.memory_space<vmem>>, %arg5: memref<8x5x128xbf16, #tpu.memory_space<vmem>>, %arg6: memref<8x8x1280xf32, #tpu.memory_space<vmem>>, %arg7: memref<8x8x1280xf32, #tpu.memory_space<vmem>>) attributes {dimension_semantics = [#tpu.dimension_semantics<parallel>], iteration_bounds = array<i64: 1>, scalar_prefetch = 0 : i64, scratch_operands = 2 : i64, tpu.core_type = #tpu.core_type<tc>, window_params = [{transform_indices = @transform_0, window_bounds = array<i64: 8, 8, 128>}, {transform_indices = @transform_1, window_bounds = array<i64: 8, 8, 128>}, {pipeline_mode = #tpu.pipeline_mode<synchronous>, transform_indices = @transform_2, window_bounds = array<i64: 128, 1280>}, {pipeline_mode = #tpu.pipeline_mode<synchronous>, transform_indices = @transform_3, window_bounds = array<i64: 1, 1, 128>}, {transform_indices = @transform_4, window_bounds = array<i64: 8, 5, 128>}]} {
    %c0 = arith.constant 0 : index
    %c0_0 = arith.constant 0 : index
    %0 = vector.load %arg3[%c0, %c0_0] : memref<128x1280xbf16, #tpu.memory_space<vmem>>, vector<128x1280xbf16>
    %c0_1 = arith.constant 0 : index
    %c0_2 = arith.constant 0 : index
    %c0_3 = arith.constant 0 : index
    %1 = vector.load %arg1[%c0_1, %c0_2, %c0_3] : memref<8x8x128xbf16, #tpu.memory_space<vmem>>, vector<8x8x128xbf16>
    %2 = vector.shape_cast %1 : vector<8x8x128xbf16> to vector<64x128xbf16>
    %cst = arith.constant dense<0.000000e+00> : vector<64x1280xf32>
    %3 = tpu.matmul %2, %0, %cst {dimension_numbers = #tpu.dot_dimension_numbers<[1], [0], [0], [1], [0, 0, 1, 1], [], []>} : vector<64x128xbf16>, vector<128x1280xbf16>, vector<64x1280xf32> -> vector<64x1280xf32>
    %4 = vector.shape_cast %3 : vector<64x1280xf32> to vector<8x8x1280xf32>
    %c0_4 = arith.constant 0 : index
    %c0_5 = arith.constant 0 : index
    %c0_6 = arith.constant 0 : index
    %5 = vector.load %arg6[%c0_4, %c0_5, %c0_6] : memref<8x8x1280xf32, #tpu.memory_space<vmem>>, vector<8x8x1280xf32>
    tpu.vector_store %arg6[%c0_4, %c0_5, %c0_6], %4 {strides = array<i32>} : memref<8x8x1280xf32, #tpu.memory_space<vmem>>, vector<8x8x1280xf32>,
    %c0_7 = arith.constant 0 : index
    %c0_8 = arith.constant 0 : index
    %c0_9 = arith.constant 0 : index
    %6 = vector.load %arg2[%c0_7, %c0_8, %c0_9] : memref<8x8x128xbf16, #tpu.memory_space<vmem>>, vector<8x8x128xbf16>
    %7 = vector.shape_cast %6 : vector<8x8x128xbf16> to vector<64x128xbf16>
    %cst_10 = arith.constant dense<0.000000e+00> : vector<64x1280xf32>
    %8 = tpu.matmul %7, %0, %cst_10 {dimension_numbers = #tpu.dot_dimension_numbers<[1], [0], [0], [1], [0, 0, 1, 1], [], []>} : vector<64x128xbf16>, vector<128x1280xbf16>, vector<64x1280xf32> -> vector<64x1280xf32>
    %9 = vector.shape_cast %8 : vector<64x1280xf32> to vector<8x8x1280xf32>
    %c0_11 = arith.constant 0 : index
    %c0_12 = arith.constant 0 : index
    %c0_13 = arith.constant 0 : index
    %10 = vector.load %arg7[%c0_11, %c0_12, %c0_13] : memref<8x8x1280xf32, #tpu.memory_space<vmem>>, vector<8x8x1280xf32>
    tpu.vector_store %arg7[%c0_11, %c0_12, %c0_13], %9 {strides = array<i32>} : memref<8x8x1280xf32, #tpu.memory_space<vmem>>, vector<8x8x1280xf32>,
    %c0_14 = arith.constant 0 : index
    %c0_15 = arith.constant 0 : index
    %c0_16 = arith.constant 0 : index
    %11 = vector.load %arg6[%c0_14, %c0_15, %c0_16] : memref<8x8x1280xf32, #tpu.memory_space<vmem>>, vector<8x5x128xf32>
    %c0_17 = arith.constant 0 : index
    %c0_18 = arith.constant 0 : index
    %c256 = arith.constant 256 : index
    %12 = vector.load %arg7[%c0_17, %c0_18, %c256] : memref<8x8x1280xf32, #tpu.memory_space<vmem>>, vector<8x5x128xf32>
    %13 = arith.addf %11, %12 : vector<8x5x128xf32>
    %c0_19 = arith.constant 0 : index
    %c1 = arith.constant 1 : index
    %c512 = arith.constant 512 : index
    %14 = vector.load %arg6[%c0_19, %c1, %c512] : memref<8x8x1280xf32, #tpu.memory_space<vmem>>, vector<8x5x128xf32>
    %15 = arith.addf %13, %14 : vector<8x5x128xf32>
    %c0_20 = arith.constant 0 : index
    %c1_21 = arith.constant 1 : index
    %c768 = arith.constant 768 : index
    %16 = vector.load %arg7[%c0_20, %c1_21, %c768] : memref<8x8x1280xf32, #tpu.memory_space<vmem>>, vector<8x5x128xf32>
    %17 = arith.addf %15, %16 : vector<8x5x128xf32>
    %c0_22 = arith.constant 0 : index
    %c2 = arith.constant 2 : index
    %c1024 = arith.constant 1024 : index
    %18 = vector.load %arg6[%c0_22, %c2, %c1024] : memref<8x8x1280xf32, #tpu.memory_space<vmem>>, vector<8x5x128xf32>
    %19 = arith.addf %17, %18 : vector<8x5x128xf32>
    %c0_23 = arith.constant 0 : index
    %c0_24 = arith.constant 0 : index
    %c128 = arith.constant 128 : index
    %20 = vector.load %arg6[%c0_23, %c0_24, %c128] : memref<8x8x1280xf32, #tpu.memory_space<vmem>>, vector<8x5x128xf32>
    %c0_25 = arith.constant 0 : index
    %c0_26 = arith.constant 0 : index
    %c384 = arith.constant 384 : index
    %21 = vector.load %arg7[%c0_25, %c0_26, %c384] : memref<8x8x1280xf32, #tpu.memory_space<vmem>>, vector<8x5x128xf32>
    %22 = arith.addf %20, %21 : vector<8x5x128xf32>
    %c0_27 = arith.constant 0 : index
    %c1_28 = arith.constant 1 : index
    %c640 = arith.constant 640 : index
    %23 = vector.load %arg6[%c0_27, %c1_28, %c640] : memref<8x8x1280xf32, #tpu.memory_space<vmem>>, vector<8x5x128xf32>
    %24 = arith.addf %22, %23 : vector<8x5x128xf32>
    %c0_29 = arith.constant 0 : index
    %c1_30 = arith.constant 1 : index
    %c896 = arith.constant 896 : index
    %25 = vector.load %arg7[%c0_29, %c1_30, %c896] : memref<8x8x1280xf32, #tpu.memory_space<vmem>>, vector<8x5x128xf32>
    %26 = arith.addf %24, %25 : vector<8x5x128xf32>
    %c0_31 = arith.constant 0 : index
    %c2_32 = arith.constant 2 : index
    %c1152 = arith.constant 1152 : index
    %27 = vector.load %arg6[%c0_31, %c2_32, %c1152] : memref<8x8x1280xf32, #tpu.memory_space<vmem>>, vector<8x5x128xf32>
    %28 = arith.addf %26, %27 : vector<8x5x128xf32>
    %29 = arith.maximumf %19, %28 : vector<8x5x128xf32>
    %c0_33 = arith.constant 0 : index
    %c0_34 = arith.constant 0 : index
    %c0_35 = arith.constant 0 : index
    %30 = vector.load %arg7[%c0_33, %c0_34, %c0_35] : memref<8x8x1280xf32, #tpu.memory_space<vmem>>, vector<8x5x128xf32>
    %c0_36 = arith.constant 0 : index
    %c1_37 = arith.constant 1 : index
    %c256_38 = arith.constant 256 : index
    %31 = vector.load %arg6[%c0_36, %c1_37, %c256_38] : memref<8x8x1280xf32, #tpu.memory_space<vmem>>, vector<8x5x128xf32>
    %32 = arith.addf %30, %31 : vector<8x5x128xf32>
    %c0_39 = arith.constant 0 : index
    %c1_40 = arith.constant 1 : index
    %c512_41 = arith.constant 512 : index
    %33 = vector.load %arg7[%c0_39, %c1_40, %c512_41] : memref<8x8x1280xf32, #tpu.memory_space<vmem>>, vector<8x5x128xf32>
    %34 = arith.addf %32, %33 : vector<8x5x128xf32>
    %c0_42 = arith.constant 0 : index
    %c2_43 = arith.constant 2 : index
    %c768_44 = arith.constant 768 : index
    %35 = vector.load %arg6[%c0_42, %c2_43, %c768_44] : memref<8x8x1280xf32, #tpu.memory_space<vmem>>, vector<8x5x128xf32>
    %36 = arith.addf %34, %35 : vector<8x5x128xf32>
    %c0_45 = arith.constant 0 : index
    %c2_46 = arith.constant 2 : index
    %c1024_47 = arith.constant 1024 : index
    %37 = vector.load %arg7[%c0_45, %c2_46, %c1024_47] : memref<8x8x1280xf32, #tpu.memory_space<vmem>>, vector<8x5x128xf32>
    %38 = arith.addf %36, %37 : vector<8x5x128xf32>
    %39 = arith.maximumf %29, %38 : vector<8x5x128xf32>
    %c0_48 = arith.constant 0 : index
    %c0_49 = arith.constant 0 : index
    %c128_50 = arith.constant 128 : index
    %40 = vector.load %arg7[%c0_48, %c0_49, %c128_50] : memref<8x8x1280xf32, #tpu.memory_space<vmem>>, vector<8x5x128xf32>
    %c0_51 = arith.constant 0 : index
    %c1_52 = arith.constant 1 : index
    %c384_53 = arith.constant 384 : index
    %41 = vector.load %arg6[%c0_51, %c1_52, %c384_53] : memref<8x8x1280xf32, #tpu.memory_space<vmem>>, vector<8x5x128xf32>
    %42 = arith.addf %40, %41 : vector<8x5x128xf32>
    %c0_54 = arith.constant 0 : index
    %c1_55 = arith.constant 1 : index
    %c640_56 = arith.constant 640 : index
    %43 = vector.load %arg7[%c0_54, %c1_55, %c640_56] : memref<8x8x1280xf32, #tpu.memory_space<vmem>>, vector<8x5x128xf32>
    %44 = arith.addf %42, %43 : vector<8x5x128xf32>
    %c0_57 = arith.constant 0 : index
    %c2_58 = arith.constant 2 : index
    %c896_59 = arith.constant 896 : index
    %45 = vector.load %arg6[%c0_57, %c2_58, %c896_59] : memref<8x8x1280xf32, #tpu.memory_space<vmem>>, vector<8x5x128xf32>
    %46 = arith.addf %44, %45 : vector<8x5x128xf32>
    %c0_60 = arith.constant 0 : index
    %c2_61 = arith.constant 2 : index
    %c1152_62 = arith.constant 1152 : index
    %47 = vector.load %arg7[%c0_60, %c2_61, %c1152_62] : memref<8x8x1280xf32, #tpu.memory_space<vmem>>, vector<8x5x128xf32>
    %48 = arith.addf %46, %47 : vector<8x5x128xf32>
    %49 = arith.maximumf %39, %48 : vector<8x5x128xf32>
    %c0_63 = arith.constant 0 : index
    %c0_64 = arith.constant 0 : index
    %c0_65 = arith.constant 0 : index
    %50 = vector.load %arg4[%c0_63, %c0_64, %c0_65] : memref<1x1x128xf32, #tpu.memory_space<vmem>>, vector<1x1x128xf32>
    %51 = vector.broadcast %50 : vector<1x1x128xf32> to vector<8x5x128xf32>
    %52 = arith.addf %49, %51 : vector<8x5x128xf32>
    %cst_66 = arith.constant 0.000000e+00 : f32
    %53 = vector.broadcast %cst_66 : f32 to vector<8x5x128xf32>
    %54 = arith.maximumf %52, %53 : vector<8x5x128xf32>
    %55 = arith.truncf %54 : vector<8x5x128xf32> to vector<8x5x128xbf16>
    %c0_67 = arith.constant 0 : index
    %c0_68 = arith.constant 0 : index
    %c0_69 = arith.constant 0 : index
    %56 = vector.load %arg5[%c0_67, %c0_68, %c0_69] : memref<8x5x128xbf16, #tpu.memory_space<vmem>>, vector<8x5x128xbf16>
    tpu.vector_store %arg5[%c0_67, %c0_68, %c0_69], %55 {strides = array<i32>} : memref<8x5x128xbf16, #tpu.memory_space<vmem>>, vector<8x5x128xbf16>,
    return
  }
  func.func @transform_0(%arg0: i32) -> (i32, i32, i32) {
    %c0_i32 = arith.constant 0 : i32
    %c0_i32_0 = arith.constant 0 : i32
    %c0_i32_1 = arith.constant 0 : i32
    return %arg0, %c0_i32, %c0_i32_0 : i32, i32, i32
  }
  func.func @transform_1(%arg0: i32) -> (i32, i32, i32) {
    %c0_i32 = arith.constant 0 : i32
    %c0_i32_0 = arith.constant 0 : i32
    %c0_i32_1 = arith.constant 0 : i32
    return %arg0, %c0_i32, %c0_i32_0 : i32, i32, i32
  }
  func.func @transform_2(%arg0: i32) -> (i32, i32) {
    %c0_i32 = arith.constant 0 : i32
    %c0_i32_0 = arith.constant 0 : i32
    %c0_i32_1 = arith.constant 0 : i32
    return %c0_i32, %c0_i32_0 : i32, i32
  }
  func.func @transform_3(%arg0: i32) -> (i32, i32, i32) {
    %c0_i32 = arith.constant 0 : i32
    %c0_i32_0 = arith.constant 0 : i32
    %c0_i32_1 = arith.constant 0 : i32
    %c0_i32_2 = arith.constant 0 : i32
    return %c0_i32, %c0_i32_0, %c0_i32_1 : i32, i32, i32
  }
  func.func @transform_4(%arg0: i32) -> (i32, i32, i32) {
    %c0_i32 = arith.constant 0 : i32
    %c0_i32_0 = arith.constant 0 : i32
    %c0_i32_1 = arith.constant 0 : i32
    return %arg0, %c0_i32, %c0_i32_0 : i32, i32, i32
  }
}

module attributes {stable_mosaic.version = 11 : i64} {
  func.func @_fc_head_kernel(%arg0: i32, %arg1: memref<8x640xbf16, #tpu.memory_space<vmem>>, %arg2: memref<640x128xbf16, #tpu.memory_space<vmem>>, %arg3: memref<1x128xf32, #tpu.memory_space<vmem>>, %arg4: memref<128x128xbf16, #tpu.memory_space<vmem>>, %arg5: memref<1x128xf32, #tpu.memory_space<vmem>>, %arg6: memref<128x128xbf16, #tpu.memory_space<vmem>>, %arg7: memref<1x128xf32, #tpu.memory_space<vmem>>, %arg8: memref<8x128xf32, #tpu.memory_space<vmem>>) attributes {dimension_semantics = [#tpu.dimension_semantics<parallel>], iteration_bounds = array<i64: 1>, scalar_prefetch = 0 : i64, scratch_operands = 0 : i64, tpu.core_type = #tpu.core_type<tc>, window_params = [{transform_indices = @transform_0, window_bounds = array<i64: 8, 640>}, {pipeline_mode = #tpu.pipeline_mode<synchronous>, transform_indices = @transform_1, window_bounds = array<i64: 640, 128>}, {pipeline_mode = #tpu.pipeline_mode<synchronous>, transform_indices = @transform_2, window_bounds = array<i64: 1, 128>}, {pipeline_mode = #tpu.pipeline_mode<synchronous>, transform_indices = @transform_3, window_bounds = array<i64: 128, 128>}, {pipeline_mode = #tpu.pipeline_mode<synchronous>, transform_indices = @transform_4, window_bounds = array<i64: 1, 128>}, {pipeline_mode = #tpu.pipeline_mode<synchronous>, transform_indices = @transform_5, window_bounds = array<i64: 128, 128>}, {pipeline_mode = #tpu.pipeline_mode<synchronous>, transform_indices = @transform_6, window_bounds = array<i64: 1, 128>}, {transform_indices = @transform_7, window_bounds = array<i64: 8, 128>}]} {
    %c0 = arith.constant 0 : index
    %c0_0 = arith.constant 0 : index
    %0 = vector.load %arg1[%c0, %c0_0] : memref<8x640xbf16, #tpu.memory_space<vmem>>, vector<8x640xbf16>
    %c0_1 = arith.constant 0 : index
    %c0_2 = arith.constant 0 : index
    %1 = vector.load %arg2[%c0_1, %c0_2] : memref<640x128xbf16, #tpu.memory_space<vmem>>, vector<640x128xbf16>
    %cst = arith.constant dense<0.000000e+00> : vector<8x128xf32>
    %2 = tpu.matmul %0, %1, %cst {dimension_numbers = #tpu.dot_dimension_numbers<[1], [0], [0], [1], [0, 0, 1, 1], [], []>} : vector<8x640xbf16>, vector<640x128xbf16>, vector<8x128xf32> -> vector<8x128xf32>
    %c0_3 = arith.constant 0 : index
    %c0_4 = arith.constant 0 : index
    %3 = vector.load %arg3[%c0_3, %c0_4] : memref<1x128xf32, #tpu.memory_space<vmem>>, vector<1x128xf32>
    %4 = vector.broadcast %3 : vector<1x128xf32> to vector<8x128xf32>
    %5 = arith.addf %2, %4 : vector<8x128xf32>
    %cst_5 = arith.constant 0.000000e+00 : f32
    %6 = vector.broadcast %cst_5 : f32 to vector<8x128xf32>
    %7 = arith.maximumf %5, %6 : vector<8x128xf32>
    %8 = arith.truncf %7 : vector<8x128xf32> to vector<8x128xbf16>
    %c0_6 = arith.constant 0 : index
    %c0_7 = arith.constant 0 : index
    %9 = vector.load %arg4[%c0_6, %c0_7] : memref<128x128xbf16, #tpu.memory_space<vmem>>, vector<128x128xbf16>
    %cst_8 = arith.constant dense<0.000000e+00> : vector<8x128xf32>
    %10 = tpu.matmul %8, %9, %cst_8 {dimension_numbers = #tpu.dot_dimension_numbers<[1], [0], [0], [1], [0, 0, 1, 1], [], []>} : vector<8x128xbf16>, vector<128x128xbf16>, vector<8x128xf32> -> vector<8x128xf32>
    %c0_9 = arith.constant 0 : index
    %c0_10 = arith.constant 0 : index
    %11 = vector.load %arg5[%c0_9, %c0_10] : memref<1x128xf32, #tpu.memory_space<vmem>>, vector<1x128xf32>
    %12 = vector.broadcast %11 : vector<1x128xf32> to vector<8x128xf32>
    %13 = arith.addf %10, %12 : vector<8x128xf32>
    %cst_11 = arith.constant 0.000000e+00 : f32
    %14 = vector.broadcast %cst_11 : f32 to vector<8x128xf32>
    %15 = arith.maximumf %13, %14 : vector<8x128xf32>
    %16 = arith.truncf %15 : vector<8x128xf32> to vector<8x128xbf16>
    %c0_12 = arith.constant 0 : index
    %c0_13 = arith.constant 0 : index
    %17 = vector.load %arg6[%c0_12, %c0_13] : memref<128x128xbf16, #tpu.memory_space<vmem>>, vector<128x128xbf16>
    %cst_14 = arith.constant dense<0.000000e+00> : vector<8x128xf32>
    %18 = tpu.matmul %16, %17, %cst_14 {dimension_numbers = #tpu.dot_dimension_numbers<[1], [0], [0], [1], [0, 0, 1, 1], [], []>} : vector<8x128xbf16>, vector<128x128xbf16>, vector<8x128xf32> -> vector<8x128xf32>
    %c0_15 = arith.constant 0 : index
    %c0_16 = arith.constant 0 : index
    %19 = vector.load %arg7[%c0_15, %c0_16] : memref<1x128xf32, #tpu.memory_space<vmem>>, vector<1x128xf32>
    %20 = vector.broadcast %19 : vector<1x128xf32> to vector<8x128xf32>
    %21 = arith.addf %18, %20 : vector<8x128xf32>
    %cst_17 = arith.constant dense<0xFF800000> : vector<8xf32>
    %22 = vector.multi_reduction <maximumf>, %21, %cst_17 [1] : vector<8x128xf32> to vector<8xf32>
    %23 = vector.shape_cast %22 : vector<8xf32> to vector<8x1xf32>
    %24 = vector.broadcast %23 : vector<8x1xf32> to vector<8x128xf32>
    %25 = arith.subf %21, %24 : vector<8x128xf32>
    %26 = math.exp %25 : vector<8x128xf32>
    %cst_18 = arith.constant dense<0.000000e+00> : vector<8xf32>
    %27 = vector.multi_reduction <add>, %26, %cst_18 [1] : vector<8x128xf32> to vector<8xf32>
    %28 = vector.shape_cast %27 : vector<8xf32> to vector<8x1xf32>
    %29 = math.log %28 : vector<8x1xf32>
    %30 = vector.broadcast %29 : vector<8x1xf32> to vector<8x128xf32>
    %31 = arith.subf %25, %30 : vector<8x128xf32>
    %c0_19 = arith.constant 0 : index
    %c0_20 = arith.constant 0 : index
    %32 = vector.load %arg8[%c0_19, %c0_20] : memref<8x128xf32, #tpu.memory_space<vmem>>, vector<8x128xf32>
    tpu.vector_store %arg8[%c0_19, %c0_20], %31 {strides = array<i32>} : memref<8x128xf32, #tpu.memory_space<vmem>>, vector<8x128xf32>,
    return
  }
  func.func @transform_0(%arg0: i32) -> (i32, i32) {
    %c0_i32 = arith.constant 0 : i32
    %c0_i32_0 = arith.constant 0 : i32
    return %arg0, %c0_i32 : i32, i32
  }
  func.func @transform_1(%arg0: i32) -> (i32, i32) {
    %c0_i32 = arith.constant 0 : i32
    %c0_i32_0 = arith.constant 0 : i32
    %c0_i32_1 = arith.constant 0 : i32
    return %c0_i32, %c0_i32_0 : i32, i32
  }
  func.func @transform_2(%arg0: i32) -> (i32, i32) {
    %c0_i32 = arith.constant 0 : i32
    %c0_i32_0 = arith.constant 0 : i32
    %c0_i32_1 = arith.constant 0 : i32
    return %c0_i32, %c0_i32_0 : i32, i32
  }
  func.func @transform_3(%arg0: i32) -> (i32, i32) {
    %c0_i32 = arith.constant 0 : i32
    %c0_i32_0 = arith.constant 0 : i32
    %c0_i32_1 = arith.constant 0 : i32
    return %c0_i32, %c0_i32_0 : i32, i32
  }
  func.func @transform_4(%arg0: i32) -> (i32, i32) {
    %c0_i32 = arith.constant 0 : i32
    %c0_i32_0 = arith.constant 0 : i32
    %c0_i32_1 = arith.constant 0 : i32
    return %c0_i32, %c0_i32_0 : i32, i32
  }
  func.func @transform_5(%arg0: i32) -> (i32, i32) {
    %c0_i32 = arith.constant 0 : i32
    %c0_i32_0 = arith.constant 0 : i32
    %c0_i32_1 = arith.constant 0 : i32
    return %c0_i32, %c0_i32_0 : i32, i32
  }
  func.func @transform_6(%arg0: i32) -> (i32, i32) {
    %c0_i32 = arith.constant 0 : i32
    %c0_i32_0 = arith.constant 0 : i32
    %c0_i32_1 = arith.constant 0 : i32
    return %c0_i32, %c0_i32_0 : i32, i32
  }
  func.func @transform_7(%arg0: i32) -> (i32, i32) {
    %c0_i32 = arith.constant 0 : i32
    %c0_i32_0 = arith.constant 0 : i32
    return %arg0, %c0_i32 : i32, i32
  }
}

</mosaic_0001>

<llo_original>
// kernel: net_forward.5
$region0: #{net_forward.5}
  #allocation0 [shape = 'u32[]', space=smem, size = 0x4, offset = 0x4, fixed_abs, tag = 'smem constant byte address 0x4 - core index']
  #allocation1 [shape = 'u32[72,128]{1,0:T(1,128)}', space=vmem, size = 0x9000, scoped, tag = 'internal scratch']
  %s0 = inlined_call_operand.vmem [shape: bf16[8,640], index: 0, kind: input, shape index: {}]
  %s1 = inlined_call_operand.hbm [shape: bf16[640,128], index: 1, kind: input, shape index: {}]
  %s2 = inlined_call_operand.vmem [shape: f32[1,128], index: 2, kind: input, shape index: {}]
  %s3 = inlined_call_operand.hbm [shape: bf16[128,128], index: 3, kind: input, shape index: {}]
  %s4 = inlined_call_operand.vmem [shape: f32[1,128], index: 4, kind: input, shape index: {}]
  %s5 = inlined_call_operand.hbm [shape: bf16[128,128], index: 5, kind: input, shape index: {}]
  %s6 = inlined_call_operand.vmem [shape: f32[1,128], index: 6, kind: input, shape index: {}]
  %s7 = inlined_call_operand.vmem [shape: f32[8,128], index: 7, kind: output, shape index: {}]
  %s8 = sld [smem:[#allocation0]]
  $region50: #{net_forward.5} parent=0
    _
  %s10 = ssub.s32 1, %s8
  %s11 = scalar_select 0, %s10, %s8
  $region1: #{net_forward.5} parent=0
    #allocation2 [shape = 'u8[163840]{0}', space=vmem, size = 0x28000, scoped, tag = 'input window, operand 1, single buffered']
    #allocation3 [shape = 's32[1]{0}', space=sflag, size = 0x4, scoped, tag = 'scoped memory for net_forward.5']
    #allocation4 [shape = 'u8[32768]{0}', space=vmem, size = 0x8000, scoped, tag = 'input window, operand 3, single buffered']
    #allocation5 [shape = 's32[1]{0}', space=sflag, size = 0x4, scoped, tag = 'scoped memory for net_forward.5']
    #allocation6 [shape = 'u8[32768]{0}', space=vmem, size = 0x8000, scoped, tag = 'input window, operand 5, single buffered']
    %12 = vsyncpa [#allocation3], 0
    %13 = vsyncpa [#allocation5], 0
    // Predicated region
    $region2: #{net_forward.5} parent=1 // pred_check
      _
    $region3: #{net_forward.5} parent=1 // pred_check_branch
      %15 = sbr.rel (0) target = $region5
    $region4: #{net_forward.5} parent=1 // pred_region
      _
    $region5: #{net_forward.5} parent=1 // pred_fallthru
      _
    // Predicated region
    $region6: #{net_forward.5} parent=1 // pred_check
      _
    $region7: #{net_forward.5} parent=1 // pred_check_branch
      %17 = sbr.rel (0) target = $region9
    $region8: #{net_forward.5} parent=1 // pred_region
      %19 = vsyncadd [#allocation3], 0
      %s20 = sshll.u32 %s1, 4
      %s21 = int_to_ptr.hbm [resolvable:$true] %s20
      %s22 = sshll.u32 [#allocation2], 4
      %s23 = int_to_ptr.vmem [resolvable:$true] %s22
      %28 = dma.hbm_to_vmem [thread:$0]  %s21, 5120, %s23, [#allocation3], 64, 64, 4
    $region9: #{net_forward.5} parent=1 // pred_fallthru
      _
    // Predicated region
    $region10: #{net_forward.5} parent=1 // pred_check
      _
    $region11: #{net_forward.5} parent=1 // pred_check_branch
      %30 = sbr.rel (0) target = $region13
    $region12: #{net_forward.5} parent=1 // pred_region
      _
    $region13: #{net_forward.5} parent=1 // pred_fallthru
      _
    // Predicated region
    $region14: #{net_forward.5} parent=1 // pred_check
      _
    $region15: #{net_forward.5} parent=1 // pred_check_branch
      %32 = sbr.rel (0) target = $region17
    $region16: #{net_forward.5} parent=1 // pred_region
      %34 = vsyncadd [#allocation5], 0
      %s35 = sshll.u32 %s3, 4
      %s36 = int_to_ptr.hbm [resolvable:$true] %s35
      %s37 = sshll.u32 [#allocation4], 4
      %s38 = int_to_ptr.vmem [resolvable:$true] %s37
      %43 = dma.hbm_to_vmem [thread:$0]  %s36, 1024, %s38, [#allocation5], 64, 64, 4
    $region17: #{net_forward.5} parent=1 // pred_fallthru
      _
    // Predicated region
    $region18: #{net_forward.5} parent=1 // pred_check
      _
    $region19: #{net_forward.5} parent=1 // pred_check_branch
      %45 = sbr.rel (0) target = $region21
    $region20: #{net_forward.5} parent=1 // pred_region
      _
    $region21: #{net_forward.5} parent=1 // pred_fallthru
      _
    // Predicated region
    $region22: #{net_forward.5} parent=1 // pred_check
      _
    $region23: #{net_forward.5} parent=1 // pred_check_branch
      %47 = sbr.rel (0) target = $region25
    $region24: #{net_forward.5} parent=1 // pred_region
      %49 = vsyncadd [#allocation5], 0
      %s50 = sshll.u32 %s5, 4
      %s51 = int_to_ptr.hbm [resolvable:$true] %s50
      %s52 = sshll.u32 [#allocation6], 4
      %s53 = int_to_ptr.vmem [resolvable:$true] %s52
      %58 = dma.hbm_to_vmem [thread:$0]  %s51, 1024, %s53, [#allocation5], 64, 64, 4
    $region25: #{net_forward.5} parent=1 // pred_fallthru
      _
    // Predicated region
    $region26: #{net_forward.5} parent=1 // pred_check
      _
    $region27: #{net_forward.5} parent=1 // pred_check_branch
      %60 = sbr.rel (0) target = $region29
    $region28: #{net_forward.5} parent=1 // pred_region
      _
    $region29: #{net_forward.5} parent=1 // pred_fallthru
      _
    // Predicated region
    $region30: #{net_forward.5} parent=1 // pred_check
      _
    $region31: #{net_forward.5} parent=1 // pred_check_branch
      %62 = sbr.rel (0) target = $region33
    $region32: #{net_forward.5} parent=1 // pred_region
      %64 = dma.done [#allocation3], 5120
    $region33: #{net_forward.5} parent=1 // pred_fallthru
      _
    // Predicated region
    $region34: #{net_forward.5} parent=1 // pred_check
      _
    $region35: #{net_forward.5} parent=1 // pred_check_branch
      %66 = sbr.rel (0) target = $region37
    $region36: #{net_forward.5} parent=1 // pred_region
      %68 = dma.done [#allocation5], 1024
    $region37: #{net_forward.5} parent=1 // pred_fallthru
      _
    // Predicated region
    $region38: #{net_forward.5} parent=1 // pred_check
      _
    $region39: #{net_forward.5} parent=1 // pred_check_branch
      %70 = sbr.rel (0) target = $region41
    $region40: #{net_forward.5} parent=1 // pred_region
      %72 = dma.done [#allocation5], 1024
    $region41: #{net_forward.5} parent=1 // pred_fallthru
      _
    %v73 = vld [vmem:[%s0] sm:$0xff]
    %v74 = vld [vmem:[%s0 + $0x8] sm:$0xff]
    %v75 = vld [vmem:[%s0 + $0x10] sm:$0xf]
    %v76 = vld [vmem:[#allocation2] sm:$0xf]
    %v77 = vld [vmem:[#allocation2 + $0x4] sm:$0xf]
    %v78 = vld [vmem:[#allocation2 + $0x8] sm:$0xf]
    %v79 = vld [vmem:[#allocation2 + $0xc] sm:$0xf]
    %v80 = vld [vmem:[#allocation2 + $0x10] sm:$0xf]
    %v81 = vld [vmem:[#allocation2 + $0x14] sm:$0xf]
    %v82 = vld [vmem:[#allocation2 + $0x18] sm:$0xf]
    %v83 = vld [vmem:[#allocation2 + $0x1c] sm:$0xf]
    %v84 = vld [vmem:[#allocation2 + $0x20] sm:$0xf]
    %v85 = vld [vmem:[#allocation2 + $0x24] sm:$0xf]
    %v86 = vld [vmem:[#allocation2 + $0x28] sm:$0xf]
    %v87 = vld [vmem:[#allocation2 + $0x2c] sm:$0xf]
    %v88 = vld [vmem:[#allocation2 + $0x30] sm:$0xf]
    %v89 = vld [vmem:[#allocation2 + $0x34] sm:$0xf]
    %v90 = vld [vmem:[#allocation2 + $0x38] sm:$0xf]
    %v91 = vld [vmem:[#allocation2 + $0x3c] sm:$0xf]
    %v92 = vld [vmem:[#allocation2 + $0x40] sm:$0xf]
    %v93 = vld [vmem:[#allocation2 + $0x44] sm:$0xf]
    %v94 = vld [vmem:[#allocation2 + $0x48] sm:$0xf]
    %v95 = vld [vmem:[#allocation2 + $0x4c] sm:$0xf]
    %v96 = vld [vmem:[#allocation2 + $0x50] sm:$0xf]
    %v97 = vld [vmem:[#allocation2 + $0x54] sm:$0xf]
    %v98 = vld [vmem:[#allocation2 + $0x58] sm:$0xf]
    %v99 = vld [vmem:[#allocation2 + $0x5c] sm:$0xf]
    %v100 = vld [vmem:[#allocation2 + $0x60] sm:$0xf]
    %v101 = vld [vmem:[#allocation2 + $0x64] sm:$0xf]
    %v102 = vld [vmem:[#allocation2 + $0x68] sm:$0xf]
    %v103 = vld [vmem:[#allocation2 + $0x6c] sm:$0xf]
    %v104 = vld [vmem:[#allocation2 + $0x70] sm:$0xf]
    %v105 = vld [vmem:[#allocation2 + $0x74] sm:$0xf]
    %v106 = vld [vmem:[#allocation2 + $0x78] sm:$0xf]
    %v107 = vld [vmem:[#allocation2 + $0x7c] sm:$0xf]
    %v108 = vld [vmem:[#allocation2 + $0x80] sm:$0xf]
    %v109 = vld [vmem:[#allocation2 + $0x84] sm:$0xf]
    %v110 = vld [vmem:[#allocation2 + $0x88] sm:$0xf]
    %v111 = vld [vmem:[#allocation2 + $0x8c] sm:$0xf]
    %v112 = vld [vmem:[#allocation2 + $0x90] sm:$0xf]
    %v113 = vld [vmem:[#allocation2 + $0x94] sm:$0xf]
    %v114 = vld [vmem:[#allocation2 + $0x98] sm:$0xf]
    %v115 = vld [vmem:[#allocation2 + $0x9c] sm:$0xf]
    %v116 = vld [vmem:[#allocation2 + $0xa0] sm:$0xf]
    %v117 = vld [vmem:[#allocation2 + $0xa4] sm:$0xf]
    %v118 = vld [vmem:[#allocation2 + $0xa8] sm:$0xf]
    %v119 = vld [vmem:[#allocation2 + $0xac] sm:$0xf]
    %v120 = vld [vmem:[#allocation2 + $0xb0] sm:$0xf]
    %v121 = vld [vmem:[#allocation2 + $0xb4] sm:$0xf]
    %v122 = vld [vmem:[#allocation2 + $0xb8] sm:$0xf]
    %v123 = vld [vmem:[#allocation2 + $0xbc] sm:$0xf]
    %v124 = vld [vmem:[#allocation2 + $0xc0] sm:$0xf]
    %v125 = vld [vmem:[#allocation2 + $0xc4] sm:$0xf]
    %v126 = vld [vmem:[#allocation2 + $0xc8] sm:$0xf]
    %v127 = vld [vmem:[#allocation2 + $0xcc] sm:$0xf]
    %v128 = vld [vmem:[#allocation2 + $0xd0] sm:$0xf]
    %v129 = vld [vmem:[#allocation2 + $0xd4] sm:$0xf]
    %v130 = vld [vmem:[#allocation2 + $0xd8] sm:$0xf]
    %v131 = vld [vmem:[#allocation2 + $0xdc] sm:$0xf]
    %v132 = vld [vmem:[#allocation2 + $0xe0] sm:$0xf]
    %v133 = vld [vmem:[#allocation2 + $0xe4] sm:$0xf]
    %v134 = vld [vmem:[#allocation2 + $0xe8] sm:$0xf]
    %v135 = vld [vmem:[#allocation2 + $0xec] sm:$0xf]
    %v136 = vld [vmem:[#allocation2 + $0xf0] sm:$0xf]
    %v137 = vld [vmem:[#allocation2 + $0xf4] sm:$0xf]
    %v138 = vld [vmem:[#allocation2 + $0xf8] sm:$0xf]
    %v139 = vld [vmem:[#allocation2 + $0xfc] sm:$0xf]
    %v140 = vld [vmem:[#allocation2 + $0x100] sm:$0xf]
    %v141 = vld [vmem:[#allocation2 + $0x104] sm:$0xf]
    %v142 = vld [vmem:[#allocation2 + $0x108] sm:$0xf]
    %v143 = vld [vmem:[#allocation2 + $0x10c] sm:$0xf]
    %v144 = vld [vmem:[#allocation2 + $0x110] sm:$0xf]
    %v145 = vld [vmem:[#allocation2 + $0x114] sm:$0xf]
    %v146 = vld [vmem:[#allocation2 + $0x118] sm:$0xf]
    %v147 = vld [vmem:[#allocation2 + $0x11c] sm:$0xf]
    %v148 = vld [vmem:[#allocation2 + $0x120] sm:$0xf]
    %v149 = vld [vmem:[#allocation2 + $0x124] sm:$0xf]
    %v150 = vld [vmem:[#allocation2 + $0x128] sm:$0xf]
    %v151 = vld [vmem:[#allocation2 + $0x12c] sm:$0xf]
    %v152 = vld [vmem:[#allocation2 + $0x130] sm:$0xf]
    %v153 = vld [vmem:[#allocation2 + $0x134] sm:$0xf]
    %v154 = vld [vmem:[#allocation2 + $0x138] sm:$0xf]
    %v155 = vld [vmem:[#allocation2 + $0x13c] sm:$0xf]
    %v156 = vld [vmem:[%s2] sm:$0x1]
    %v158 = vperm.slane %v156, 0
    %v163 = vunpack.c.l.b16 %v73
    %v164 = vunpack.c.h.b16 %v73
    %v165 = vunpack.c.l.b16 %v74
    %v166 = vunpack.c.h.b16 %v74
    %v167 = vunpack.c.l.b16 %v75
    %v168 = vpack.c.b16 %v163, %v163
    %v169 = vpack.c.b16 %v164, %v164
    %v170 = vpack.c.b16 %v165, %v165
    %v171 = vpack.c.b16 %v166, %v166
    %v172 = vpack.c.b16 %v167, %v167
    %v258 = vunpack.c.l.b16 %v76
    %v259 = vunpack.c.l.b16 %v77
    %v260 = vunpack.c.l.b16 %v78
    %v261 = vunpack.c.l.b16 %v79
    %v262 = vunpack.c.l.b16 %v80
    %v263 = vunpack.c.l.b16 %v81
    %v264 = vunpack.c.l.b16 %v82
    %v265 = vunpack.c.l.b16 %v83
    %v266 = vunpack.c.l.b16 %v84
    %v267 = vunpack.c.l.b16 %v85
    %v268 = vunpack.c.l.b16 %v86
    %v269 = vunpack.c.l.b16 %v87
    %v270 = vunpack.c.l.b16 %v88
    %v271 = vunpack.c.l.b16 %v89
    %v272 = vunpack.c.l.b16 %v90
    %v273 = vunpack.c.l.b16 %v91
    %v274 = vunpack.c.l.b16 %v92
    %v275 = vunpack.c.l.b16 %v93
    %v276 = vunpack.c.l.b16 %v94
    %v277 = vunpack.c.l.b16 %v95
    %v278 = vunpack.c.l.b16 %v96
    %v279 = vunpack.c.l.b16 %v97
    %v280 = vunpack.c.l.b16 %v98
    %v281 = vunpack.c.l.b16 %v99
    %v282 = vunpack.c.l.b16 %v100
    %v283 = vunpack.c.l.b16 %v101
    %v284 = vunpack.c.l.b16 %v102
    %v285 = vunpack.c.l.b16 %v103
    %v286 = vunpack.c.l.b16 %v104
    %v287 = vunpack.c.l.b16 %v105
    %v288 = vunpack.c.l.b16 %v106
    %v289 = vunpack.c.l.b16 %v107
    %v290 = vunpack.c.l.b16 %v108
    %v291 = vunpack.c.l.b16 %v109
    %v292 = vunpack.c.l.b16 %v110
    %v293 = vunpack.c.l.b16 %v111
    %v294 = vunpack.c.l.b16 %v112
    %v295 = vunpack.c.l.b16 %v113
    %v296 = vunpack.c.l.b16 %v114
    %v297 = vunpack.c.l.b16 %v115
    %v298 = vunpack.c.l.b16 %v116
    %v299 = vunpack.c.l.b16 %v117
    %v300 = vunpack.c.l.b16 %v118
    %v301 = vunpack.c.l.b16 %v119
    %v302 = vunpack.c.l.b16 %v120
    %v303 = vunpack.c.l.b16 %v121
    %v304 = vunpack.c.l.b16 %v122
    %v305 = vunpack.c.l.b16 %v123
    %v306 = vunpack.c.l.b16 %v124
    %v307 = vunpack.c.l.b16 %v125
    %v308 = vunpack.c.l.b16 %v126
    %v309 = vunpack.c.l.b16 %v127
    %v310 = vunpack.c.l.b16 %v128
    %v311 = vunpack.c.l.b16 %v129
    %v312 = vunpack.c.l.b16 %v130
    %v313 = vunpack.c.l.b16 %v131
    %v314 = vunpack.c.l.b16 %v132
    %v315 = vunpack.c.l.b16 %v133
    %v316 = vunpack.c.l.b16 %v134
    %v317 = vunpack.c.l.b16 %v135
    %v318 = vunpack.c.l.b16 %v136
    %v319 = vunpack.c.l.b16 %v137
    %v320 = vunpack.c.l.b16 %v138
    %v321 = vunpack.c.l.b16 %v139
    %v322 = vunpack.c.l.b16 %v140
    %v323 = vunpack.c.l.b16 %v141
    %v324 = vunpack.c.l.b16 %v142
    %v325 = vunpack.c.l.b16 %v143
    %v326 = vunpack.c.l.b16 %v144
    %v327 = vunpack.c.l.b16 %v145
    %v328 = vunpack.c.l.b16 %v146
    %v329 = vunpack.c.l.b16 %v147
    %v330 = vunpack.c.l.b16 %v148
    %v331 = vunpack.c.l.b16 %v149
    %v332 = vunpack.c.l.b16 %v150
    %v333 = vunpack.c.l.b16 %v151
    %v334 = vunpack.c.l.b16 %v152
    %v335 = vunpack.c.l.b16 %v153
    %v336 = vunpack.c.l.b16 %v154
    %v337 = vunpack.c.l.b16 %v155
    %v338 = vpack.c.b16 %v259, %v258
    %v339 = vpack.c.b16 %v261, %v260
    %v340 = vpack.c.b16 %v263, %v262
    %v341 = vpack.c.b16 %v265, %v264
    %v342 = vpack.c.b16 %v267, %v266
    %v343 = vpack.c.b16 %v269, %v268
    %v344 = vpack.c.b16 %v271, %v270
    %v345 = vpack.c.b16 %v273, %v272
    %v346 = vpack.c.b16 %v275, %v274
    %v347 = vpack.c.b16 %v277, %v276
    %v348 = vpack.c.b16 %v279, %v278
    %v349 = vpack.c.b16 %v281, %v280
    %v350 = vpack.c.b16 %v283, %v282
    %v351 = vpack.c.b16 %v285, %v284
    %v352 = vpack.c.b16 %v287, %v286
    %v353 = vpack.c.b16 %v289, %v288
    %v354 = vpack.c.b16 %v291, %v290
    %v355 = vpack.c.b16 %v293, %v292
    %v356 = vpack.c.b16 %v295, %v294
    %v357 = vpack.c.b16 %v297, %v296
    %v358 = vpack.c.b16 %v299, %v298
    %v359 = vpack.c.b16 %v301, %v300
    %v360 = vpack.c.b16 %v303, %v302
    %v361 = vpack.c.b16 %v305, %v304
    %v362 = vpack.c.b16 %v307, %v306
    %v363 = vpack.c.b16 %v309, %v308
    %v364 = vpack.c.b16 %v311, %v310
    %v365 = vpack.c.b16 %v313, %v312
    %v366 = vpack.c.b16 %v315, %v314
    %v367 = vpack.c.b16 %v317, %v316
    %v368 = vpack.c.b16 %v319, %v318
    %v369 = vpack.c.b16 %v321, %v320
    %v370 = vpack.c.b16 %v323, %v322
    %v371 = vpack.c.b16 %v325, %v324
    %v372 = vpack.c.b16 %v327, %v326
    %v373 = vpack.c.b16 %v329, %v328
    %v374 = vpack.c.b16 %v331, %v330
    %v375 = vpack.c.b16 %v333, %v332
    %v376 = vpack.c.b16 %v335, %v334
    %v377 = vpack.c.b16 %v337, %v336
    %418 = vmatpush.bf16.msra.mxu0 %v345
    %419 = vmatpush.bf16.msra.mxu0 %v344
    %420 = vmatpush.bf16.msra.mxu0 %v343
    %421 = vmatpush.bf16.msra.mxu0 %v342
    %422 = vmatpush.bf16.msra.mxu0 %v341
    %423 = vmatpush.bf16.msra.mxu0 %v340
    %424 = vmatpush.bf16.msra.mxu0 %v339
    %425 = vmatpush.bf16.msra.mxu0 %v338
    %426 = vmatmul.bf16.gmra.mxu0 %v168
    %v427 = vpop.f32.mrf.mxu0
    %v428 = vadd.f32 %v158, %v427
    %v429 = vpop.f32.mrf.mxu0
    %430 = vdwg.mxu0
    %431 = vmatpush.bf16.msra.mxu0 %v353
    %432 = vmatpush.bf16.msra.mxu0 %v352
    %433 = vmatpush.bf16.msra.mxu0 %v351
    %434 = vmatpush.bf16.msra.mxu0 %v350
    %435 = vmatpush.bf16.msra.mxu0 %v349
    %436 = vmatpush.bf16.msra.mxu0 %v348
    %437 = vmatpush.bf16.msra.mxu0 %v347
    %438 = vmatpush.bf16.msra.mxu0 %v346
    %439 = vmatmul.bf16.gmra.mxu0 %v169
    %v440 = vpop.f32.mrf.mxu0
    %v441 = vadd.f32 %v428, %v440
    %v442 = vpop.f32.mrf.mxu0
    %443 = vdwg.mxu0
    %444 = vmatpush.bf16.msra.mxu0 %v361
    %445 = vmatpush.bf16.msra.mxu0 %v360
    %446 = vmatpush.bf16.msra.mxu0 %v359
    %447 = vmatpush.bf16.msra.mxu0 %v358
    %448 = vmatpush.bf16.msra.mxu0 %v357
    %449 = vmatpush.bf16.msra.mxu0 %v356
    %450 = vmatpush.bf16.msra.mxu0 %v355
    %451 = vmatpush.bf16.msra.mxu0 %v354
    %452 = vmatmul.bf16.gmra.mxu0 %v170
    %v453 = vpop.f32.mrf.mxu0
    %v454 = vadd.f32 %v441, %v453
    %v455 = vpop.f32.mrf.mxu0
    %456 = vdwg.mxu0
    %457 = vmatpush.bf16.msra.mxu0 %v369
    %458 = vmatpush.bf16.msra.mxu0 %v368
    %459 = vmatpush.bf16.msra.mxu0 %v367
    %460 = vmatpush.bf16.msra.mxu0 %v366
    %461 = vmatpush.bf16.msra.mxu0 %v365
    %462 = vmatpush.bf16.msra.mxu0 %v364
    %463 = vmatpush.bf16.msra.mxu0 %v363
    %464 = vmatpush.bf16.msra.mxu0 %v362
    %465 = vmatmul.bf16.gmra.mxu0 %v171
    %v466 = vpop.f32.mrf.mxu0
    %v467 = vadd.f32 %v454, %v466
    %v468 = vpop.f32.mrf.mxu0
    %469 = vdwg.mxu0
    %470 = vmatpush.bf16.msra.mxu0 %v377
    %471 = vmatpush.bf16.msra.mxu0 %v376
    %472 = vmatpush.bf16.msra.mxu0 %v375
    %473 = vmatpush.bf16.msra.mxu0 %v374
    %474 = vmatpush.bf16.msra.mxu0 %v373
    %475 = vmatpush.bf16.msra.mxu0 %v372
    %476 = vmatpush.bf16.msra.mxu0 %v371
    %477 = vmatpush.bf16.msra.mxu0 %v370
    %478 = vmatmul.bf16.gmra.mxu0 %v172
    %v479 = vpop.f32.mrf.mxu0
    %v480 = vadd.f32 %v467, %v479
    %v481 = vpop.f32.mrf.mxu0
    %482 = vdwg.mxu0
    %v483 = vmax.f32 %v480, 0.0
    %v484 = vpack.c.bf16 %v483, %v483
    %v485 = vld [vmem:[#allocation4] sm:$0xf]
    %v486 = vld [vmem:[#allocation4 + $0x4] sm:$0xf]
    %v487 = vld [vmem:[#allocation4 + $0x8] sm:$0xf]
    %v488 = vld [vmem:[#allocation4 + $0xc] sm:$0xf]
    %v489 = vld [vmem:[#allocation4 + $0x10] sm:$0xf]
    %v490 = vld [vmem:[#allocation4 + $0x14] sm:$0xf]
    %v491 = vld [vmem:[#allocation4 + $0x18] sm:$0xf]
    %v492 = vld [vmem:[#allocation4 + $0x1c] sm:$0xf]
    %v493 = vld [vmem:[#allocation4 + $0x20] sm:$0xf]
    %v494 = vld [vmem:[#allocation4 + $0x24] sm:$0xf]
    %v495 = vld [vmem:[#allocation4 + $0x28] sm:$0xf]
    %v496 = vld [vmem:[#allocation4 + $0x2c] sm:$0xf]
    %v497 = vld [vmem:[#allocation4 + $0x30] sm:$0xf]
    %v498 = vld [vmem:[#allocation4 + $0x34] sm:$0xf]
    %v499 = vld [vmem:[#allocation4 + $0x38] sm:$0xf]
    %v500 = vld [vmem:[#allocation4 + $0x3c] sm:$0xf]
    %v501 = vld [vmem:[%s4] sm:$0x1]
    %v503 = vperm.slane %v501, 0
    %v521 = vunpack.c.l.b16 %v485
    %v522 = vunpack.c.l.b16 %v486
    %v523 = vunpack.c.l.b16 %v487
    %v524 = vunpack.c.l.b16 %v488
    %v525 = vunpack.c.l.b16 %v489
    %v526 = vunpack.c.l.b16 %v490
    %v527 = vunpack.c.l.b16 %v491
    %v528 = vunpack.c.l.b16 %v492
    %v529 = vunpack.c.l.b16 %v493
    %v530 = vunpack.c.l.b16 %v494
    %v531 = vunpack.c.l.b16 %v495
    %v532 = vunpack.c.l.b16 %v496
    %v533 = vunpack.c.l.b16 %v497
    %v534 = vunpack.c.l.b16 %v498
    %v535 = vunpack.c.l.b16 %v499
    %v536 = vunpack.c.l.b16 %v500
    %v537 = vpack.c.b16 %v522, %v521
    %v538 = vpack.c.b16 %v524, %v523
    %v539 = vpack.c.b16 %v526, %v525
    %v540 = vpack.c.b16 %v528, %v527
    %v541 = vpack.c.b16 %v530, %v529
    %v542 = vpack.c.b16 %v532, %v531
    %v543 = vpack.c.b16 %v534, %v533
    %v544 = vpack.c.b16 %v536, %v535
    %553 = vmatpush.bf16.msra.mxu0 %v544
    %554 = vmatpush.bf16.msra.mxu0 %v543
    %555 = vmatpush.bf16.msra.mxu0 %v542
    %556 = vmatpush.bf16.msra.mxu0 %v541
    %557 = vmatpush.bf16.msra.mxu0 %v540
    %558 = vmatpush.bf16.msra.mxu0 %v539
    %559 = vmatpush.bf16.msra.mxu0 %v538
    %560 = vmatpush.bf16.msra.mxu0 %v537
    %561 = vmatmul.bf16.gmra.mxu0 %v484
    %v562 = vpop.f32.mrf.mxu0
    %v563 = vadd.f32 %v503, %v562
    %v564 = vpop.f32.mrf.mxu0
    %565 = vdwg.mxu0
    %v566 = vmax.f32 %v563, 0.0
    %v567 = vpack.c.bf16 %v566, %v566
    %v568 = vld [vmem:[#allocation6] sm:$0xf]
    %v569 = vld [vmem:[#allocation6 + $0x4] sm:$0xf]
    %v570 = vld [vmem:[#allocation6 + $0x8] sm:$0xf]
    %v571 = vld [vmem:[#allocation6 + $0xc] sm:$0xf]
    %v572 = vld [vmem:[#allocation6 + $0x10] sm:$0xf]
    %v573 = vld [vmem:[#allocation6 + $0x14] sm:$0xf]
    %v574 = vld [vmem:[#allocation6 + $0x18] sm:$0xf]
    %v575 = vld [vmem:[#allocation6 + $0x1c] sm:$0xf]
    %v576 = vld [vmem:[#allocation6 + $0x20] sm:$0xf]
    %v577 = vld [vmem:[#allocation6 + $0x24] sm:$0xf]
    %v578 = vld [vmem:[#allocation6 + $0x28] sm:$0xf]
    %v579 = vld [vmem:[#allocation6 + $0x2c] sm:$0xf]
    %v580 = vld [vmem:[#allocation6 + $0x30] sm:$0xf]
    %v581 = vld [vmem:[#allocation6 + $0x34] sm:$0xf]
    %v582 = vld [vmem:[#allocation6 + $0x38] sm:$0xf]
    %v583 = vld [vmem:[#allocation6 + $0x3c] sm:$0xf]
    %v584 = vld [vmem:[%s6] sm:$0x1]
    %v586 = vperm.slane %v584, 0
    %v604 = vunpack.c.l.b16 %v568
    %v605 = vunpack.c.l.b16 %v569
    %v606 = vunpack.c.l.b16 %v570
    %v607 = vunpack.c.l.b16 %v571
    %v608 = vunpack.c.l.b16 %v572
    %v609 = vunpack.c.l.b16 %v573
    %v610 = vunpack.c.l.b16 %v574
    %v611 = vunpack.c.l.b16 %v575
    %v612 = vunpack.c.l.b16 %v576
    %v613 = vunpack.c.l.b16 %v577
    %v614 = vunpack.c.l.b16 %v578
    %v615 = vunpack.c.l.b16 %v579
    %v616 = vunpack.c.l.b16 %v580
    %v617 = vunpack.c.l.b16 %v581
    %v618 = vunpack.c.l.b16 %v582
    %v619 = vunpack.c.l.b16 %v583
    %v620 = vpack.c.b16 %v605, %v604
    %v621 = vpack.c.b16 %v607, %v606
    %v622 = vpack.c.b16 %v609, %v608
    %v623 = vpack.c.b16 %v611, %v610
    %v624 = vpack.c.b16 %v613, %v612
    %v625 = vpack.c.b16 %v615, %v614
    %v626 = vpack.c.b16 %v617, %v616
    %v627 = vpack.c.b16 %v619, %v618
    %636 = vmatpush.bf16.msra.mxu0 %v627
    %637 = vmatpush.bf16.msra.mxu0 %v626
    %638 = vmatpush.bf16.msra.mxu0 %v625
    %639 = vmatpush.bf16.msra.mxu0 %v624
    %640 = vmatpush.bf16.msra.mxu0 %v623
    %641 = vmatpush.bf16.msra.mxu0 %v622
    %642 = vmatpush.bf16.msra.mxu0 %v621
    %643 = vmatpush.bf16.msra.mxu0 %v620
    %644 = vmatmul.bf16.gmra.mxu0 %v567
    %v645 = vpop.f32.mrf.mxu0
    %v646 = vadd.f32 %v586, %v645
    %v647 = vpop.f32.mrf.mxu0
    %648 = vdwg.mxu0
    %649 = vmax.xlane.f32.xlu0 %v646
    %v650 = vpop.xlane.xlu0 %649
    %v651 = vsub.f32 %v646, %v650
    %v652 = vmul.f32 %v651, 1.442695
    %v653 = vpow.pop %v652
    %654 = vadd.xlane.f32.xlu0 %v653
    %v655 = vpop.xlane.xlu0 %654
    %v656 = vlog2.pop %v655
    %v657 = vmul.f32 %v656, 0.6931472
    %v658 = vsub.f32 %v651, %v657
    %659 = vst [vmem:[%s7] sm:$0xff] %v658
    // Predicated region
    $region42: #{net_forward.5} parent=1 // pred_check
      _
    $region43: #{net_forward.5} parent=1 // pred_check_branch
      %661 = sbr.rel (0) target = $region45
    $region44: #{net_forward.5} parent=1 // pred_region
      _
    $region45: #{net_forward.5} parent=1 // pred_fallthru
      _
    // Predicated region
    $region46: #{net_forward.5} parent=1 // pred_check
      _
    $region47: #{net_forward.5} parent=1 // pred_check_branch
      %663 = sbr.rel (0) target = $region49
    $region48: #{net_forward.5} parent=1 // pred_region
      _
    $region49: #{net_forward.5} parent=1 // pred_fallthru
      _
    %664 = vsyncpa [#allocation3], 1
    %665 = vsyncpa [#allocation5], 1

// kernel: net_forward.4
$region0: #{net_forward.4}
  #allocation0 [shape = 'u32[]', space=smem, size = 0x4, offset = 0x4, fixed_abs, tag = 'smem constant byte address 0x4 - core index']
  #allocation1 [shape = 'u32[72,128]{1,0:T(1,128)}', space=vmem, size = 0x9000, scoped, tag = 'internal scratch']
  #allocation2 [shape = 'f32[8,8,1280]{2,1,0:T(8,128)}', space=vmem, size = 0x50000, scoped, tag = 'scratch operand']
  #allocation3 [shape = 'f32[8,8,1280]{2,1,0:T(8,128)}', space=vmem, size = 0x50000, scoped, tag = 'scratch operand']
  %s0 = inlined_call_operand.vmem [shape: bf16[8,8,128], index: 0, kind: input, shape index: {}]
  %s1 = inlined_call_operand.vmem [shape: bf16[8,8,128], index: 1, kind: input, shape index: {}]
  %s2 = inlined_call_operand.vmem [shape: bf16[128,1280], index: 2, kind: input, shape index: {}]
  %s3 = inlined_call_operand.vmem [shape: f32[1,1,128], index: 3, kind: input, shape index: {}]
  %s4 = inlined_call_operand.vmem [shape: bf16[8,5,128], index: 4, kind: output, shape index: {}]
  %s5 = sld [smem:[#allocation0]]
  $region26: #{net_forward.4} parent=0
    _
  %s7 = ssub.s32 1, %s5
  %s8 = scalar_select 0, %s7, %s5
  // Predicated region
  $region2: #{net_forward.4} parent=0 // pred_check
    _
  $region3: #{net_forward.4} parent=0 // pred_check_branch
    %10 = sbr.rel (0) target = $region5
  $region4: #{net_forward.4} parent=0 // pred_region
    _
  $region5: #{net_forward.4} parent=0 // pred_fallthru
    _
  // Predicated region
  $region6: #{net_forward.4} parent=0 // pred_check
    _
  $region7: #{net_forward.4} parent=0 // pred_check_branch
    %12 = sbr.rel (0) target = $region9
  $region8: #{net_forward.4} parent=0 // pred_region
    _
  $region9: #{net_forward.4} parent=0 // pred_fallthru
    _
  // Predicated region
  $region10: #{net_forward.4} parent=0 // pred_check
    _
  $region11: #{net_forward.4} parent=0 // pred_check_branch
    %14 = sbr.rel (0) target = $region13
  $region12: #{net_forward.4} parent=0 // pred_region
    _
  $region13: #{net_forward.4} parent=0 // pred_fallthru
    _
  // Predicated region
  $region14: #{net_forward.4} parent=0 // pred_check
    _
  $region15: #{net_forward.4} parent=0 // pred_check_branch
    %16 = sbr.rel (0) target = $region17
  $region16: #{net_forward.4} parent=0 // pred_region
    _
  $region17: #{net_forward.4} parent=0 // pred_fallthru
    _
  %v17 = vld [vmem:[%s2] sm:$0xff]
  %v18 = vld [vmem:[%s2 + $0x8] sm:$0xff]
  %v19 = vld [vmem:[%s2 + $0x10] sm:$0xff]
  %v20 = vld [vmem:[%s2 + $0x18] sm:$0xff]
  %v21 = vld [vmem:[%s2 + $0x20] sm:$0xff]
  %v22 = vld [vmem:[%s2 + $0x28] sm:$0xff]
  %v23 = vld [vmem:[%s2 + $0x30] sm:$0xff]
  %v24 = vld [vmem:[%s2 + $0x38] sm:$0xff]
  %v25 = vld [vmem:[%s2 + $0x40] sm:$0xff]
  %v26 = vld [vmem:[%s2 + $0x48] sm:$0xff]
  %v27 = vld [vmem:[%s2 + $0x50] sm:$0xff]
  %v28 = vld [vmem:[%s2 + $0x58] sm:$0xff]
  %v29 = vld [vmem:[%s2 + $0x60] sm:$0xff]
  %v30 = vld [vmem:[%s2 + $0x68] sm:$0xff]
  %v31 = vld [vmem:[%s2 + $0x70] sm:$0xff]
  %v32 = vld [vmem:[%s2 + $0x78] sm:$0xff]
  %v33 = vld [vmem:[%s2 + $0x80] sm:$0xff]
  %v34 = vld [vmem:[%s2 + $0x88] sm:$0xff]
  %v35 = vld [vmem:[%s2 + $0x90] sm:$0xff]
  %v36 = vld [vmem:[%s2 + $0x98] sm:$0xff]
  %v37 = vld [vmem:[%s2 + $0xa0] sm:$0xff]
  %v38 = vld [vmem:[%s2 + $0xa8] sm:$0xff]
  %v39 = vld [vmem:[%s2 + $0xb0] sm:$0xff]
  %v40 = vld [vmem:[%s2 + $0xb8] sm:$0xff]
  %v41 = vld [vmem:[%s2 + $0xc0] sm:$0xff]
  %v42 = vld [vmem:[%s2 + $0xc8] sm:$0xff]
  %v43 = vld [vmem:[%s2 + $0xd0] sm:$0xff]
  %v44 = vld [vmem:[%s2 + $0xd8] sm:$0xff]
  %v45 = vld [vmem:[%s2 + $0xe0] sm:$0xff]
  %v46 = vld [vmem:[%s2 + $0xe8] sm:$0xff]
  %v47 = vld [vmem:[%s2 + $0xf0] sm:$0xff]
  %v48 = vld [vmem:[%s2 + $0xf8] sm:$0xff]
  %v49 = vld [vmem:[%s2 + $0x100] sm:$0xff]
  %v50 = vld [vmem:[%s2 + $0x108] sm:$0xff]
  %v51 = vld [vmem:[%s2 + $0x110] sm:$0xff]
  %v52 = vld [vmem:[%s2 + $0x118] sm:$0xff]
  %v53 = vld [vmem:[%s2 + $0x120] sm:$0xff]
  %v54 = vld [vmem:[%s2 + $0x128] sm:$0xff]
  %v55 = vld [vmem:[%s2 + $0x130] sm:$0xff]
  %v56 = vld [vmem:[%s2 + $0x138] sm:$0xff]
  %v57 = vld [vmem:[%s2 + $0x140] sm:$0xff]
  %v58 = vld [vmem:[%s2 + $0x148] sm:$0xff]
  %v59 = vld [vmem:[%s2 + $0x150] sm:$0xff]
  %v60 = vld [vmem:[%s2 + $0x158] sm:$0xff]
  %v61 = vld [vmem:[%s2 + $0x160] sm:$0xff]
  %v62 = vld [vmem:[%s2 + $0x168] sm:$0xff]
  %v63 = vld [vmem:[%s2 + $0x170] sm:$0xff]
  %v64 = vld [vmem:[%s2 + $0x178] sm:$0xff]
  %v65 = vld [vmem:[%s2 + $0x180] sm:$0xff]
  %v66 = vld [vmem:[%s2 + $0x188] sm:$0xff]
  %v67 = vld [vmem:[%s2 + $0x190] sm:$0xff]
  %v68 = vld [vmem:[%s2 + $0x198] sm:$0xff]
  %v69 = vld [vmem:[%s2 + $0x1a0] sm:$0xff]
  %v70 = vld [vmem:[%s2 + $0x1a8] sm:$0xff]
  %v71 = vld [vmem:[%s2 + $0x1b0] sm:$0xff]
  %v72 = vld [vmem:[%s2 + $0x1b8] sm:$0xff]
  %v73 = vld [vmem:[%s2 + $0x1c0] sm:$0xff]
  %v74 = vld [vmem:[%s2 + $0x1c8] sm:$0xff]
  %v75 = vld [vmem:[%s2 + $0x1d0] sm:$0xff]
  %v76 = vld [vmem:[%s2 + $0x1d8] sm:$0xff]
  %v77 = vld [vmem:[%s2 + $0x1e0] sm:$0xff]
  %v78 = vld [vmem:[%s2 + $0x1e8] sm:$0xff]
  %v79 = vld [vmem:[%s2 + $0x1f0] sm:$0xff]
  %v80 = vld [vmem:[%s2 + $0x1f8] sm:$0xff]
  %v81 = vld [vmem:[%s2 + $0x200] sm:$0xff]
  %v82 = vld [vmem:[%s2 + $0x208] sm:$0xff]
  %v83 = vld [vmem:[%s2 + $0x210] sm:$0xff]
  %v84 = vld [vmem:[%s2 + $0x218] sm:$0xff]
  %v85 = vld [vmem:[%s2 + $0x220] sm:$0xff]
  %v86 = vld [vmem:[%s2 + $0x228] sm:$0xff]
  %v87 = vld [vmem:[%s2 + $0x230] sm:$0xff]
  %v88 = vld [vmem:[%s2 + $0x238] sm:$0xff]
  %v89 = vld [vmem:[%s2 + $0x240] sm:$0xff]
  %v90 = vld [vmem:[%s2 + $0x248] sm:$0xff]
  %v91 = vld [vmem:[%s2 + $0x250] sm:$0xff]
  %v92 = vld [vmem:[%s2 + $0x258] sm:$0xff]
  %v93 = vld [vmem:[%s2 + $0x260] sm:$0xff]
  %v94 = vld [vmem:[%s2 + $0x268] sm:$0xff]
  %v95 = vld [vmem:[%s2 + $0x270] sm:$0xff]
  %v96 = vld [vmem:[%s2 + $0x278] sm:$0xff]
  %v97 = vld [vmem:[%s0] sm:$0xf]
  %v98 = vld [vmem:[%s0 + $0x4] sm:$0xf]
  %v99 = vld [vmem:[%s0 + $0x8] sm:$0xf]
  %v100 = vld [vmem:[%s0 + $0xc] sm:$0xf]
  %v101 = vld [vmem:[%s0 + $0x10] sm:$0xf]
  %v102 = vld [vmem:[%s0 + $0x14] sm:$0xf]
  %v103 = vld [vmem:[%s0 + $0x18] sm:$0xf]
  %v104 = vld [vmem:[%s0 + $0x1c] sm:$0xf]
  %v113 = vunpack.c.l.b16 %v97
  %v114 = vunpack.c.l.b16 %v98
  %v115 = vunpack.c.l.b16 %v99
  %v116 = vunpack.c.l.b16 %v100
  %v117 = vunpack.c.l.b16 %v101
  %v118 = vunpack.c.l.b16 %v102
  %v119 = vunpack.c.l.b16 %v103
  %v120 = vunpack.c.l.b16 %v104
  %v121 = vpack.c.b16 %v114, %v113
  %v122 = vpack.c.b16 %v116, %v115
  %v123 = vpack.c.b16 %v118, %v117
  %v124 = vpack.c.b16 %v120, %v119
  %v209 = vunpack.c.l.b16 %v17
  %v210 = vunpack.c.h.b16 %v17
  %v211 = vunpack.c.l.b16 %v18
  %v212 = vunpack.c.h.b16 %v18
  %v213 = vunpack.c.l.b16 %v19
  %v214 = vunpack.c.h.b16 %v19
  %v215 = vunpack.c.l.b16 %v20
  %v216 = vunpack.c.h.b16 %v20
  %v217 = vunpack.c.l.b16 %v21
  %v218 = vunpack.c.h.b16 %v21
  %v219 = vunpack.c.l.b16 %v22
  %v220 = vunpack.c.h.b16 %v22
  %v221 = vunpack.c.l.b16 %v23
  %v222 = vunpack.c.h.b16 %v23
  %v223 = vunpack.c.l.b16 %v24
  %v224 = vunpack.c.h.b16 %v24
  %v225 = vunpack.c.l.b16 %v25
  %v226 = vunpack.c.h.b16 %v25
  %v227 = vunpack.c.l.b16 %v26
  %v228 = vunpack.c.h.b16 %v26
  %v229 = vunpack.c.l.b16 %v27
  %v230 = vunpack.c.h.b16 %v27
  %v231 = vunpack.c.l.b16 %v28
  %v232 = vunpack.c.h.b16 %v28
  %v233 = vunpack.c.l.b16 %v29
  %v234 = vunpack.c.h.b16 %v29
  %v235 = vunpack.c.l.b16 %v30
  %v236 = vunpack.c.h.b16 %v30
  %v237 = vunpack.c.l.b16 %v31
  %v238 = vunpack.c.h.b16 %v31
  %v239 = vunpack.c.l.b16 %v32
  %v240 = vunpack.c.h.b16 %v32
  %v241 = vunpack.c.l.b16 %v33
  %v242 = vunpack.c.h.b16 %v33
  %v243 = vunpack.c.l.b16 %v34
  %v244 = vunpack.c.h.b16 %v34
  %v245 = vunpack.c.l.b16 %v35
  %v246 = vunpack.c.h.b16 %v35
  %v247 = vunpack.c.l.b16 %v36
  %v248 = vunpack.c.h.b16 %v36
  %v249 = vunpack.c.l.b16 %v37
  %v250 = vunpack.c.h.b16 %v37
  %v251 = vunpack.c.l.b16 %v38
  %v252 = vunpack.c.h.b16 %v38
  %v253 = vunpack.c.l.b16 %v39
  %v254 = vunpack.c.h.b16 %v39
  %v255 = vunpack.c.l.b16 %v40
  %v256 = vunpack.c.h.b16 %v40
  %v257 = vunpack.c.l.b16 %v41
  %v258 = vunpack.c.h.b16 %v41
  %v259 = vunpack.c.l.b16 %v42
  %v260 = vunpack.c.h.b16 %v42
  %v261 = vunpack.c.l.b16 %v43
  %v262 = vunpack.c.h.b16 %v43
  %v263 = vunpack.c.l.b16 %v44
  %v264 = vunpack.c.h.b16 %v44
  %v265 = vunpack.c.l.b16 %v45
  %v266 = vunpack.c.h.b16 %v45
  %v267 = vunpack.c.l.b16 %v46
  %v268 = vunpack.c.h.b16 %v46
  %v269 = vunpack.c.l.b16 %v47
  %v270 = vunpack.c.h.b16 %v47
  %v271 = vunpack.c.l.b16 %v48
  %v272 = vunpack.c.h.b16 %v48
  %v273 = vunpack.c.l.b16 %v49
  %v274 = vunpack.c.h.b16 %v49
  %v275 = vunpack.c.l.b16 %v50
  %v276 = vunpack.c.h.b16 %v50
  %v277 = vunpack.c.l.b16 %v51
  %v278 = vunpack.c.h.b16 %v51
  %v279 = vunpack.c.l.b16 %v52
  %v280 = vunpack.c.h.b16 %v52
  %v281 = vunpack.c.l.b16 %v53
  %v282 = vunpack.c.h.b16 %v53
  %v283 = vunpack.c.l.b16 %v54
  %v284 = vunpack.c.h.b16 %v54
  %v285 = vunpack.c.l.b16 %v55
  %v286 = vunpack.c.h.b16 %v55
  %v287 = vunpack.c.l.b16 %v56
  %v288 = vunpack.c.h.b16 %v56
  %v289 = vunpack.c.l.b16 %v57
  %v290 = vunpack.c.h.b16 %v57
  %v291 = vunpack.c.l.b16 %v58
  %v292 = vunpack.c.h.b16 %v58
  %v293 = vunpack.c.l.b16 %v59
  %v294 = vunpack.c.h.b16 %v59
  %v295 = vunpack.c.l.b16 %v60
  %v296 = vunpack.c.h.b16 %v60
  %v297 = vunpack.c.l.b16 %v61
  %v298 = vunpack.c.h.b16 %v61
  %v299 = vunpack.c.l.b16 %v62
  %v300 = vunpack.c.h.b16 %v62
  %v301 = vunpack.c.l.b16 %v63
  %v302 = vunpack.c.h.b16 %v63
  %v303 = vunpack.c.l.b16 %v64
  %v304 = vunpack.c.h.b16 %v64
  %v305 = vunpack.c.l.b16 %v65
  %v306 = vunpack.c.h.b16 %v65
  %v307 = vunpack.c.l.b16 %v66
  %v308 = vunpack.c.h.b16 %v66
  %v309 = vunpack.c.l.b16 %v67
  %v310 = vunpack.c.h.b16 %v67
  %v311 = vunpack.c.l.b16 %v68
  %v312 = vunpack.c.h.b16 %v68
  %v313 = vunpack.c.l.b16 %v69
  %v314 = vunpack.c.h.b16 %v69
  %v315 = vunpack.c.l.b16 %v70
  %v316 = vunpack.c.h.b16 %v70
  %v317 = vunpack.c.l.b16 %v71
  %v318 = vunpack.c.h.b16 %v71
  %v319 = vunpack.c.l.b16 %v72
  %v320 = vunpack.c.h.b16 %v72
  %v321 = vunpack.c.l.b16 %v73
  %v322 = vunpack.c.h.b16 %v73
  %v323 = vunpack.c.l.b16 %v74
  %v324 = vunpack.c.h.b16 %v74
  %v325 = vunpack.c.l.b16 %v75
  %v326 = vunpack.c.h.b16 %v75
  %v327 = vunpack.c.l.b16 %v76
  %v328 = vunpack.c.h.b16 %v76
  %v329 = vunpack.c.l.b16 %v77
  %v330 = vunpack.c.h.b16 %v77
  %v331 = vunpack.c.l.b16 %v78
  %v332 = vunpack.c.h.b16 %v78
  %v333 = vunpack.c.l.b16 %v79
  %v334 = vunpack.c.h.b16 %v79
  %v335 = vunpack.c.l.b16 %v80
  %v336 = vunpack.c.h.b16 %v80
  %v337 = vunpack.c.l.b16 %v81
  %v338 = vunpack.c.h.b16 %v81
  %v339 = vunpack.c.l.b16 %v82
  %v340 = vunpack.c.h.b16 %v82
  %v341 = vunpack.c.l.b16 %v83
  %v342 = vunpack.c.h.b16 %v83
  %v343 = vunpack.c.l.b16 %v84
  %v344 = vunpack.c.h.b16 %v84
  %v345 = vunpack.c.l.b16 %v85
  %v346 = vunpack.c.h.b16 %v85
  %v347 = vunpack.c.l.b16 %v86
  %v348 = vunpack.c.h.b16 %v86
  %v349 = vunpack.c.l.b16 %v87
  %v350 = vunpack.c.h.b16 %v87
  %v351 = vunpack.c.l.b16 %v88
  %v352 = vunpack.c.h.b16 %v88
  %v353 = vunpack.c.l.b16 %v89
  %v354 = vunpack.c.h.b16 %v89
  %v355 = vunpack.c.l.b16 %v90
  %v356 = vunpack.c.h.b16 %v90
  %v357 = vunpack.c.l.b16 %v91
  %v358 = vunpack.c.h.b16 %v91
  %v359 = vunpack.c.l.b16 %v92
  %v360 = vunpack.c.h.b16 %v92
  %v361 = vunpack.c.l.b16 %v93
  %v362 = vunpack.c.h.b16 %v93
  %v363 = vunpack.c.l.b16 %v94
  %v364 = vunpack.c.h.b16 %v94
  %v365 = vunpack.c.l.b16 %v95
  %v366 = vunpack.c.h.b16 %v95
  %v367 = vunpack.c.l.b16 %v96
  %v368 = vunpack.c.h.b16 %v96
  %v369 = vpack.c.b16 %v219, %v209
  %v370 = vpack.c.b16 %v220, %v210
  %v371 = vpack.c.b16 %v221, %v211
  %v372 = vpack.c.b16 %v222, %v212
  %v373 = vpack.c.b16 %v223, %v213
  %v374 = vpack.c.b16 %v224, %v214
  %v375 = vpack.c.b16 %v225, %v215
  %v376 = vpack.c.b16 %v226, %v216
  %v377 = vpack.c.b16 %v227, %v217
  %v378 = vpack.c.b16 %v228, %v218
  %v379 = vpack.c.b16 %v239, %v229
  %v380 = vpack.c.b16 %v240, %v230
  %v381 = vpack.c.b16 %v241, %v231
  %v382 = vpack.c.b16 %v242, %v232
  %v383 = vpack.c.b16 %v243, %v233
  %v384 = vpack.c.b16 %v244, %v234
  %v385 = vpack.c.b16 %v245, %v235
  %v386 = vpack.c.b16 %v246, %v236
  %v387 = vpack.c.b16 %v247, %v237
  %v388 = vpack.c.b16 %v248, %v238
  %v389 = vpack.c.b16 %v259, %v249
  %v390 = vpack.c.b16 %v260, %v250
  %v391 = vpack.c.b16 %v261, %v251
  %v392 = vpack.c.b16 %v262, %v252
  %v393 = vpack.c.b16 %v263, %v253
  %v394 = vpack.c.b16 %v264, %v254
  %v395 = vpack.c.b16 %v265, %v255
  %v396 = vpack.c.b16 %v266, %v256
  %v397 = vpack.c.b16 %v267, %v257
  %v398 = vpack.c.b16 %v268, %v258
  %v399 = vpack.c.b16 %v279, %v269
  %v400 = vpack.c.b16 %v280, %v270
  %v401 = vpack.c.b16 %v281, %v271
  %v402 = vpack.c.b16 %v282, %v272
  %v403 = vpack.c.b16 %v283, %v273
  %v404 = vpack.c.b16 %v284, %v274
  %v405 = vpack.c.b16 %v285, %v275
  %v406 = vpack.c.b16 %v286, %v276
  %v407 = vpack.c.b16 %v287, %v277
  %v408 = vpack.c.b16 %v288, %v278
  %v409 = vpack.c.b16 %v299, %v289
  %v410 = vpack.c.b16 %v300, %v290
  %v411 = vpack.c.b16 %v301, %v291
  %v412 = vpack.c.b16 %v302, %v292
  %v413 = vpack.c.b16 %v303, %v293
  %v414 = vpack.c.b16 %v304, %v294
  %v415 = vpack.c.b16 %v305, %v295
  %v416 = vpack.c.b16 %v306, %v296
  %v417 = vpack.c.b16 %v307, %v297
  %v418 = vpack.c.b16 %v308, %v298
  %v419 = vpack.c.b16 %v319, %v309
  %v420 = vpack.c.b16 %v320, %v310
  %v421 = vpack.c.b16 %v321, %v311
  %v422 = vpack.c.b16 %v322, %v312
  %v423 = vpack.c.b16 %v323, %v313
  %v424 = vpack.c.b16 %v324, %v314
  %v425 = vpack.c.b16 %v325, %v315
  %v426 = vpack.c.b16 %v326, %v316
  %v427 = vpack.c.b16 %v327, %v317
  %v428 = vpack.c.b16 %v328, %v318
  %v429 = vpack.c.b16 %v339, %v329
  %v430 = vpack.c.b16 %v340, %v330
  %v431 = vpack.c.b16 %v341, %v331
  %v432 = vpack.c.b16 %v342, %v332
  %v433 = vpack.c.b16 %v343, %v333
  %v434 = vpack.c.b16 %v344, %v334
  %v435 = vpack.c.b16 %v345, %v335
  %v436 = vpack.c.b16 %v346, %v336
  %v437 = vpack.c.b16 %v347, %v337
  %v438 = vpack.c.b16 %v348, %v338
  %v439 = vpack.c.b16 %v359, %v349
  %v440 = vpack.c.b16 %v360, %v350
  %v441 = vpack.c.b16 %v361, %v351
  %v442 = vpack.c.b16 %v362, %v352
  %v443 = vpack.c.b16 %v363, %v353
  %v444 = vpack.c.b16 %v364, %v354
  %v445 = vpack.c.b16 %v365, %v355
  %v446 = vpack.c.b16 %v366, %v356
  %v447 = vpack.c.b16 %v367, %v357
  %v448 = vpack.c.b16 %v368, %v358
  %529 = vmatpush.bf16.msra.mxu0 %v439
  %530 = vmatpush.bf16.msra.mxu0 %v429
  %531 = vmatpush.bf16.msra.mxu0 %v419
  %532 = vmatpush.bf16.msra.mxu0 %v409
  %533 = vmatpush.bf16.msra.mxu0 %v399
  %534 = vmatpush.bf16.msra.mxu0 %v389
  %535 = vmatpush.bf16.msra.mxu0 %v379
  %536 = vmatpush.bf16.msra.mxu0 %v369
  %537 = vmatmul.bf16.gmra.mxu0 %v121
  %v538 = vpop.f32.mrf.mxu0
  %v539 = vadd.f32 0.0, %v538
  %v540 = vpop.f32.mrf.mxu0
  %v541 = vadd.f32 0.0, %v540
  %542 = vmatmul.bf16.gmra.mxu0 %v122
  %v543 = vpop.f32.mrf.mxu0
  %v544 = vadd.f32 0.0, %v543
  %v545 = vpop.f32.mrf.mxu0
  %v546 = vadd.f32 0.0, %v545
  %547 = vmatmul.bf16.gmra.mxu0 %v123
  %v548 = vpop.f32.mrf.mxu0
  %v549 = vadd.f32 0.0, %v548
  %v550 = vpop.f32.mrf.mxu0
  %v551 = vadd.f32 0.0, %v550
  %552 = vmatmul.bf16.gmra.mxu0 %v124
  %v553 = vpop.f32.mrf.mxu0
  %v554 = vadd.f32 0.0, %v553
  %v555 = vpop.f32.mrf.mxu0
  %v556 = vadd.f32 0.0, %v555
  %557 = vdwg.mxu0
  %558 = vmatpush.bf16.msra.mxu0 %v440
  %559 = vmatpush.bf16.msra.mxu0 %v430
  %560 = vmatpush.bf16.msra.mxu0 %v420
  %561 = vmatpush.bf16.msra.mxu0 %v410
  %562 = vmatpush.bf16.msra.mxu0 %v400
  %563 = vmatpush.bf16.msra.mxu0 %v390
  %564 = vmatpush.bf16.msra.mxu0 %v380
  %565 = vmatpush.bf16.msra.mxu0 %v370
  %566 = vmatmul.bf16.gmra.mxu0 %v121
  %v567 = vpop.f32.mrf.mxu0
  %v568 = vadd.f32 0.0, %v567
  %v569 = vpop.f32.mrf.mxu0
  %v570 = vadd.f32 0.0, %v569
  %571 = vmatmul.bf16.gmra.mxu0 %v122
  %v572 = vpop.f32.mrf.mxu0
  %v573 = vadd.f32 0.0, %v572
  %v574 = vpop.f32.mrf.mxu0
  %v575 = vadd.f32 0.0, %v574
  %576 = vmatmul.bf16.gmra.mxu0 %v123
  %v577 = vpop.f32.mrf.mxu0
  %v578 = vadd.f32 0.0, %v577
  %v579 = vpop.f32.mrf.mxu0
  %v580 = vadd.f32 0.0, %v579
  %581 = vmatmul.bf16.gmra.mxu0 %v124
  %v582 = vpop.f32.mrf.mxu0
  %v583 = vadd.f32 0.0, %v582
  %v584 = vpop.f32.mrf.mxu0
  %v585 = vadd.f32 0.0, %v584
  %586 = vdwg.mxu0
  %587 = vmatpush.bf16.msra.mxu0 %v441
  %588 = vmatpush.bf16.msra.mxu0 %v431
  %589 = vmatpush.bf16.msra.mxu0 %v421
  %590 = vmatpush.bf16.msra.mxu0 %v411
  %591 = vmatpush.bf16.msra.mxu0 %v401
  %592 = vmatpush.bf16.msra.mxu0 %v391
  %593 = vmatpush.bf16.msra.mxu0 %v381
  %594 = vmatpush.bf16.msra.mxu0 %v371
  %595 = vmatmul.bf16.gmra.mxu0 %v121
  %v596 = vpop.f32.mrf.mxu0
  %v597 = vadd.f32 0.0, %v596
  %v598 = vpop.f32.mrf.mxu0
  %v599 = vadd.f32 0.0, %v598
  %600 = vmatmul.bf16.gmra.mxu0 %v122
  %v601 = vpop.f32.mrf.mxu0
  %v602 = vadd.f32 0.0, %v601
  %v603 = vpop.f32.mrf.mxu0
  %v604 = vadd.f32 0.0, %v603
  %605 = vmatmul.bf16.gmra.mxu0 %v123
  %v606 = vpop.f32.mrf.mxu0
  %v607 = vadd.f32 0.0, %v606
  %v608 = vpop.f32.mrf.mxu0
  %v609 = vadd.f32 0.0, %v608
  %610 = vmatmul.bf16.gmra.mxu0 %v124
  %v611 = vpop.f32.mrf.mxu0
  %v612 = vadd.f32 0.0, %v611
  %v613 = vpop.f32.mrf.mxu0
  %v614 = vadd.f32 0.0, %v613
  %615 = vdwg.mxu0
  %616 = vmatpush.bf16.msra.mxu0 %v442
  %617 = vmatpush.bf16.msra.mxu0 %v432
  %618 = vmatpush.bf16.msra.mxu0 %v422
  %619 = vmatpush.bf16.msra.mxu0 %v412
  %620 = vmatpush.bf16.msra.mxu0 %v402
  %621 = vmatpush.bf16.msra.mxu0 %v392
  %622 = vmatpush.bf16.msra.mxu0 %v382
  %623 = vmatpush.bf16.msra.mxu0 %v372
  %624 = vmatmul.bf16.gmra.mxu0 %v121
  %v625 = vpop.f32.mrf.mxu0
  %v626 = vadd.f32 0.0, %v625
  %v627 = vpop.f32.mrf.mxu0
  %v628 = vadd.f32 0.0, %v627
  %629 = vmatmul.bf16.gmra.mxu0 %v122
  %v630 = vpop.f32.mrf.mxu0
  %v631 = vadd.f32 0.0, %v630
  %v632 = vpop.f32.mrf.mxu0
  %v633 = vadd.f32 0.0, %v632
  %634 = vmatmul.bf16.gmra.mxu0 %v123
  %v635 = vpop.f32.mrf.mxu0
  %v636 = vadd.f32 0.0, %v635
  %v637 = vpop.f32.mrf.mxu0
  %v638 = vadd.f32 0.0, %v637
  %639 = vmatmul.bf16.gmra.mxu0 %v124
  %v640 = vpop.f32.mrf.mxu0
  %v641 = vadd.f32 0.0, %v640
  %v642 = vpop.f32.mrf.mxu0
  %v643 = vadd.f32 0.0, %v642
  %644 = vdwg.mxu0
  %645 = vmatpush.bf16.msra.mxu0 %v443
  %646 = vmatpush.bf16.msra.mxu0 %v433
  %647 = vmatpush.bf16.msra.mxu0 %v423
  %648 = vmatpush.bf16.msra.mxu0 %v413
  %649 = vmatpush.bf16.msra.mxu0 %v403
  %650 = vmatpush.bf16.msra.mxu0 %v393
  %651 = vmatpush.bf16.msra.mxu0 %v383
  %652 = vmatpush.bf16.msra.mxu0 %v373
  %653 = vmatmul.bf16.gmra.mxu0 %v121
  %v654 = vpop.f32.mrf.mxu0
  %v655 = vadd.f32 0.0, %v654
  %v656 = vpop.f32.mrf.mxu0
  %v657 = vadd.f32 0.0, %v656
  %658 = vmatmul.bf16.gmra.mxu0 %v122
  %v659 = vpop.f32.mrf.mxu0
  %v660 = vadd.f32 0.0, %v659
  %v661 = vpop.f32.mrf.mxu0
  %v662 = vadd.f32 0.0, %v661
  %663 = vmatmul.bf16.gmra.mxu0 %v123
  %v664 = vpop.f32.mrf.mxu0
  %v665 = vadd.f32 0.0, %v664
  %v666 = vpop.f32.mrf.mxu0
  %v667 = vadd.f32 0.0, %v666
  %668 = vmatmul.bf16.gmra.mxu0 %v124
  %v669 = vpop.f32.mrf.mxu0
  %v670 = vadd.f32 0.0, %v669
  %v671 = vpop.f32.mrf.mxu0
  %v672 = vadd.f32 0.0, %v671
  %673 = vdwg.mxu0
  %674 = vmatpush.bf16.msra.mxu0 %v444
  %675 = vmatpush.bf16.msra.mxu0 %v434
  %676 = vmatpush.bf16.msra.mxu0 %v424
  %677 = vmatpush.bf16.msra.mxu0 %v414
  %678 = vmatpush.bf16.msra.mxu0 %v404
  %679 = vmatpush.bf16.msra.mxu0 %v394
  %680 = vmatpush.bf16.msra.mxu0 %v384
  %681 = vmatpush.bf16.msra.mxu0 %v374
  %682 = vmatmul.bf16.gmra.mxu0 %v121
  %v683 = vpop.f32.mrf.mxu0
  %v684 = vadd.f32 0.0, %v683
  %v685 = vpop.f32.mrf.mxu0
  %v686 = vadd.f32 0.0, %v685
  %687 = vmatmul.bf16.gmra.mxu0 %v122
  %v688 = vpop.f32.mrf.mxu0
  %v689 = vadd.f32 0.0, %v688
  %v690 = vpop.f32.mrf.mxu0
  %v691 = vadd.f32 0.0, %v690
  %692 = vmatmul.bf16.gmra.mxu0 %v123
  %v693 = vpop.f32.mrf.mxu0
  %v694 = vadd.f32 0.0, %v693
  %v695 = vpop.f32.mrf.mxu0
  %v696 = vadd.f32 0.0, %v695
  %697 = vmatmul.bf16.gmra.mxu0 %v124
  %v698 = vpop.f32.mrf.mxu0
  %v699 = vadd.f32 0.0, %v698
  %v700 = vpop.f32.mrf.mxu0
  %v701 = vadd.f32 0.0, %v700
  %702 = vdwg.mxu0
  %703 = vmatpush.bf16.msra.mxu0 %v445
  %704 = vmatpush.bf16.msra.mxu0 %v435
  %705 = vmatpush.bf16.msra.mxu0 %v425
  %706 = vmatpush.bf16.msra.mxu0 %v415
  %707 = vmatpush.bf16.msra.mxu0 %v405
  %708 = vmatpush.bf16.msra.mxu0 %v395
  %709 = vmatpush.bf16.msra.mxu0 %v385
  %710 = vmatpush.bf16.msra.mxu0 %v375
  %711 = vmatmul.bf16.gmra.mxu0 %v121
  %v712 = vpop.f32.mrf.mxu0
  %v713 = vadd.f32 0.0, %v712
  %v714 = vpop.f32.mrf.mxu0
  %v715 = vadd.f32 0.0, %v714
  %716 = vmatmul.bf16.gmra.mxu0 %v122
  %v717 = vpop.f32.mrf.mxu0
  %v718 = vadd.f32 0.0, %v717
  %v719 = vpop.f32.mrf.mxu0
  %v720 = vadd.f32 0.0, %v719
  %721 = vmatmul.bf16.gmra.mxu0 %v123
  %v722 = vpop.f32.mrf.mxu0
  %v723 = vadd.f32 0.0, %v722
  %v724 = vpop.f32.mrf.mxu0
  %v725 = vadd.f32 0.0, %v724
  %726 = vmatmul.bf16.gmra.mxu0 %v124
  %v727 = vpop.f32.mrf.mxu0
  %v728 = vadd.f32 0.0, %v727
  %v729 = vpop.f32.mrf.mxu0
  %v730 = vadd.f32 0.0, %v729
  %731 = vdwg.mxu0
  %732 = vmatpush.bf16.msra.mxu0 %v446
  %733 = vmatpush.bf16.msra.mxu0 %v436
  %734 = vmatpush.bf16.msra.mxu0 %v426
  %735 = vmatpush.bf16.msra.mxu0 %v416
  %736 = vmatpush.bf16.msra.mxu0 %v406
  %737 = vmatpush.bf16.msra.mxu0 %v396
  %738 = vmatpush.bf16.msra.mxu0 %v386
  %739 = vmatpush.bf16.msra.mxu0 %v376
  %740 = vmatmul.bf16.gmra.mxu0 %v121
  %v741 = vpop.f32.mrf.mxu0
  %v742 = vadd.f32 0.0, %v741
  %v743 = vpop.f32.mrf.mxu0
  %v744 = vadd.f32 0.0, %v743
  %745 = vmatmul.bf16.gmra.mxu0 %v122
  %v746 = vpop.f32.mrf.mxu0
  %v747 = vadd.f32 0.0, %v746
  %v748 = vpop.f32.mrf.mxu0
  %v749 = vadd.f32 0.0, %v748
  %750 = vmatmul.bf16.gmra.mxu0 %v123
  %v751 = vpop.f32.mrf.mxu0
  %v752 = vadd.f32 0.0, %v751
  %v753 = vpop.f32.mrf.mxu0
  %v754 = vadd.f32 0.0, %v753
  %755 = vmatmul.bf16.gmra.mxu0 %v124
  %v756 = vpop.f32.mrf.mxu0
  %v757 = vadd.f32 0.0, %v756
  %v758 = vpop.f32.mrf.mxu0
  %v759 = vadd.f32 0.0, %v758
  %760 = vdwg.mxu0
  %761 = vmatpush.bf16.msra.mxu0 %v447
  %762 = vmatpush.bf16.msra.mxu0 %v437
  %763 = vmatpush.bf16.msra.mxu0 %v427
  %764 = vmatpush.bf16.msra.mxu0 %v417
  %765 = vmatpush.bf16.msra.mxu0 %v407
  %766 = vmatpush.bf16.msra.mxu0 %v397
  %767 = vmatpush.bf16.msra.mxu0 %v387
  %768 = vmatpush.bf16.msra.mxu0 %v377
  %769 = vmatmul.bf16.gmra.mxu0 %v121
  %v770 = vpop.f32.mrf.mxu0
  %v771 = vadd.f32 0.0, %v770
  %v772 = vpop.f32.mrf.mxu0
  %v773 = vadd.f32 0.0, %v772
  %774 = vmatmul.bf16.gmra.mxu0 %v122
  %v775 = vpop.f32.mrf.mxu0
  %v776 = vadd.f32 0.0, %v775
  %v777 = vpop.f32.mrf.mxu0
  %v778 = vadd.f32 0.0, %v777
  %779 = vmatmul.bf16.gmra.mxu0 %v123
  %v780 = vpop.f32.mrf.mxu0
  %v781 = vadd.f32 0.0, %v780
  %v782 = vpop.f32.mrf.mxu0
  %v783 = vadd.f32 0.0, %v782
  %784 = vmatmul.bf16.gmra.mxu0 %v124
  %v785 = vpop.f32.mrf.mxu0
  %v786 = vadd.f32 0.0, %v785
  %v787 = vpop.f32.mrf.mxu0
  %v788 = vadd.f32 0.0, %v787
  %789 = vdwg.mxu0
  %790 = vmatpush.bf16.msra.mxu0 %v448
  %791 = vmatpush.bf16.msra.mxu0 %v438
  %792 = vmatpush.bf16.msra.mxu0 %v428
  %793 = vmatpush.bf16.msra.mxu0 %v418
  %794 = vmatpush.bf16.msra.mxu0 %v408
  %795 = vmatpush.bf16.msra.mxu0 %v398
  %796 = vmatpush.bf16.msra.mxu0 %v388
  %797 = vmatpush.bf16.msra.mxu0 %v378
  %798 = vmatmul.bf16.gmra.mxu0 %v121
  %v799 = vpop.f32.mrf.mxu0
  %v800 = vadd.f32 0.0, %v799
  %v801 = vpop.f32.mrf.mxu0
  %v802 = vadd.f32 0.0, %v801
  %803 = vmatmul.bf16.gmra.mxu0 %v122
  %v804 = vpop.f32.mrf.mxu0
  %v805 = vadd.f32 0.0, %v804
  %v806 = vpop.f32.mrf.mxu0
  %v807 = vadd.f32 0.0, %v806
  %808 = vmatmul.bf16.gmra.mxu0 %v123
  %v809 = vpop.f32.mrf.mxu0
  %v810 = vadd.f32 0.0, %v809
  %v811 = vpop.f32.mrf.mxu0
  %v812 = vadd.f32 0.0, %v811
  %813 = vmatmul.bf16.gmra.mxu0 %v124
  %v814 = vpop.f32.mrf.mxu0
  %v815 = vadd.f32 0.0, %v814
  %v816 = vpop.f32.mrf.mxu0
  %v817 = vadd.f32 0.0, %v816
  %818 = vdwg.mxu0
  %819 = vst [vmem:[#allocation2] sm:$0xff] %v539
  %820 = vst [vmem:[#allocation2 + $0x8] sm:$0xff] %v568
  %821 = vst [vmem:[#allocation2 + $0x10] sm:$0xff] %v597
  %822 = vst [vmem:[#allocation2 + $0x18] sm:$0xff] %v626
  %823 = vst [vmem:[#allocation2 + $0x20] sm:$0xff] %v655
  %824 = vst [vmem:[#allocation2 + $0x28] sm:$0xff] %v684
  %825 = vst [vmem:[#allocation2 + $0x30] sm:$0xff] %v713
  %826 = vst [vmem:[#allocation2 + $0x38] sm:$0xff] %v742
  %827 = vst [vmem:[#allocation2 + $0x40] sm:$0xff] %v771
  %828 = vst [vmem:[#allocation2 + $0x48] sm:$0xff] %v800
  %829 = vst [vmem:[#allocation2 + $0x50] sm:$0xff] %v541
  %830 = vst [vmem:[#allocation2 + $0x58] sm:$0xff] %v570
  %831 = vst [vmem:[#allocation2 + $0x60] sm:$0xff] %v599
  %832 = vst [vmem:[#allocation2 + $0x68] sm:$0xff] %v628
  %833 = vst [vmem:[#allocation2 + $0x70] sm:$0xff] %v657
  %834 = vst [vmem:[#allocation2 + $0x78] sm:$0xff] %v686
  %835 = vst [vmem:[#allocation2 + $0x80] sm:$0xff] %v715
  %836 = vst [vmem:[#allocation2 + $0x88] sm:$0xff] %v744
  %837 = vst [vmem:[#allocation2 + $0x90] sm:$0xff] %v773
  %838 = vst [vmem:[#allocation2 + $0x98] sm:$0xff] %v802
  %839 = vst [vmem:[#allocation2 + $0xa0] sm:$0xff] %v544
  %840 = vst [vmem:[#allocation2 + $0xa8] sm:$0xff] %v573
  %841 = vst [vmem:[#allocation2 + $0xb0] sm:$0xff] %v602
  %842 = vst [vmem:[#allocation2 + $0xb8] sm:$0xff] %v631
  %843 = vst [vmem:[#allocation2 + $0xc0] sm:$0xff] %v660
  %844 = vst [vmem:[#allocation2 + $0xc8] sm:$0xff] %v689
  %845 = vst [vmem:[#allocation2 + $0xd0] sm:$0xff] %v718
  %846 = vst [vmem:[#allocation2 + $0xd8] sm:$0xff] %v747
  %847 = vst [vmem:[#allocation2 + $0xe0] sm:$0xff] %v776
  %848 = vst [vmem:[#allocation2 + $0xe8] sm:$0xff] %v805
  %849 = vst [vmem:[#allocation2 + $0xf0] sm:$0xff] %v546
  %850 = vst [vmem:[#allocation2 + $0xf8] sm:$0xff] %v575
  %851 = vst [vmem:[#allocation2 + $0x100] sm:$0xff] %v604
  %852 = vst [vmem:[#allocation2 + $0x108] sm:$0xff] %v633
  %853 = vst [vmem:[#allocation2 + $0x110] sm:$0xff] %v662
  %854 = vst [vmem:[#allocation2 + $0x118] sm:$0xff] %v691
  %855 = vst [vmem:[#allocation2 + $0x120] sm:$0xff] %v720
  %856 = vst [vmem:[#allocation2 + $0x128] sm:$0xff] %v749
  %857 = vst [vmem:[#allocation2 + $0x130] sm:$0xff] %v778
  %858 = vst [vmem:[#allocation2 + $0x138] sm:$0xff] %v807
  %859 = vst [vmem:[#allocation2 + $0x140] sm:$0xff] %v549
  %860 = vst [vmem:[#allocation2 + $0x148] sm:$0xff] %v578
  %861 = vst [vmem:[#allocation2 + $0x150] sm:$0xff] %v607
  %862 = vst [vmem:[#allocation2 + $0x158] sm:$0xff] %v636
  %863 = vst [vmem:[#allocation2 + $0x160] sm:$0xff] %v665
  %864 = vst [vmem:[#allocation2 + $0x168] sm:$0xff] %v694
  %865 = vst [vmem:[#allocation2 + $0x170] sm:$0xff] %v723
  %866 = vst [vmem:[#allocation2 + $0x178] sm:$0xff] %v752
  %867 = vst [vmem:[#allocation2 + $0x180] sm:$0xff] %v781
  %868 = vst [vmem:[#allocation2 + $0x188] sm:$0xff] %v810
  %869 = vst [vmem:[#allocation2 + $0x190] sm:$0xff] %v551
  %870 = vst [vmem:[#allocation2 + $0x198] sm:$0xff] %v580
  %871 = vst [vmem:[#allocation2 + $0x1a0] sm:$0xff] %v609
  %872 = vst [vmem:[#allocation2 + $0x1a8] sm:$0xff] %v638
  %873 = vst [vmem:[#allocation2 + $0x1b0] sm:$0xff] %v667
  %874 = vst [vmem:[#allocation2 + $0x1b8] sm:$0xff] %v696
  %875 = vst [vmem:[#allocation2 + $0x1c0] sm:$0xff] %v725
  %876 = vst [vmem:[#allocation2 + $0x1c8] sm:$0xff] %v754
  %877 = vst [vmem:[#allocation2 + $0x1d0] sm:$0xff] %v783
  %878 = vst [vmem:[#allocation2 + $0x1d8] sm:$0xff] %v812
  %879 = vst [vmem:[#allocation2 + $0x1e0] sm:$0xff] %v554
  %880 = vst [vmem:[#allocation2 + $0x1e8] sm:$0xff] %v583
  %881 = vst [vmem:[#allocation2 + $0x1f0] sm:$0xff] %v612
  %882 = vst [vmem:[#allocation2 + $0x1f8] sm:$0xff] %v641
  %883 = vst [vmem:[#allocation2 + $0x200] sm:$0xff] %v670
  %884 = vst [vmem:[#allocation2 + $0x208] sm:$0xff] %v699
  %885 = vst [vmem:[#allocation2 + $0x210] sm:$0xff] %v728
  %886 = vst [vmem:[#allocation2 + $0x218] sm:$0xff] %v757
  %887 = vst [vmem:[#allocation2 + $0x220] sm:$0xff] %v786
  %888 = vst [vmem:[#allocation2 + $0x228] sm:$0xff] %v815
  %889 = vst [vmem:[#allocation2 + $0x230] sm:$0xff] %v556
  %890 = vst [vmem:[#allocation2 + $0x238] sm:$0xff] %v585
  %891 = vst [vmem:[#allocation2 + $0x240] sm:$0xff] %v614
  %892 = vst [vmem:[#allocation2 + $0x248] sm:$0xff] %v643
  %893 = vst [vmem:[#allocation2 + $0x250] sm:$0xff] %v672
  %894 = vst [vmem:[#allocation2 + $0x258] sm:$0xff] %v701
  %895 = vst [vmem:[#allocation2 + $0x260] sm:$0xff] %v730
  %896 = vst [vmem:[#allocation2 + $0x268] sm:$0xff] %v759
  %897 = vst [vmem:[#allocation2 + $0x270] sm:$0xff] %v788
  %898 = vst [vmem:[#allocation2 + $0x278] sm:$0xff] %v817
  %v899 = vld [vmem:[%s1] sm:$0xf]
  %v900 = vld [vmem:[%s1 + $0x4] sm:$0xf]
  %v901 = vld [vmem:[%s1 + $0x8] sm:$0xf]
  %v902 = vld [vmem:[%s1 + $0xc] sm:$0xf]
  %v903 = vld [vmem:[%s1 + $0x10] sm:$0xf]
  %v904 = vld [vmem:[%s1 + $0x14] sm:$0xf]
  %v905 = vld [vmem:[%s1 + $0x18] sm:$0xf]
  %v906 = vld [vmem:[%s1 + $0x1c] sm:$0xf]
  %v915 = vunpack.c.l.b16 %v899
  %v916 = vunpack.c.l.b16 %v900
  %v917 = vunpack.c.l.b16 %v901
  %v918 = vunpack.c.l.b16 %v902
  %v919 = vunpack.c.l.b16 %v903
  %v920 = vunpack.c.l.b16 %v904
  %v921 = vunpack.c.l.b16 %v905
  %v922 = vunpack.c.l.b16 %v906
  %v923 = vpack.c.b16 %v916, %v915
  %v924 = vpack.c.b16 %v918, %v917
  %v925 = vpack.c.b16 %v920, %v919
  %v926 = vpack.c.b16 %v922, %v921
  %931 = vmatpush.bf16.msra.mxu0 %v439
  %932 = vmatpush.bf16.msra.mxu0 %v429
  %933 = vmatpush.bf16.msra.mxu0 %v419
  %934 = vmatpush.bf16.msra.mxu0 %v409
  %935 = vmatpush.bf16.msra.mxu0 %v399
  %936 = vmatpush.bf16.msra.mxu0 %v389
  %937 = vmatpush.bf16.msra.mxu0 %v379
  %938 = vmatpush.bf16.msra.mxu0 %v369
  %939 = vmatmul.bf16.gmra.mxu0 %v923
  %v940 = vpop.f32.mrf.mxu0
  %v941 = vadd.f32 0.0, %v940
  %v942 = vpop.f32.mrf.mxu0
  %v943 = vadd.f32 0.0, %v942
  %944 = vmatmul.bf16.gmra.mxu0 %v924
  %v945 = vpop.f32.mrf.mxu0
  %v946 = vadd.f32 0.0, %v945
  %v947 = vpop.f32.mrf.mxu0
  %v948 = vadd.f32 0.0, %v947
  %949 = vmatmul.bf16.gmra.mxu0 %v925
  %v950 = vpop.f32.mrf.mxu0
  %v951 = vadd.f32 0.0, %v950
  %v952 = vpop.f32.mrf.mxu0
  %v953 = vadd.f32 0.0, %v952
  %954 = vmatmul.bf16.gmra.mxu0 %v926
  %v955 = vpop.f32.mrf.mxu0
  %v956 = vadd.f32 0.0, %v955
  %v957 = vpop.f32.mrf.mxu0
  %v958 = vadd.f32 0.0, %v957
  %959 = vdwg.mxu0
  %960 = vmatpush.bf16.msra.mxu0 %v440
  %961 = vmatpush.bf16.msra.mxu0 %v430
  %962 = vmatpush.bf16.msra.mxu0 %v420
  %963 = vmatpush.bf16.msra.mxu0 %v410
  %964 = vmatpush.bf16.msra.mxu0 %v400
  %965 = vmatpush.bf16.msra.mxu0 %v390
  %966 = vmatpush.bf16.msra.mxu0 %v380
  %967 = vmatpush.bf16.msra.mxu0 %v370
  %968 = vmatmul.bf16.gmra.mxu0 %v923
  %v969 = vpop.f32.mrf.mxu0
  %v970 = vadd.f32 0.0, %v969
  %v971 = vpop.f32.mrf.mxu0
  %v972 = vadd.f32 0.0, %v971
  %973 = vmatmul.bf16.gmra.mxu0 %v924
  %v974 = vpop.f32.mrf.mxu0
  %v975 = vadd.f32 0.0, %v974
  %v976 = vpop.f32.mrf.mxu0
  %v977 = vadd.f32 0.0, %v976
  %978 = vmatmul.bf16.gmra.mxu0 %v925
  %v979 = vpop.f32.mrf.mxu0
  %v980 = vadd.f32 0.0, %v979
  %v981 = vpop.f32.mrf.mxu0
  %v982 = vadd.f32 0.0, %v981
  %983 = vmatmul.bf16.gmra.mxu0 %v926
  %v984 = vpop.f32.mrf.mxu0
  %v985 = vadd.f32 0.0, %v984
  %v986 = vpop.f32.mrf.mxu0
  %v987 = vadd.f32 0.0, %v986
  %988 = vdwg.mxu0
  %989 = vmatpush.bf16.msra.mxu0 %v441
  %990 = vmatpush.bf16.msra.mxu0 %v431
  %991 = vmatpush.bf16.msra.mxu0 %v421
  %992 = vmatpush.bf16.msra.mxu0 %v411
  %993 = vmatpush.bf16.msra.mxu0 %v401
  %994 = vmatpush.bf16.msra.mxu0 %v391
  %995 = vmatpush.bf16.msra.mxu0 %v381
  %996 = vmatpush.bf16.msra.mxu0 %v371
  %997 = vmatmul.bf16.gmra.mxu0 %v923
  %v998 = vpop.f32.mrf.mxu0
  %v999 = vadd.f32 0.0, %v998
  %v1000 = vpop.f32.mrf.mxu0
  %v1001 = vadd.f32 0.0, %v1000
  %1002 = vmatmul.bf16.gmra.mxu0 %v924
  %v1003 = vpop.f32.mrf.mxu0
  %v1004 = vadd.f32 0.0, %v1003
  %v1005 = vpop.f32.mrf.mxu0
  %v1006 = vadd.f32 0.0, %v1005
  %1007 = vmatmul.bf16.gmra.mxu0 %v925
  %v1008 = vpop.f32.mrf.mxu0
  %v1009 = vadd.f32 0.0, %v1008
  %v1010 = vpop.f32.mrf.mxu0
  %v1011 = vadd.f32 0.0, %v1010
  %1012 = vmatmul.bf16.gmra.mxu0 %v926
  %v1013 = vpop.f32.mrf.mxu0
  %v1014 = vadd.f32 0.0, %v1013
  %v1015 = vpop.f32.mrf.mxu0
  %v1016 = vadd.f32 0.0, %v1015
  %1017 = vdwg.mxu0
  %1018 = vmatpush.bf16.msra.mxu0 %v442
  %1019 = vmatpush.bf16.msra.mxu0 %v432
  %1020 = vmatpush.bf16.msra.mxu0 %v422
  %1021 = vmatpush.bf16.msra.mxu0 %v412
  %1022 = vmatpush.bf16.msra.mxu0 %v402
  %1023 = vmatpush.bf16.msra.mxu0 %v392
  %1024 = vmatpush.bf16.msra.mxu0 %v382
  %1025 = vmatpush.bf16.msra.mxu0 %v372
  %1026 = vmatmul.bf16.gmra.mxu0 %v923
  %v1027 = vpop.f32.mrf.mxu0
  %v1028 = vadd.f32 0.0, %v1027
  %v1029 = vpop.f32.mrf.mxu0
  %v1030 = vadd.f32 0.0, %v1029
  %1031 = vmatmul.bf16.gmra.mxu0 %v924
  %v1032 = vpop.f32.mrf.mxu0
  %v1033 = vadd.f32 0.0, %v1032
  %v1034 = vpop.f32.mrf.mxu0
  %v1035 = vadd.f32 0.0, %v1034
  %1036 = vmatmul.bf16.gmra.mxu0 %v925
  %v1037 = vpop.f32.mrf.mxu0
  %v1038 = vadd.f32 0.0, %v1037
  %v1039 = vpop.f32.mrf.mxu0
  %v1040 = vadd.f32 0.0, %v1039
  %1041 = vmatmul.bf16.gmra.mxu0 %v926
  %v1042 = vpop.f32.mrf.mxu0
  %v1043 = vadd.f32 0.0, %v1042
  %v1044 = vpop.f32.mrf.mxu0
  %v1045 = vadd.f32 0.0, %v1044
  %1046 = vdwg.mxu0
  %1047 = vmatpush.bf16.msra.mxu0 %v443
  %1048 = vmatpush.bf16.msra.mxu0 %v433
  %1049 = vmatpush.bf16.msra.mxu0 %v423
  %1050 = vmatpush.bf16.msra.mxu0 %v413
  %1051 = vmatpush.bf16.msra.mxu0 %v403
  %1052 = vmatpush.bf16.msra.mxu0 %v393
  %1053 = vmatpush.bf16.msra.mxu0 %v383
  %1054 = vmatpush.bf16.msra.mxu0 %v373
  %1055 = vmatmul.bf16.gmra.mxu0 %v923
  %v1056 = vpop.f32.mrf.mxu0
  %v1057 = vadd.f32 0.0, %v1056
  %v1058 = vpop.f32.mrf.mxu0
  %v1059 = vadd.f32 0.0, %v1058
  %1060 = vmatmul.bf16.gmra.mxu0 %v924
  %v1061 = vpop.f32.mrf.mxu0
  %v1062 = vadd.f32 0.0, %v1061
  %v1063 = vpop.f32.mrf.mxu0
  %v1064 = vadd.f32 0.0, %v1063
  %1065 = vmatmul.bf16.gmra.mxu0 %v925
  %v1066 = vpop.f32.mrf.mxu0
  %v1067 = vadd.f32 0.0, %v1066
  %v1068 = vpop.f32.mrf.mxu0
  %v1069 = vadd.f32 0.0, %v1068
  %1070 = vmatmul.bf16.gmra.mxu0 %v926
  %v1071 = vpop.f32.mrf.mxu0
  %v1072 = vadd.f32 0.0, %v1071
  %v1073 = vpop.f32.mrf.mxu0
  %v1074 = vadd.f32 0.0, %v1073
  %1075 = vdwg.mxu0
  %1076 = vmatpush.bf16.msra.mxu0 %v444
  %1077 = vmatpush.bf16.msra.mxu0 %v434
  %1078 = vmatpush.bf16.msra.mxu0 %v424
  %1079 = vmatpush.bf16.msra.mxu0 %v414
  %1080 = vmatpush.bf16.msra.mxu0 %v404
  %1081 = vmatpush.bf16.msra.mxu0 %v394
  %1082 = vmatpush.bf16.msra.mxu0 %v384
  %1083 = vmatpush.bf16.msra.mxu0 %v374
  %1084 = vmatmul.bf16.gmra.mxu0 %v923
  %v1085 = vpop.f32.mrf.mxu0
  %v1086 = vadd.f32 0.0, %v1085
  %v1087 = vpop.f32.mrf.mxu0
  %v1088 = vadd.f32 0.0, %v1087
  %1089 = vmatmul.bf16.gmra.mxu0 %v924
  %v1090 = vpop.f32.mrf.mxu0
  %v1091 = vadd.f32 0.0, %v1090
  %v1092 = vpop.f32.mrf.mxu0
  %v1093 = vadd.f32 0.0, %v1092
  %1094 = vmatmul.bf16.gmra.mxu0 %v925
  %v1095 = vpop.f32.mrf.mxu0
  %v1096 = vadd.f32 0.0, %v1095
  %v1097 = vpop.f32.mrf.mxu0
  %v1098 = vadd.f32 0.0, %v1097
  %1099 = vmatmul.bf16.gmra.mxu0 %v926
  %v1100 = vpop.f32.mrf.mxu0
  %v1101 = vadd.f32 0.0, %v1100
  %v1102 = vpop.f32.mrf.mxu0
  %v1103 = vadd.f32 0.0, %v1102
  %1104 = vdwg.mxu0
  %1105 = vmatpush.bf16.msra.mxu0 %v445
  %1106 = vmatpush.bf16.msra.mxu0 %v435
  %1107 = vmatpush.bf16.msra.mxu0 %v425
  %1108 = vmatpush.bf16.msra.mxu0 %v415
  %1109 = vmatpush.bf16.msra.mxu0 %v405
  %1110 = vmatpush.bf16.msra.mxu0 %v395
  %1111 = vmatpush.bf16.msra.mxu0 %v385
  %1112 = vmatpush.bf16.msra.mxu0 %v375
  %1113 = vmatmul.bf16.gmra.mxu0 %v923
  %v1114 = vpop.f32.mrf.mxu0
  %v1115 = vadd.f32 0.0, %v1114
  %v1116 = vpop.f32.mrf.mxu0
  %v1117 = vadd.f32 0.0, %v1116
  %1118 = vmatmul.bf16.gmra.mxu0 %v924
  %v1119 = vpop.f32.mrf.mxu0
  %v1120 = vadd.f32 0.0, %v1119
  %v1121 = vpop.f32.mrf.mxu0
  %v1122 = vadd.f32 0.0, %v1121
  %1123 = vmatmul.bf16.gmra.mxu0 %v925
  %v1124 = vpop.f32.mrf.mxu0
  %v1125 = vadd.f32 0.0, %v1124
  %v1126 = vpop.f32.mrf.mxu0
  %v1127 = vadd.f32 0.0, %v1126
  %1128 = vmatmul.bf16.gmra.mxu0 %v926
  %v1129 = vpop.f32.mrf.mxu0
  %v1130 = vadd.f32 0.0, %v1129
  %v1131 = vpop.f32.mrf.mxu0
  %v1132 = vadd.f32 0.0, %v1131
  %1133 = vdwg.mxu0
  %1134 = vmatpush.bf16.msra.mxu0 %v446
  %1135 = vmatpush.bf16.msra.mxu0 %v436
  %1136 = vmatpush.bf16.msra.mxu0 %v426
  %1137 = vmatpush.bf16.msra.mxu0 %v416
  %1138 = vmatpush.bf16.msra.mxu0 %v406
  %1139 = vmatpush.bf16.msra.mxu0 %v396
  %1140 = vmatpush.bf16.msra.mxu0 %v386
  %1141 = vmatpush.bf16.msra.mxu0 %v376
  %1142 = vmatmul.bf16.gmra.mxu0 %v923
  %v1143 = vpop.f32.mrf.mxu0
  %v1144 = vadd.f32 0.0, %v1143
  %v1145 = vpop.f32.mrf.mxu0
  %v1146 = vadd.f32 0.0, %v1145
  %1147 = vmatmul.bf16.gmra.mxu0 %v924
  %v1148 = vpop.f32.mrf.mxu0
  %v1149 = vadd.f32 0.0, %v1148
  %v1150 = vpop.f32.mrf.mxu0
  %v1151 = vadd.f32 0.0, %v1150
  %1152 = vmatmul.bf16.gmra.mxu0 %v925
  %v1153 = vpop.f32.mrf.mxu0
  %v1154 = vadd.f32 0.0, %v1153
  %v1155 = vpop.f32.mrf.mxu0
  %v1156 = vadd.f32 0.0, %v1155
  %1157 = vmatmul.bf16.gmra.mxu0 %v926
  %v1158 = vpop.f32.mrf.mxu0
  %v1159 = vadd.f32 0.0, %v1158
  %v1160 = vpop.f32.mrf.mxu0
  %v1161 = vadd.f32 0.0, %v1160
  %1162 = vdwg.mxu0
  %1163 = vmatpush.bf16.msra.mxu0 %v447
  %1164 = vmatpush.bf16.msra.mxu0 %v437
  %1165 = vmatpush.bf16.msra.mxu0 %v427
  %1166 = vmatpush.bf16.msra.mxu0 %v417
  %1167 = vmatpush.bf16.msra.mxu0 %v407
  %1168 = vmatpush.bf16.msra.mxu0 %v397
  %1169 = vmatpush.bf16.msra.mxu0 %v387
  %1170 = vmatpush.bf16.msra.mxu0 %v377
  %1171 = vmatmul.bf16.gmra.mxu0 %v923
  %v1172 = vpop.f32.mrf.mxu0
  %v1173 = vadd.f32 0.0, %v1172
  %v1174 = vpop.f32.mrf.mxu0
  %v1175 = vadd.f32 0.0, %v1174
  %1176 = vmatmul.bf16.gmra.mxu0 %v924
  %v1177 = vpop.f32.mrf.mxu0
  %v1178 = vadd.f32 0.0, %v1177
  %v1179 = vpop.f32.mrf.mxu0
  %v1180 = vadd.f32 0.0, %v1179
  %1181 = vmatmul.bf16.gmra.mxu0 %v925
  %v1182 = vpop.f32.mrf.mxu0
  %v1183 = vadd.f32 0.0, %v1182
  %v1184 = vpop.f32.mrf.mxu0
  %v1185 = vadd.f32 0.0, %v1184
  %1186 = vmatmul.bf16.gmra.mxu0 %v926
  %v1187 = vpop.f32.mrf.mxu0
  %v1188 = vadd.f32 0.0, %v1187
  %v1189 = vpop.f32.mrf.mxu0
  %v1190 = vadd.f32 0.0, %v1189
  %1191 = vdwg.mxu0
  %1192 = vmatpush.bf16.msra.mxu0 %v448
  %1193 = vmatpush.bf16.msra.mxu0 %v438
  %1194 = vmatpush.bf16.msra.mxu0 %v428
  %1195 = vmatpush.bf16.msra.mxu0 %v418
  %1196 = vmatpush.bf16.msra.mxu0 %v408
  %1197 = vmatpush.bf16.msra.mxu0 %v398
  %1198 = vmatpush.bf16.msra.mxu0 %v388
  %1199 = vmatpush.bf16.msra.mxu0 %v378
  %1200 = vmatmul.bf16.gmra.mxu0 %v923
  %v1201 = vpop.f32.mrf.mxu0
  %v1202 = vadd.f32 0.0, %v1201
  %v1203 = vpop.f32.mrf.mxu0
  %v1204 = vadd.f32 0.0, %v1203
  %1205 = vmatmul.bf16.gmra.mxu0 %v924
  %v1206 = vpop.f32.mrf.mxu0
  %v1207 = vadd.f32 0.0, %v1206
  %v1208 = vpop.f32.mrf.mxu0
  %v1209 = vadd.f32 0.0, %v1208
  %1210 = vmatmul.bf16.gmra.mxu0 %v925
  %v1211 = vpop.f32.mrf.mxu0
  %v1212 = vadd.f32 0.0, %v1211
  %v1213 = vpop.f32.mrf.mxu0
  %v1214 = vadd.f32 0.0, %v1213
  %1215 = vmatmul.bf16.gmra.mxu0 %v926
  %v1216 = vpop.f32.mrf.mxu0
  %v1217 = vadd.f32 0.0, %v1216
  %v1218 = vpop.f32.mrf.mxu0
  %v1219 = vadd.f32 0.0, %v1218
  %1220 = vdwg.mxu0
  %1221 = vst [vmem:[#allocation3] sm:$0xff] %v941
  %1222 = vst [vmem:[#allocation3 + $0x8] sm:$0xff] %v970
  %1223 = vst [vmem:[#allocation3 + $0x10] sm:$0xff] %v999
  %1224 = vst [vmem:[#allocation3 + $0x18] sm:$0xff] %v1028
  %1225 = vst [vmem:[#allocation3 + $0x20] sm:$0xff] %v1057
  %1226 = vst [vmem:[#allocation3 + $0x28] sm:$0xff] %v1086
  %1227 = vst [vmem:[#allocation3 + $0x30] sm:$0xff] %v1115
  %1228 = vst [vmem:[#allocation3 + $0x38] sm:$0xff] %v1144
  %1229 = vst [vmem:[#allocation3 + $0x40] sm:$0xff] %v1173
  %1230 = vst [vmem:[#allocation3 + $0x48] sm:$0xff] %v1202
  %1231 = vst [vmem:[#allocation3 + $0x50] sm:$0xff] %v943
  %1232 = vst [vmem:[#allocation3 + $0x58] sm:$0xff] %v972
  %1233 = vst [vmem:[#allocation3 + $0x60] sm:$0xff] %v1001
  %1234 = vst [vmem:[#allocation3 + $0x68] sm:$0xff] %v1030
  %1235 = vst [vmem:[#allocation3 + $0x70] sm:$0xff] %v1059
  %1236 = vst [vmem:[#allocation3 + $0x78] sm:$0xff] %v1088
  %1237 = vst [vmem:[#allocation3 + $0x80] sm:$0xff] %v1117
  %1238 = vst [vmem:[#allocation3 + $0x88] sm:$0xff] %v1146
  %1239 = vst [vmem:[#allocation3 + $0x90] sm:$0xff] %v1175
  %1240 = vst [vmem:[#allocation3 + $0x98] sm:$0xff] %v1204
  %1241 = vst [vmem:[#allocation3 + $0xa0] sm:$0xff] %v946
  %1242 = vst [vmem:[#allocation3 + $0xa8] sm:$0xff] %v975
  %1243 = vst [vmem:[#allocation3 + $0xb0] sm:$0xff] %v1004
  %1244 = vst [vmem:[#allocation3 + $0xb8] sm:$0xff] %v1033
  %1245 = vst [vmem:[#allocation3 + $0xc0] sm:$0xff] %v1062
  %1246 = vst [vmem:[#allocation3 + $0xc8] sm:$0xff] %v1091
  %1247 = vst [vmem:[#allocation3 + $0xd0] sm:$0xff] %v1120
  %1248 = vst [vmem:[#allocation3 + $0xd8] sm:$0xff] %v1149
  %1249 = vst [vmem:[#allocation3 + $0xe0] sm:$0xff] %v1178
  %1250 = vst [vmem:[#allocation3 + $0xe8] sm:$0xff] %v1207
  %1251 = vst [vmem:[#allocation3 + $0xf0] sm:$0xff] %v948
  %1252 = vst [vmem:[#allocation3 + $0xf8] sm:$0xff] %v977
  %1253 = vst [vmem:[#allocation3 + $0x100] sm:$0xff] %v1006
  %1254 = vst [vmem:[#allocation3 + $0x108] sm:$0xff] %v1035
  %1255 = vst [vmem:[#allocation3 + $0x110] sm:$0xff] %v1064
  %1256 = vst [vmem:[#allocation3 + $0x118] sm:$0xff] %v1093
  %1257 = vst [vmem:[#allocation3 + $0x120] sm:$0xff] %v1122
  %1258 = vst [vmem:[#allocation3 + $0x128] sm:$0xff] %v1151
  %1259 = vst [vmem:[#allocation3 + $0x130] sm:$0xff] %v1180
  %1260 = vst [vmem:[#allocation3 + $0x138] sm:$0xff] %v1209
  %1261 = vst [vmem:[#allocation3 + $0x140] sm:$0xff] %v951
  %1262 = vst [vmem:[#allocation3 + $0x148] sm:$0xff] %v980
  %1263 = vst [vmem:[#allocation3 + $0x150] sm:$0xff] %v1009
  %1264 = vst [vmem:[#allocation3 + $0x158] sm:$0xff] %v1038
  %1265 = vst [vmem:[#allocation3 + $0x160] sm:$0xff] %v1067
  %1266 = vst [vmem:[#allocation3 + $0x168] sm:$0xff] %v1096
  %1267 = vst [vmem:[#allocation3 + $0x170] sm:$0xff] %v1125
  %1268 = vst [vmem:[#allocation3 + $0x178] sm:$0xff] %v1154
  %1269 = vst [vmem:[#allocation3 + $0x180] sm:$0xff] %v1183
  %1270 = vst [vmem:[#allocation3 + $0x188] sm:$0xff] %v1212
  %1271 = vst [vmem:[#allocation3 + $0x190] sm:$0xff] %v953
  %1272 = vst [vmem:[#allocation3 + $0x198] sm:$0xff] %v982
  %1273 = vst [vmem:[#allocation3 + $0x1a0] sm:$0xff] %v1011
  %1274 = vst [vmem:[#allocation3 + $0x1a8] sm:$0xff] %v1040
  %1275 = vst [vmem:[#allocation3 + $0x1b0] sm:$0xff] %v1069
  %1276 = vst [vmem:[#allocation3 + $0x1b8] sm:$0xff] %v1098
  %1277 = vst [vmem:[#allocation3 + $0x1c0] sm:$0xff] %v1127
  %1278 = vst [vmem:[#allocation3 + $0x1c8] sm:$0xff] %v1156
  %1279 = vst [vmem:[#allocation3 + $0x1d0] sm:$0xff] %v1185
  %1280 = vst [vmem:[#allocation3 + $0x1d8] sm:$0xff] %v1214
  %1281 = vst [vmem:[#allocation3 + $0x1e0] sm:$0xff] %v956
  %1282 = vst [vmem:[#allocation3 + $0x1e8] sm:$0xff] %v985
  %1283 = vst [vmem:[#allocation3 + $0x1f0] sm:$0xff] %v1014
  %1284 = vst [vmem:[#allocation3 + $0x1f8] sm:$0xff] %v1043
  %1285 = vst [vmem:[#allocation3 + $0x200] sm:$0xff] %v1072
  %1286 = vst [vmem:[#allocation3 + $0x208] sm:$0xff] %v1101
  %1287 = vst [vmem:[#allocation3 + $0x210] sm:$0xff] %v1130
  %1288 = vst [vmem:[#allocation3 + $0x218] sm:$0xff] %v1159
  %1289 = vst [vmem:[#allocation3 + $0x220] sm:$0xff] %v1188
  %1290 = vst [vmem:[#allocation3 + $0x228] sm:$0xff] %v1217
  %1291 = vst [vmem:[#allocation3 + $0x230] sm:$0xff] %v958
  %1292 = vst [vmem:[#allocation3 + $0x238] sm:$0xff] %v987
  %1293 = vst [vmem:[#allocation3 + $0x240] sm:$0xff] %v1016
  %1294 = vst [vmem:[#allocation3 + $0x248] sm:$0xff] %v1045
  %1295 = vst [vmem:[#allocation3 + $0x250] sm:$0xff] %v1074
  %1296 = vst [vmem:[#allocation3 + $0x258] sm:$0xff] %v1103
  %1297 = vst [vmem:[#allocation3 + $0x260] sm:$0xff] %v1132
  %1298 = vst [vmem:[#allocation3 + $0x268] sm:$0xff] %v1161
  %1299 = vst [vmem:[#allocation3 + $0x270] sm:$0xff] %v1190
  %1300 = vst [vmem:[#allocation3 + $0x278] sm:$0xff] %v1219
  %v1301 = vld [vmem:[#allocation2] sm:$0x1f]
  %v1302 = vld [vmem:[#allocation2 + $0x50] sm:$0x1f]
  %v1303 = vld [vmem:[#allocation2 + $0xa0] sm:$0x1f]
  %v1304 = vld [vmem:[#allocation2 + $0xf0] sm:$0x1f]
  %v1305 = vld [vmem:[#allocation2 + $0x140] sm:$0x1f]
  %v1306 = vld [vmem:[#allocation2 + $0x190] sm:$0x1f]
  %v1307 = vld [vmem:[#allocation2 + $0x1e0] sm:$0x1f]
  %v1308 = vld [vmem:[#allocation2 + $0x230] sm:$0x1f]
  %v1309 = vld [vmem:[#allocation3 + $0x10] sm:$0x1f]
  %v1310 = vld [vmem:[#allocation3 + $0x60] sm:$0x1f]
  %v1311 = vld [vmem:[#allocation3 + $0xb0] sm:$0x1f]
  %v1312 = vld [vmem:[#allocation3 + $0x100] sm:$0x1f]
  %v1313 = vld [vmem:[#allocation3 + $0x150] sm:$0x1f]
  %v1314 = vld [vmem:[#allocation3 + $0x1a0] sm:$0x1f]
  %v1315 = vld [vmem:[#allocation3 + $0x1f0] sm:$0x1f]
  %v1316 = vld [vmem:[#allocation3 + $0x240] sm:$0x1f]
  %v1317 = vadd.f32 %v1301, %v1309
  %v1318 = vadd.f32 %v1302, %v1310
  %v1319 = vadd.f32 %v1303, %v1311
  %v1320 = vadd.f32 %v1304, %v1312
  %v1321 = vadd.f32 %v1305, %v1313
  %v1322 = vadd.f32 %v1306, %v1314
  %v1323 = vadd.f32 %v1307, %v1315
  %v1324 = vadd.f32 %v1308, %v1316
  %v1325 = vld [vmem:[#allocation2 + $0x20] sm:$0x3e]
  %v1326 = vld [vmem:[#allocation2 + $0x70] sm:$0x3e]
  %v1327 = vld [vmem:[#allocation2 + $0xc0] sm:$0x3e]
  %v1328 = vld [vmem:[#allocation2 + $0x110] sm:$0x3e]
  %v1329 = vld [vmem:[#allocation2 + $0x160] sm:$0x3e]
  %v1330 = vld [vmem:[#allocation2 + $0x1b0] sm:$0x3e]
  %v1331 = vld [vmem:[#allocation2 + $0x200] sm:$0x3e]
  %v1332 = vld [vmem:[#allocation2 + $0x250] sm:$0x3e]
  %v1341 = vrot.slane %v1325, 1
  %v1342 = vrot.slane %v1326, 1
  %v1343 = vrot.slane %v1327, 1
  %v1344 = vrot.slane %v1328, 1
  %v1345 = vrot.slane %v1329, 1
  %v1346 = vrot.slane %v1330, 1
  %v1347 = vrot.slane %v1331, 1
  %v1348 = vrot.slane %v1332, 1
  %v1357 = vadd.f32 %v1317, %v1341
  %v1358 = vadd.f32 %v1318, %v1342
  %v1359 = vadd.f32 %v1319, %v1343
  %v1360 = vadd.f32 %v1320, %v1344
  %v1361 = vadd.f32 %v1321, %v1345
  %v1362 = vadd.f32 %v1322, %v1346
  %v1363 = vadd.f32 %v1323, %v1347
  %v1364 = vadd.f32 %v1324, %v1348
  %v1365 = vld [vmem:[#allocation3 + $0x30] sm:$0x3e]
  %v1366 = vld [vmem:[#allocation3 + $0x80] sm:$0x3e]
  %v1367 = vld [vmem:[#allocation3 + $0xd0] sm:$0x3e]
  %v1368 = vld [vmem:[#allocation3 + $0x120] sm:$0x3e]
  %v1369 = vld [vmem:[#allocation3 + $0x170] sm:$0x3e]
  %v1370 = vld [vmem:[#allocation3 + $0x1c0] sm:$0x3e]
  %v1371 = vld [vmem:[#allocation3 + $0x210] sm:$0x3e]
  %v1372 = vld [vmem:[#allocation3 + $0x260] sm:$0x3e]
  %v1381 = vrot.slane %v1365, 1
  %v1382 = vrot.slane %v1366, 1
  %v1383 = vrot.slane %v1367, 1
  %v1384 = vrot.slane %v1368, 1
  %v1385 = vrot.slane %v1369, 1
  %v1386 = vrot.slane %v1370, 1
  %v1387 = vrot.slane %v1371, 1
  %v1388 = vrot.slane %v1372, 1
  %v1397 = vadd.f32 %v1357, %v1381
  %v1398 = vadd.f32 %v1358, %v1382
  %v1399 = vadd.f32 %v1359, %v1383
  %v1400 = vadd.f32 %v1360, %v1384
  %v1401 = vadd.f32 %v1361, %v1385
  %v1402 = vadd.f32 %v1362, %v1386
  %v1403 = vadd.f32 %v1363, %v1387
  %v1404 = vadd.f32 %v1364, %v1388
  %v1405 = vld [vmem:[#allocation2 + $0x40] sm:$0x7c]
  %v1406 = vld [vmem:[#allocation2 + $0x90] sm:$0x7c]
  %v1407 = vld [vmem:[#allocation2 + $0xe0] sm:$0x7c]
  %v1408 = vld [vmem:[#allocation2 + $0x130] sm:$0x7c]
  %v1409 = vld [vmem:[#allocation2 + $0x180] sm:$0x7c]
  %v1410 = vld [vmem:[#allocation2 + $0x1d0] sm:$0x7c]
  %v1411 = vld [vmem:[#allocation2 + $0x220] sm:$0x7c]
  %v1412 = vld [vmem:[#allocation2 + $0x270] sm:$0x7c]
  %v1421 = vrot.slane %v1405, 2
  %v1422 = vrot.slane %v1406, 2
  %v1423 = vrot.slane %v1407, 2
  %v1424 = vrot.slane %v1408, 2
  %v1425 = vrot.slane %v1409, 2
  %v1426 = vrot.slane %v1410, 2
  %v1427 = vrot.slane %v1411, 2
  %v1428 = vrot.slane %v1412, 2
  %v1437 = vadd.f32 %v1397, %v1421
  %v1438 = vadd.f32 %v1398, %v1422
  %v1439 = vadd.f32 %v1399, %v1423
  %v1440 = vadd.f32 %v1400, %v1424
  %v1441 = vadd.f32 %v1401, %v1425
  %v1442 = vadd.f32 %v1402, %v1426
  %v1443 = vadd.f32 %v1403, %v1427
  %v1444 = vadd.f32 %v1404, %v1428
  %v1445 = vld [vmem:[#allocation2 + $0x8] sm:$0x1f]
  %v1446 = vld [vmem:[#allocation2 + $0x58] sm:$0x1f]
  %v1447 = vld [vmem:[#allocation2 + $0xa8] sm:$0x1f]
  %v1448 = vld [vmem:[#allocation2 + $0xf8] sm:$0x1f]
  %v1449 = vld [vmem:[#allocation2 + $0x148] sm:$0x1f]
  %v1450 = vld [vmem:[#allocation2 + $0x198] sm:$0x1f]
  %v1451 = vld [vmem:[#allocation2 + $0x1e8] sm:$0x1f]
  %v1452 = vld [vmem:[#allocation2 + $0x238] sm:$0x1f]
  %v1453 = vld [vmem:[#allocation3 + $0x18] sm:$0x1f]
  %v1454 = vld [vmem:[#allocation3 + $0x68] sm:$0x1f]
  %v1455 = vld [vmem:[#allocation3 + $0xb8] sm:$0x1f]
  %v1456 = vld [vmem:[#allocation3 + $0x108] sm:$0x1f]
  %v1457 = vld [vmem:[#allocation3 + $0x158] sm:$0x1f]
  %v1458 = vld [vmem:[#allocation3 + $0x1a8] sm:$0x1f]
  %v1459 = vld [vmem:[#allocation3 + $0x1f8] sm:$0x1f]
  %v1460 = vld [vmem:[#allocation3 + $0x248] sm:$0x1f]
  %v1461 = vadd.f32 %v1445, %v1453
  %v1462 = vadd.f32 %v1446, %v1454
  %v1463 = vadd.f32 %v1447, %v1455
  %v1464 = vadd.f32 %v1448, %v1456
  %v1465 = vadd.f32 %v1449, %v1457
  %v1466 = vadd.f32 %v1450, %v1458
  %v1467 = vadd.f32 %v1451, %v1459
  %v1468 = vadd.f32 %v1452, %v1460
  %v1469 = vld [vmem:[#allocation2 + $0x28] sm:$0x3e]
  %v1470 = vld [vmem:[#allocation2 + $0x78] sm:$0x3e]
  %v1471 = vld [vmem:[#allocation2 + $0xc8] sm:$0x3e]
  %v1472 = vld [vmem:[#allocation2 + $0x118] sm:$0x3e]
  %v1473 = vld [vmem:[#allocation2 + $0x168] sm:$0x3e]
  %v1474 = vld [vmem:[#allocation2 + $0x1b8] sm:$0x3e]
  %v1475 = vld [vmem:[#allocation2 + $0x208] sm:$0x3e]
  %v1476 = vld [vmem:[#allocation2 + $0x258] sm:$0x3e]
  %v1485 = vrot.slane %v1469, 1
  %v1486 = vrot.slane %v1470, 1
  %v1487 = vrot.slane %v1471, 1
  %v1488 = vrot.slane %v1472, 1
  %v1489 = vrot.slane %v1473, 1
  %v1490 = vrot.slane %v1474, 1
  %v1491 = vrot.slane %v1475, 1
  %v1492 = vrot.slane %v1476, 1
  %v1501 = vadd.f32 %v1461, %v1485
  %v1502 = vadd.f32 %v1462, %v1486
  %v1503 = vadd.f32 %v1463, %v1487
  %v1504 = vadd.f32 %v1464, %v1488
  %v1505 = vadd.f32 %v1465, %v1489
  %v1506 = vadd.f32 %v1466, %v1490
  %v1507 = vadd.f32 %v1467, %v1491
  %v1508 = vadd.f32 %v1468, %v1492
  %v1509 = vld [vmem:[#allocation3 + $0x38] sm:$0x3e]
  %v1510 = vld [vmem:[#allocation3 + $0x88] sm:$0x3e]
  %v1511 = vld [vmem:[#allocation3 + $0xd8] sm:$0x3e]
  %v1512 = vld [vmem:[#allocation3 + $0x128] sm:$0x3e]
  %v1513 = vld [vmem:[#allocation3 + $0x178] sm:$0x3e]
  %v1514 = vld [vmem:[#allocation3 + $0x1c8] sm:$0x3e]
  %v1515 = vld [vmem:[#allocation3 + $0x218] sm:$0x3e]
  %v1516 = vld [vmem:[#allocation3 + $0x268] sm:$0x3e]
  %v1525 = vrot.slane %v1509, 1
  %v1526 = vrot.slane %v1510, 1
  %v1527 = vrot.slane %v1511, 1
  %v1528 = vrot.slane %v1512, 1
  %v1529 = vrot.slane %v1513, 1
  %v1530 = vrot.slane %v1514, 1
  %v1531 = vrot.slane %v1515, 1
  %v1532 = vrot.slane %v1516, 1
  %v1541 = vadd.f32 %v1501, %v1525
  %v1542 = vadd.f32 %v1502, %v1526
  %v1543 = vadd.f32 %v1503, %v1527
  %v1544 = vadd.f32 %v1504, %v1528
  %v1545 = vadd.f32 %v1505, %v1529
  %v1546 = vadd.f32 %v1506, %v1530
  %v1547 = vadd.f32 %v1507, %v1531
  %v1548 = vadd.f32 %v1508, %v1532
  %v1549 = vld [vmem:[#allocation2 + $0x48] sm:$0x7c]
  %v1550 = vld [vmem:[#allocation2 + $0x98] sm:$0x7c]
  %v1551 = vld [vmem:[#allocation2 + $0xe8] sm:$0x7c]
  %v1552 = vld [vmem:[#allocation2 + $0x138] sm:$0x7c]
  %v1553 = vld [vmem:[#allocation2 + $0x188] sm:$0x7c]
  %v1554 = vld [vmem:[#allocation2 + $0x1d8] sm:$0x7c]
  %v1555 = vld [vmem:[#allocation2 + $0x228] sm:$0x7c]
  %v1556 = vld [vmem:[#allocation2 + $0x278] sm:$0x7c]
  %v1565 = vrot.slane %v1549, 2
  %v1566 = vrot.slane %v1550, 2
  %v1567 = vrot.slane %v1551, 2
  %v1568 = vrot.slane %v1552, 2
  %v1569 = vrot.slane %v1553, 2
  %v1570 = vrot.slane %v1554, 2
  %v1571 = vrot.slane %v1555, 2
  %v1572 = vrot.slane %v1556, 2
  %v1581 = vadd.f32 %v1541, %v1565
  %v1582 = vadd.f32 %v1542, %v1566
  %v1583 = vadd.f32 %v1543, %v1567
  %v1584 = vadd.f32 %v1544, %v1568
  %v1585 = vadd.f32 %v1545, %v1569
  %v1586 = vadd.f32 %v1546, %v1570
  %v1587 = vadd.f32 %v1547, %v1571
  %v1588 = vadd.f32 %v1548, %v1572
  %v1589 = vmax.f32 %v1437, %v1581
  %v1590 = vmax.f32 %v1438, %v1582
  %v1591 = vmax.f32 %v1439, %v1583
  %v1592 = vmax.f32 %v1440, %v1584
  %v1593 = vmax.f32 %v1441, %v1585
  %v1594 = vmax.f32 %v1442, %v1586
  %v1595 = vmax.f32 %v1443, %v1587
  %v1596 = vmax.f32 %v1444, %v1588
  %v1597 = vld [vmem:[#allocation3] sm:$0x1f]
  %v1598 = vld [vmem:[#allocation3 + $0x50] sm:$0x1f]
  %v1599 = vld [vmem:[#allocation3 + $0xa0] sm:$0x1f]
  %v1600 = vld [vmem:[#allocation3 + $0xf0] sm:$0x1f]
  %v1601 = vld [vmem:[#allocation3 + $0x140] sm:$0x1f]
  %v1602 = vld [vmem:[#allocation3 + $0x190] sm:$0x1f]
  %v1603 = vld [vmem:[#allocation3 + $0x1e0] sm:$0x1f]
  %v1604 = vld [vmem:[#allocation3 + $0x230] sm:$0x1f]
  %v1605 = vld [vmem:[#allocation2 + $0x10] sm:$0x3e]
  %v1606 = vld [vmem:[#allocation2 + $0x60] sm:$0x3e]
  %v1607 = vld [vmem:[#allocation2 + $0xb0] sm:$0x3e]
  %v1608 = vld [vmem:[#allocation2 + $0x100] sm:$0x3e]
  %v1609 = vld [vmem:[#allocation2 + $0x150] sm:$0x3e]
  %v1610 = vld [vmem:[#allocation2 + $0x1a0] sm:$0x3e]
  %v1611 = vld [vmem:[#allocation2 + $0x1f0] sm:$0x3e]
  %v1612 = vld [vmem:[#allocation2 + $0x240] sm:$0x3e]
  %v1621 = vrot.slane %v1605, 1
  %v1622 = vrot.slane %v1606, 1
  %v1623 = vrot.slane %v1607, 1
  %v1624 = vrot.slane %v1608, 1
  %v1625 = vrot.slane %v1609, 1
  %v1626 = vrot.slane %v1610, 1
  %v1627 = vrot.slane %v1611, 1
  %v1628 = vrot.slane %v1612, 1
  %v1637 = vadd.f32 %v1597, %v1621
  %v1638 = vadd.f32 %v1598, %v1622
  %v1639 = vadd.f32 %v1599, %v1623
  %v1640 = vadd.f32 %v1600, %v1624
  %v1641 = vadd.f32 %v1601, %v1625
  %v1642 = vadd.f32 %v1602, %v1626
  %v1643 = vadd.f32 %v1603, %v1627
  %v1644 = vadd.f32 %v1604, %v1628
  %v1645 = vld [vmem:[#allocation3 + $0x20] sm:$0x3e]
  %v1646 = vld [vmem:[#allocation3 + $0x70] sm:$0x3e]
  %v1647 = vld [vmem:[#allocation3 + $0xc0] sm:$0x3e]
  %v1648 = vld [vmem:[#allocation3 + $0x110] sm:$0x3e]
  %v1649 = vld [vmem:[#allocation3 + $0x160] sm:$0x3e]
  %v1650 = vld [vmem:[#allocation3 + $0x1b0] sm:$0x3e]
  %v1651 = vld [vmem:[#allocation3 + $0x200] sm:$0x3e]
  %v1652 = vld [vmem:[#allocation3 + $0x250] sm:$0x3e]
  %v1661 = vrot.slane %v1645, 1
  %v1662 = vrot.slane %v1646, 1
  %v1663 = vrot.slane %v1647, 1
  %v1664 = vrot.slane %v1648, 1
  %v1665 = vrot.slane %v1649, 1
  %v1666 = vrot.slane %v1650, 1
  %v1667 = vrot.slane %v1651, 1
  %v1668 = vrot.slane %v1652, 1
  %v1677 = vadd.f32 %v1637, %v1661
  %v1678 = vadd.f32 %v1638, %v1662
  %v1679 = vadd.f32 %v1639, %v1663
  %v1680 = vadd.f32 %v1640, %v1664
  %v1681 = vadd.f32 %v1641, %v1665
  %v1682 = vadd.f32 %v1642, %v1666
  %v1683 = vadd.f32 %v1643, %v1667
  %v1684 = vadd.f32 %v1644, %v1668
  %v1685 = vld [vmem:[#allocation2 + $0x30] sm:$0x7c]
  %v1686 = vld [vmem:[#allocation2 + $0x80] sm:$0x7c]
  %v1687 = vld [vmem:[#allocation2 + $0xd0] sm:$0x7c]
  %v1688 = vld [vmem:[#allocation2 + $0x120] sm:$0x7c]
  %v1689 = vld [vmem:[#allocation2 + $0x170] sm:$0x7c]
  %v1690 = vld [vmem:[#allocation2 + $0x1c0] sm:$0x7c]
  %v1691 = vld [vmem:[#allocation2 + $0x210] sm:$0x7c]
  %v1692 = vld [vmem:[#allocation2 + $0x260] sm:$0x7c]
  %v1701 = vrot.slane %v1685, 2
  %v1702 = vrot.slane %v1686, 2
  %v1703 = vrot.slane %v1687, 2
  %v1704 = vrot.slane %v1688, 2
  %v1705 = vrot.slane %v1689, 2
  %v1706 = vrot.slane %v1690, 2
  %v1707 = vrot.slane %v1691, 2
  %v1708 = vrot.slane %v1692, 2
  %v1717 = vadd.f32 %v1677, %v1701
  %v1718 = vadd.f32 %v1678, %v1702
  %v1719 = vadd.f32 %v1679, %v1703
  %v1720 = vadd.f32 %v1680, %v1704
  %v1721 = vadd.f32 %v1681, %v1705
  %v1722 = vadd.f32 %v1682, %v1706
  %v1723 = vadd.f32 %v1683, %v1707
  %v1724 = vadd.f32 %v1684, %v1708
  %v1725 = vld [vmem:[#allocation3 + $0x40] sm:$0x7c]
  %v1726 = vld [vmem:[#allocation3 + $0x90] sm:$0x7c]
  %v1727 = vld [vmem:[#allocation3 + $0xe0] sm:$0x7c]
  %v1728 = vld [vmem:[#allocation3 + $0x130] sm:$0x7c]
  %v1729 = vld [vmem:[#allocation3 + $0x180] sm:$0x7c]
  %v1730 = vld [vmem:[#allocation3 + $0x1d0] sm:$0x7c]
  %v1731 = vld [vmem:[#allocation3 + $0x220] sm:$0x7c]
  %v1732 = vld [vmem:[#allocation3 + $0x270] sm:$0x7c]
  %v1741 = vrot.slane %v1725, 2
  %v1742 = vrot.slane %v1726, 2
  %v1743 = vrot.slane %v1727, 2
  %v1744 = vrot.slane %v1728, 2
  %v1745 = vrot.slane %v1729, 2
  %v1746 = vrot.slane %v1730, 2
  %v1747 = vrot.slane %v1731, 2
  %v1748 = vrot.slane %v1732, 2
  %v1757 = vadd.f32 %v1717, %v1741
  %v1758 = vadd.f32 %v1718, %v1742
  %v1759 = vadd.f32 %v1719, %v1743
  %v1760 = vadd.f32 %v1720, %v1744
  %v1761 = vadd.f32 %v1721, %v1745
  %v1762 = vadd.f32 %v1722, %v1746
  %v1763 = vadd.f32 %v1723, %v1747
  %v1764 = vadd.f32 %v1724, %v1748
  %v1765 = vmax.f32 %v1589, %v1757
  %v1766 = vmax.f32 %v1590, %v1758
  %v1767 = vmax.f32 %v1591, %v1759
  %v1768 = vmax.f32 %v1592, %v1760
  %v1769 = vmax.f32 %v1593, %v1761
  %v1770 = vmax.f32 %v1594, %v1762
  %v1771 = vmax.f32 %v1595, %v1763
  %v1772 = vmax.f32 %v1596, %v1764
  %v1773 = vld [vmem:[#allocation3 + $0x8] sm:$0x1f]
  %v1774 = vld [vmem:[#allocation3 + $0x58] sm:$0x1f]
  %v1775 = vld [vmem:[#allocation3 + $0xa8] sm:$0x1f]
  %v1776 = vld [vmem:[#allocation3 + $0xf8] sm:$0x1f]
  %v1777 = vld [vmem:[#allocation3 + $0x148] sm:$0x1f]
  %v1778 = vld [vmem:[#allocation3 + $0x198] sm:$0x1f]
  %v1779 = vld [vmem:[#allocation3 + $0x1e8] sm:$0x1f]
  %v1780 = vld [vmem:[#allocation3 + $0x238] sm:$0x1f]
  %v1781 = vld [vmem:[#allocation2 + $0x18] sm:$0x3e]
  %v1782 = vld [vmem:[#allocation2 + $0x68] sm:$0x3e]
  %v1783 = vld [vmem:[#allocation2 + $0xb8] sm:$0x3e]
  %v1784 = vld [vmem:[#allocation2 + $0x108] sm:$0x3e]
  %v1785 = vld [vmem:[#allocation2 + $0x158] sm:$0x3e]
  %v1786 = vld [vmem:[#allocation2 + $0x1a8] sm:$0x3e]
  %v1787 = vld [vmem:[#allocation2 + $0x1f8] sm:$0x3e]
  %v1788 = vld [vmem:[#allocation2 + $0x248] sm:$0x3e]
  %v1797 = vrot.slane %v1781, 1
  %v1798 = vrot.slane %v1782, 1
  %v1799 = vrot.slane %v1783, 1
  %v1800 = vrot.slane %v1784, 1
  %v1801 = vrot.slane %v1785, 1
  %v1802 = vrot.slane %v1786, 1
  %v1803 = vrot.slane %v1787, 1
  %v1804 = vrot.slane %v1788, 1
  %v1813 = vadd.f32 %v1773, %v1797
  %v1814 = vadd.f32 %v1774, %v1798
  %v1815 = vadd.f32 %v1775, %v1799
  %v1816 = vadd.f32 %v1776, %v1800
  %v1817 = vadd.f32 %v1777, %v1801
  %v1818 = vadd.f32 %v1778, %v1802
  %v1819 = vadd.f32 %v1779, %v1803
  %v1820 = vadd.f32 %v1780, %v1804
  %v1821 = vld [vmem:[#allocation3 + $0x28] sm:$0x3e]
  %v1822 = vld [vmem:[#allocation3 + $0x78] sm:$0x3e]
  %v1823 = vld [vmem:[#allocation3 + $0xc8] sm:$0x3e]
  %v1824 = vld [vmem:[#allocation3 + $0x118] sm:$0x3e]
  %v1825 = vld [vmem:[#allocation3 + $0x168] sm:$0x3e]
  %v1826 = vld [vmem:[#allocation3 + $0x1b8] sm:$0x3e]
  %v1827 = vld [vmem:[#allocation3 + $0x208] sm:$0x3e]
  %v1828 = vld [vmem:[#allocation3 + $0x258] sm:$0x3e]
  %v1837 = vrot.slane %v1821, 1
  %v1838 = vrot.slane %v1822, 1
  %v1839 = vrot.slane %v1823, 1
  %v1840 = vrot.slane %v1824, 1
  %v1841 = vrot.slane %v1825, 1
  %v1842 = vrot.slane %v1826, 1
  %v1843 = vrot.slane %v1827, 1
  %v1844 = vrot.slane %v1828, 1
  %v1853 = vadd.f32 %v1813, %v1837
  %v1854 = vadd.f32 %v1814, %v1838
  %v1855 = vadd.f32 %v1815, %v1839
  %v1856 = vadd.f32 %v1816, %v1840
  %v1857 = vadd.f32 %v1817, %v1841
  %v1858 = vadd.f32 %v1818, %v1842
  %v1859 = vadd.f32 %v1819, %v1843
  %v1860 = vadd.f32 %v1820, %v1844
  %v1861 = vld [vmem:[#allocation2 + $0x38] sm:$0x7c]
  %v1862 = vld [vmem:[#allocation2 + $0x88] sm:$0x7c]
  %v1863 = vld [vmem:[#allocation2 + $0xd8] sm:$0x7c]
  %v1864 = vld [vmem:[#allocation2 + $0x128] sm:$0x7c]
  %v1865 = vld [vmem:[#allocation2 + $0x178] sm:$0x7c]
  %v1866 = vld [vmem:[#allocation2 + $0x1c8] sm:$0x7c]
  %v1867 = vld [vmem:[#allocation2 + $0x218] sm:$0x7c]
  %v1868 = vld [vmem:[#allocation2 + $0x268] sm:$0x7c]
  %v1877 = vrot.slane %v1861, 2
  %v1878 = vrot.slane %v1862, 2
  %v1879 = vrot.slane %v1863, 2
  %v1880 = vrot.slane %v1864, 2
  %v1881 = vrot.slane %v1865, 2
  %v1882 = vrot.slane %v1866, 2
  %v1883 = vrot.slane %v1867, 2
  %v1884 = vrot.slane %v1868, 2
  %v1893 = vadd.f32 %v1853, %v1877
  %v1894 = vadd.f32 %v1854, %v1878
  %v1895 = vadd.f32 %v1855, %v1879
  %v1896 = vadd.f32 %v1856, %v1880
  %v1897 = vadd.f32 %v1857, %v1881
  %v1898 = vadd.f32 %v1858, %v1882
  %v1899 = vadd.f32 %v1859, %v1883
  %v1900 = vadd.f32 %v1860, %v1884
  %v1901 = vld [vmem:[#allocation3 + $0x48] sm:$0x7c]
  %v1902 = vld [vmem:[#allocation3 + $0x98] sm:$0x7c]
  %v1903 = vld [vmem:[#allocation3 + $0xe8] sm:$0x7c]
  %v1904 = vld [vmem:[#allocation3 + $0x138] sm:$0x7c]
  %v1905 = vld [vmem:[#allocation3 + $0x188] sm:$0x7c]
  %v1906 = vld [vmem:[#allocation3 + $0x1d8] sm:$0x7c]
  %v1907 = vld [vmem:[#allocation3 + $0x228] sm:$0x7c]
  %v1908 = vld [vmem:[#allocation3 + $0x278] sm:$0x7c]
  %v1917 = vrot.slane %v1901, 2
  %v1918 = vrot.slane %v1902, 2
  %v1919 = vrot.slane %v1903, 2
  %v1920 = vrot.slane %v1904, 2
  %v1921 = vrot.slane %v1905, 2
  %v1922 = vrot.slane %v1906, 2
  %v1923 = vrot.slane %v1907, 2
  %v1924 = vrot.slane %v1908, 2
  %v1933 = vadd.f32 %v1893, %v1917
  %v1934 = vadd.f32 %v1894, %v1918
  %v1935 = vadd.f32 %v1895, %v1919
  %v1936 = vadd.f32 %v1896, %v1920
  %v1937 = vadd.f32 %v1897, %v1921
  %v1938 = vadd.f32 %v1898, %v1922
  %v1939 = vadd.f32 %v1899, %v1923
  %v1940 = vadd.f32 %v1900, %v1924
  %v1941 = vmax.f32 %v1765, %v1933
  %v1942 = vmax.f32 %v1766, %v1934
  %v1943 = vmax.f32 %v1767, %v1935
  %v1944 = vmax.f32 %v1768, %v1936
  %v1945 = vmax.f32 %v1769, %v1937
  %v1946 = vmax.f32 %v1770, %v1938
  %v1947 = vmax.f32 %v1771, %v1939
  %v1948 = vmax.f32 %v1772, %v1940
  %v1949 = vld [vmem:[%s3] sm:$0x1]
  %v1951 = vperm.slane %v1949, 0
  %v1953 = vadd.f32 %v1941, %v1951
  %v1954 = vadd.f32 %v1942, %v1951
  %v1955 = vadd.f32 %v1943, %v1951
  %v1956 = vadd.f32 %v1944, %v1951
  %v1957 = vadd.f32 %v1945, %v1951
  %v1958 = vadd.f32 %v1946, %v1951
  %v1959 = vadd.f32 %v1947, %v1951
  %v1960 = vadd.f32 %v1948, %v1951
  %v1961 = vmax.f32 %v1953, 0.0
  %v1962 = vmax.f32 %v1954, 0.0
  %v1963 = vmax.f32 %v1955, 0.0
  %v1964 = vmax.f32 %v1956, 0.0
  %v1965 = vmax.f32 %v1957, 0.0
  %v1966 = vmax.f32 %v1958, 0.0
  %v1967 = vmax.f32 %v1959, 0.0
  %v1968 = vmax.f32 %v1960, 0.0
  %v1969 = vpack.c.bf16 %v1961, %v1961
  %v1970 = vpack.c.bf16 %v1962, %v1962
  %v1971 = vpack.c.bf16 %v1963, %v1963
  %v1972 = vpack.c.bf16 %v1964, %v1964
  %v1973 = vpack.c.bf16 %v1965, %v1965
  %v1974 = vpack.c.bf16 %v1966, %v1966
  %v1975 = vpack.c.bf16 %v1967, %v1967
  %v1976 = vpack.c.bf16 %v1968, %v1968
  %vm1977 = vcmask 1042432
  %vm1978 = vsmask.f32 2304
  %vm1979 = vmand %vm1977, %vm1978
  %v1980 = vld [vmem:[%s4] sm:$0x7]
  %v1981 = vsel %vm1979, %v1969, %v1980
  %1982 = vst [vmem:[%s4] sm:$0x7] %v1981
  %v1983 = vld [vmem:[%s4 + $0x4] sm:$0x7]
  %v1984 = vsel %vm1979, %v1970, %v1983
  %1985 = vst [vmem:[%s4 + $0x4] sm:$0x7] %v1984
  %v1986 = vld [vmem:[%s4 + $0x8] sm:$0x7]
  %v1987 = vsel %vm1979, %v1971, %v1986
  %1988 = vst [vmem:[%s4 + $0x8] sm:$0x7] %v1987
  %v1989 = vld [vmem:[%s4 + $0xc] sm:$0x7]
  %v1990 = vsel %vm1979, %v1972, %v1989
  %1991 = vst [vmem:[%s4 + $0xc] sm:$0x7] %v1990
  %v1992 = vld [vmem:[%s4 + $0x10] sm:$0x7]
  %v1993 = vsel %vm1979, %v1973, %v1992
  %1994 = vst [vmem:[%s4 + $0x10] sm:$0x7] %v1993
  %v1995 = vld [vmem:[%s4 + $0x14] sm:$0x7]
  %v1996 = vsel %vm1979, %v1974, %v1995
  %1997 = vst [vmem:[%s4 + $0x14] sm:$0x7] %v1996
  %v1998 = vld [vmem:[%s4 + $0x18] sm:$0x7]
  %v1999 = vsel %vm1979, %v1975, %v1998
  %2000 = vst [vmem:[%s4 + $0x18] sm:$0x7] %v1999
  %v2001 = vld [vmem:[%s4 + $0x1c] sm:$0x7]
  %v2002 = vsel %vm1979, %v1976, %v2001
  %2003 = vst [vmem:[%s4 + $0x1c] sm:$0x7] %v2002
  // Predicated region
  $region18: #{net_forward.4} parent=0 // pred_check
    _
  $region19: #{net_forward.4} parent=0 // pred_check_branch
    %2005 = sbr.rel (0) target = $region21
  $region20: #{net_forward.4} parent=0 // pred_region
    _
  $region21: #{net_forward.4} parent=0 // pred_fallthru
    _
  // Predicated region
  $region22: #{net_forward.4} parent=0 // pred_check
    _
  $region23: #{net_forward.4} parent=0 // pred_check_branch
    %2007 = sbr.rel (0) target = $region25
  $region24: #{net_forward.4} parent=0 // pred_region
    _
  $region25: #{net_forward.4} parent=0 // pred_fallthru
    _

// kernel: net_forward.3
$region0: #{net_forward.3}
  #allocation0 [shape = 'u32[]', space=smem, size = 0x4, offset = 0x4, fixed_abs, tag = 'smem constant byte address 0x4 - core index']
  #allocation1 [shape = 'u32[72,128]{1,0:T(1,128)}', space=vmem, size = 0x9000, scoped, tag = 'internal scratch']
  #allocation2 [shape = 'f32[8,16,1280]{2,1,0:T(8,128)}', space=vmem, size = 0xa0000, scoped, tag = 'scratch operand']
  #allocation3 [shape = 'f32[8,16,1280]{2,1,0:T(8,128)}', space=vmem, size = 0xa0000, scoped, tag = 'scratch operand']
  %s0 = inlined_call_operand.vmem [shape: bf16[8,16,128], index: 0, kind: input, shape index: {}]
  %s1 = inlined_call_operand.vmem [shape: bf16[8,16,128], index: 1, kind: input, shape index: {}]
  %s2 = inlined_call_operand.vmem [shape: bf16[128,1280], index: 2, kind: input, shape index: {}]
  %s3 = inlined_call_operand.hbm [shape: f32[1,1,128], index: 3, kind: input, shape index: {}]
  %s4 = inlined_call_operand.vmem [shape: bf16[8,14,128], index: 4, kind: output, shape index: {}]
  %s5 = sld [smem:[#allocation0]]
  $region30: #{net_forward.3} parent=0
    _
  %s7 = ssub.s32 1, %s5
  %s8 = scalar_select 0, %s7, %s5
  $region1: #{net_forward.3} parent=0
    #allocation4 [shape = 'u8[512]{0}', space=vmem, size = 0x400, scoped, tag = 'input window, operand 3, single buffered']
    #allocation5 [shape = 's32[1]{0}', space=sflag, size = 0x4, scoped, tag = 'scoped memory for net_forward.3']
    %9 = vsyncpa [#allocation5], 0
    // Predicated region
    $region2: #{net_forward.3} parent=1 // pred_check
      _
    $region3: #{net_forward.3} parent=1 // pred_check_branch
      %11 = sbr.rel (0) target = $region5
    $region4: #{net_forward.3} parent=1 // pred_region
      _
    $region5: #{net_forward.3} parent=1 // pred_fallthru
      _
    // Predicated region
    $region6: #{net_forward.3} parent=1 // pred_check
      _
    $region7: #{net_forward.3} parent=1 // pred_check_branch
      %13 = sbr.rel (0) target = $region9
    $region8: #{net_forward.3} parent=1 // pred_region
      _
    $region9: #{net_forward.3} parent=1 // pred_fallthru
      _
    // Predicated region
    $region10: #{net_forward.3} parent=1 // pred_check
      _
    $region11: #{net_forward.3} parent=1 // pred_check_branch
      %15 = sbr.rel (0) target = $region13
    $region12: #{net_forward.3} parent=1 // pred_region
      _
    $region13: #{net_forward.3} parent=1 // pred_fallthru
      _
    // Predicated region
    $region14: #{net_forward.3} parent=1 // pred_check
      _
    $region15: #{net_forward.3} parent=1 // pred_check_branch
      %17 = sbr.rel (0) target = $region17
    $region16: #{net_forward.3} parent=1 // pred_region
      %19 = vsyncadd [#allocation5], 0
      %s21 = sshll.u32 %s3, 4
      %s22 = int_to_ptr.hbm [resolvable:$true] %s21
      %s23 = sshll.u32 [#allocation4], 4
      %s24 = int_to_ptr.vmem [resolvable:$true] %s23
      %26 = dma.hbm_to_vmem [thread:$0]  %s22, 16, %s24, [#allocation5]
    $region17: #{net_forward.3} parent=1 // pred_fallthru
      _
    // Predicated region
    $region18: #{net_forward.3} parent=1 // pred_check
      _
    $region19: #{net_forward.3} parent=1 // pred_check_branch
      %28 = sbr.rel (0) target = $region21
    $region20: #{net_forward.3} parent=1 // pred_region
      %30 = dma.done [#allocation5], 16
    $region21: #{net_forward.3} parent=1 // pred_fallthru
      _
    %v31 = vld [vmem:[%s2] sm:$0xff]
    %v32 = vld [vmem:[%s2 + $0x8] sm:$0xff]
    %v33 = vld [vmem:[%s2 + $0x10] sm:$0xff]
    %v34 = vld [vmem:[%s2 + $0x18] sm:$0xff]
    %v35 = vld [vmem:[%s2 + $0x20] sm:$0xff]
    %v36 = vld [vmem:[%s2 + $0x28] sm:$0xff]
    %v37 = vld [vmem:[%s2 + $0x30] sm:$0xff]
    %v38 = vld [vmem:[%s2 + $0x38] sm:$0xff]
    %v39 = vld [vmem:[%s2 + $0x40] sm:$0xff]
    %v40 = vld [vmem:[%s2 + $0x48] sm:$0xff]
    %v41 = vld [vmem:[%s2 + $0x50] sm:$0xff]
    %v42 = vld [vmem:[%s2 + $0x58] sm:$0xff]
    %v43 = vld [vmem:[%s2 + $0x60] sm:$0xff]
    %v44 = vld [vmem:[%s2 + $0x68] sm:$0xff]
    %v45 = vld [vmem:[%s2 + $0x70] sm:$0xff]
    %v46 = vld [vmem:[%s2 + $0x78] sm:$0xff]
    %v47 = vld [vmem:[%s2 + $0x80] sm:$0xff]
    %v48 = vld [vmem:[%s2 + $0x88] sm:$0xff]
    %v49 = vld [vmem:[%s2 + $0x90] sm:$0xff]
    %v50 = vld [vmem:[%s2 + $0x98] sm:$0xff]
    %v51 = vld [vmem:[%s2 + $0xa0] sm:$0xff]
    %v52 = vld [vmem:[%s2 + $0xa8] sm:$0xff]
    %v53 = vld [vmem:[%s2 + $0xb0] sm:$0xff]
    %v54 = vld [vmem:[%s2 + $0xb8] sm:$0xff]
    %v55 = vld [vmem:[%s2 + $0xc0] sm:$0xff]
    %v56 = vld [vmem:[%s2 + $0xc8] sm:$0xff]
    %v57 = vld [vmem:[%s2 + $0xd0] sm:$0xff]
    %v58 = vld [vmem:[%s2 + $0xd8] sm:$0xff]
    %v59 = vld [vmem:[%s2 + $0xe0] sm:$0xff]
    %v60 = vld [vmem:[%s2 + $0xe8] sm:$0xff]
    %v61 = vld [vmem:[%s2 + $0xf0] sm:$0xff]
    %v62 = vld [vmem:[%s2 + $0xf8] sm:$0xff]
    %v63 = vld [vmem:[%s2 + $0x100] sm:$0xff]
    %v64 = vld [vmem:[%s2 + $0x108] sm:$0xff]
    %v65 = vld [vmem:[%s2 + $0x110] sm:$0xff]
    %v66 = vld [vmem:[%s2 + $0x118] sm:$0xff]
    %v67 = vld [vmem:[%s2 + $0x120] sm:$0xff]
    %v68 = vld [vmem:[%s2 + $0x128] sm:$0xff]
    %v69 = vld [vmem:[%s2 + $0x130] sm:$0xff]
    %v70 = vld [vmem:[%s2 + $0x138] sm:$0xff]
    %v71 = vld [vmem:[%s2 + $0x140] sm:$0xff]
    %v72 = vld [vmem:[%s2 + $0x148] sm:$0xff]
    %v73 = vld [vmem:[%s2 + $0x150] sm:$0xff]
    %v74 = vld [vmem:[%s2 + $0x158] sm:$0xff]
    %v75 = vld [vmem:[%s2 + $0x160] sm:$0xff]
    %v76 = vld [vmem:[%s2 + $0x168] sm:$0xff]
    %v77 = vld [vmem:[%s2 + $0x170] sm:$0xff]
    %v78 = vld [vmem:[%s2 + $0x178] sm:$0xff]
    %v79 = vld [vmem:[%s2 + $0x180] sm:$0xff]
    %v80 = vld [vmem:[%s2 + $0x188] sm:$0xff]
    %v81 = vld [vmem:[%s2 + $0x190] sm:$0xff]
    %v82 = vld [vmem:[%s2 + $0x198] sm:$0xff]
    %v83 = vld [vmem:[%s2 + $0x1a0] sm:$0xff]
    %v84 = vld [vmem:[%s2 + $0x1a8] sm:$0xff]
    %v85 = vld [vmem:[%s2 + $0x1b0] sm:$0xff]
    %v86 = vld [vmem:[%s2 + $0x1b8] sm:$0xff]
    %v87 = vld [vmem:[%s2 + $0x1c0] sm:$0xff]
    %v88 = vld [vmem:[%s2 + $0x1c8] sm:$0xff]
    %v89 = vld [vmem:[%s2 + $0x1d0] sm:$0xff]
    %v90 = vld [vmem:[%s2 + $0x1d8] sm:$0xff]
    %v91 = vld [vmem:[%s2 + $0x1e0] sm:$0xff]
    %v92 = vld [vmem:[%s2 + $0x1e8] sm:$0xff]
    %v93 = vld [vmem:[%s2 + $0x1f0] sm:$0xff]
    %v94 = vld [vmem:[%s2 + $0x1f8] sm:$0xff]
    %v95 = vld [vmem:[%s2 + $0x200] sm:$0xff]
    %v96 = vld [vmem:[%s2 + $0x208] sm:$0xff]
    %v97 = vld [vmem:[%s2 + $0x210] sm:$0xff]
    %v98 = vld [vmem:[%s2 + $0x218] sm:$0xff]
    %v99 = vld [vmem:[%s2 + $0x220] sm:$0xff]
    %v100 = vld [vmem:[%s2 + $0x228] sm:$0xff]
    %v101 = vld [vmem:[%s2 + $0x230] sm:$0xff]
    %v102 = vld [vmem:[%s2 + $0x238] sm:$0xff]
    %v103 = vld [vmem:[%s2 + $0x240] sm:$0xff]
    %v104 = vld [vmem:[%s2 + $0x248] sm:$0xff]
    %v105 = vld [vmem:[%s2 + $0x250] sm:$0xff]
    %v106 = vld [vmem:[%s2 + $0x258] sm:$0xff]
    %v107 = vld [vmem:[%s2 + $0x260] sm:$0xff]
    %v108 = vld [vmem:[%s2 + $0x268] sm:$0xff]
    %v109 = vld [vmem:[%s2 + $0x270] sm:$0xff]
    %v110 = vld [vmem:[%s2 + $0x278] sm:$0xff]
    %v111 = vld [vmem:[%s0] sm:$0xf]
    %v112 = vld [vmem:[%s0 + $0x4] sm:$0xf]
    %v113 = vld [vmem:[%s0 + $0x8] sm:$0xf]
    %v114 = vld [vmem:[%s0 + $0xc] sm:$0xf]
    %v115 = vld [vmem:[%s0 + $0x10] sm:$0xf]
    %v116 = vld [vmem:[%s0 + $0x14] sm:$0xf]
    %v117 = vld [vmem:[%s0 + $0x18] sm:$0xf]
    %v118 = vld [vmem:[%s0 + $0x1c] sm:$0xf]
    %v119 = vld [vmem:[%s0 + $0x20] sm:$0xf]
    %v120 = vld [vmem:[%s0 + $0x24] sm:$0xf]
    %v121 = vld [vmem:[%s0 + $0x28] sm:$0xf]
    %v122 = vld [vmem:[%s0 + $0x2c] sm:$0xf]
    %v123 = vld [vmem:[%s0 + $0x30] sm:$0xf]
    %v124 = vld [vmem:[%s0 + $0x34] sm:$0xf]
    %v125 = vld [vmem:[%s0 + $0x38] sm:$0xf]
    %v126 = vld [vmem:[%s0 + $0x3c] sm:$0xf]
    %v143 = vunpack.c.l.b16 %v111
    %v144 = vunpack.c.l.b16 %v112
    %v145 = vunpack.c.l.b16 %v113
    %v146 = vunpack.c.l.b16 %v114
    %v147 = vunpack.c.l.b16 %v115
    %v148 = vunpack.c.l.b16 %v116
    %v149 = vunpack.c.l.b16 %v117
    %v150 = vunpack.c.l.b16 %v118
    %v151 = vunpack.c.l.b16 %v119
    %v152 = vunpack.c.l.b16 %v120
    %v153 = vunpack.c.l.b16 %v121
    %v154 = vunpack.c.l.b16 %v122
    %v155 = vunpack.c.l.b16 %v123
    %v156 = vunpack.c.l.b16 %v124
    %v157 = vunpack.c.l.b16 %v125
    %v158 = vunpack.c.l.b16 %v126
    %v159 = vpack.c.b16 %v144, %v143
    %v160 = vpack.c.b16 %v146, %v145
    %v161 = vpack.c.b16 %v148, %v147
    %v162 = vpack.c.b16 %v150, %v149
    %v163 = vpack.c.b16 %v152, %v151
    %v164 = vpack.c.b16 %v154, %v153
    %v165 = vpack.c.b16 %v156, %v155
    %v166 = vpack.c.b16 %v158, %v157
    %v255 = vunpack.c.l.b16 %v31
    %v256 = vunpack.c.h.b16 %v31
    %v257 = vunpack.c.l.b16 %v32
    %v258 = vunpack.c.h.b16 %v32
    %v259 = vunpack.c.l.b16 %v33
    %v260 = vunpack.c.h.b16 %v33
    %v261 = vunpack.c.l.b16 %v34
    %v262 = vunpack.c.h.b16 %v34
    %v263 = vunpack.c.l.b16 %v35
    %v264 = vunpack.c.h.b16 %v35
    %v265 = vunpack.c.l.b16 %v36
    %v266 = vunpack.c.h.b16 %v36
    %v267 = vunpack.c.l.b16 %v37
    %v268 = vunpack.c.h.b16 %v37
    %v269 = vunpack.c.l.b16 %v38
    %v270 = vunpack.c.h.b16 %v38
    %v271 = vunpack.c.l.b16 %v39
    %v272 = vunpack.c.h.b16 %v39
    %v273 = vunpack.c.l.b16 %v40
    %v274 = vunpack.c.h.b16 %v40
    %v275 = vunpack.c.l.b16 %v41
    %v276 = vunpack.c.h.b16 %v41
    %v277 = vunpack.c.l.b16 %v42
    %v278 = vunpack.c.h.b16 %v42
    %v279 = vunpack.c.l.b16 %v43
    %v280 = vunpack.c.h.b16 %v43
    %v281 = vunpack.c.l.b16 %v44
    %v282 = vunpack.c.h.b16 %v44
    %v283 = vunpack.c.l.b16 %v45
    %v284 = vunpack.c.h.b16 %v45
    %v285 = vunpack.c.l.b16 %v46
    %v286 = vunpack.c.h.b16 %v46
    %v287 = vunpack.c.l.b16 %v47
    %v288 = vunpack.c.h.b16 %v47
    %v289 = vunpack.c.l.b16 %v48
    %v290 = vunpack.c.h.b16 %v48
    %v291 = vunpack.c.l.b16 %v49
    %v292 = vunpack.c.h.b16 %v49
    %v293 = vunpack.c.l.b16 %v50
    %v294 = vunpack.c.h.b16 %v50
    %v295 = vunpack.c.l.b16 %v51
    %v296 = vunpack.c.h.b16 %v51
    %v297 = vunpack.c.l.b16 %v52
    %v298 = vunpack.c.h.b16 %v52
    %v299 = vunpack.c.l.b16 %v53
    %v300 = vunpack.c.h.b16 %v53
    %v301 = vunpack.c.l.b16 %v54
    %v302 = vunpack.c.h.b16 %v54
    %v303 = vunpack.c.l.b16 %v55
    %v304 = vunpack.c.h.b16 %v55
    %v305 = vunpack.c.l.b16 %v56
    %v306 = vunpack.c.h.b16 %v56
    %v307 = vunpack.c.l.b16 %v57
    %v308 = vunpack.c.h.b16 %v57
    %v309 = vunpack.c.l.b16 %v58
    %v310 = vunpack.c.h.b16 %v58
    %v311 = vunpack.c.l.b16 %v59
    %v312 = vunpack.c.h.b16 %v59
    %v313 = vunpack.c.l.b16 %v60
    %v314 = vunpack.c.h.b16 %v60
    %v315 = vunpack.c.l.b16 %v61
    %v316 = vunpack.c.h.b16 %v61
    %v317 = vunpack.c.l.b16 %v62
    %v318 = vunpack.c.h.b16 %v62
    %v319 = vunpack.c.l.b16 %v63
    %v320 = vunpack.c.h.b16 %v63
    %v321 = vunpack.c.l.b16 %v64
    %v322 = vunpack.c.h.b16 %v64
    %v323 = vunpack.c.l.b16 %v65
    %v324 = vunpack.c.h.b16 %v65
    %v325 = vunpack.c.l.b16 %v66
    %v326 = vunpack.c.h.b16 %v66
    %v327 = vunpack.c.l.b16 %v67
    %v328 = vunpack.c.h.b16 %v67
    %v329 = vunpack.c.l.b16 %v68
    %v330 = vunpack.c.h.b16 %v68
    %v331 = vunpack.c.l.b16 %v69
    %v332 = vunpack.c.h.b16 %v69
    %v333 = vunpack.c.l.b16 %v70
    %v334 = vunpack.c.h.b16 %v70
    %v335 = vunpack.c.l.b16 %v71
    %v336 = vunpack.c.h.b16 %v71
    %v337 = vunpack.c.l.b16 %v72
    %v338 = vunpack.c.h.b16 %v72
    %v339 = vunpack.c.l.b16 %v73
    %v340 = vunpack.c.h.b16 %v73
    %v341 = vunpack.c.l.b16 %v74
    %v342 = vunpack.c.h.b16 %v74
    %v343 = vunpack.c.l.b16 %v75
    %v344 = vunpack.c.h.b16 %v75
    %v345 = vunpack.c.l.b16 %v76
    %v346 = vunpack.c.h.b16 %v76
    %v347 = vunpack.c.l.b16 %v77
    %v348 = vunpack.c.h.b16 %v77
    %v349 = vunpack.c.l.b16 %v78
    %v350 = vunpack.c.h.b16 %v78
    %v351 = vunpack.c.l.b16 %v79
    %v352 = vunpack.c.h.b16 %v79
    %v353 = vunpack.c.l.b16 %v80
    %v354 = vunpack.c.h.b16 %v80
    %v355 = vunpack.c.l.b16 %v81
    %v356 = vunpack.c.h.b16 %v81
    %v357 = vunpack.c.l.b16 %v82
    %v358 = vunpack.c.h.b16 %v82
    %v359 = vunpack.c.l.b16 %v83
    %v360 = vunpack.c.h.b16 %v83
    %v361 = vunpack.c.l.b16 %v84
    %v362 = vunpack.c.h.b16 %v84
    %v363 = vunpack.c.l.b16 %v85
    %v364 = vunpack.c.h.b16 %v85
    %v365 = vunpack.c.l.b16 %v86
    %v366 = vunpack.c.h.b16 %v86
    %v367 = vunpack.c.l.b16 %v87
    %v368 = vunpack.c.h.b16 %v87
    %v369 = vunpack.c.l.b16 %v88
    %v370 = vunpack.c.h.b16 %v88
    %v371 = vunpack.c.l.b16 %v89
    %v372 = vunpack.c.h.b16 %v89
    %v373 = vunpack.c.l.b16 %v90
    %v374 = vunpack.c.h.b16 %v90
    %v375 = vunpack.c.l.b16 %v91
    %v376 = vunpack.c.h.b16 %v91
    %v377 = vunpack.c.l.b16 %v92
    %v378 = vunpack.c.h.b16 %v92
    %v379 = vunpack.c.l.b16 %v93
    %v380 = vunpack.c.h.b16 %v93
    %v381 = vunpack.c.l.b16 %v94
    %v382 = vunpack.c.h.b16 %v94
    %v383 = vunpack.c.l.b16 %v95
    %v384 = vunpack.c.h.b16 %v95
    %v385 = vunpack.c.l.b16 %v96
    %v386 = vunpack.c.h.b16 %v96
    %v387 = vunpack.c.l.b16 %v97
    %v388 = vunpack.c.h.b16 %v97
    %v389 = vunpack.c.l.b16 %v98
    %v390 = vunpack.c.h.b16 %v98
    %v391 = vunpack.c.l.b16 %v99
    %v392 = vunpack.c.h.b16 %v99
    %v393 = vunpack.c.l.b16 %v100
    %v394 = vunpack.c.h.b16 %v100
    %v395 = vunpack.c.l.b16 %v101
    %v396 = vunpack.c.h.b16 %v101
    %v397 = vunpack.c.l.b16 %v102
    %v398 = vunpack.c.h.b16 %v102
    %v399 = vunpack.c.l.b16 %v103
    %v400 = vunpack.c.h.b16 %v103
    %v401 = vunpack.c.l.b16 %v104
    %v402 = vunpack.c.h.b16 %v104
    %v403 = vunpack.c.l.b16 %v105
    %v404 = vunpack.c.h.b16 %v105
    %v405 = vunpack.c.l.b16 %v106
    %v406 = vunpack.c.h.b16 %v106
    %v407 = vunpack.c.l.b16 %v107
    %v408 = vunpack.c.h.b16 %v107
    %v409 = vunpack.c.l.b16 %v108
    %v410 = vunpack.c.h.b16 %v108
    %v411 = vunpack.c.l.b16 %v109
    %v412 = vunpack.c.h.b16 %v109
    %v413 = vunpack.c.l.b16 %v110
    %v414 = vunpack.c.h.b16 %v110
    %v415 = vpack.c.b16 %v265, %v255
    %v416 = vpack.c.b16 %v266, %v256
    %v417 = vpack.c.b16 %v267, %v257
    %v418 = vpack.c.b16 %v268, %v258
    %v419 = vpack.c.b16 %v269, %v259
    %v420 = vpack.c.b16 %v270, %v260
    %v421 = vpack.c.b16 %v271, %v261
    %v422 = vpack.c.b16 %v272, %v262
    %v423 = vpack.c.b16 %v273, %v263
    %v424 = vpack.c.b16 %v274, %v264
    %v425 = vpack.c.b16 %v285, %v275
    %v426 = vpack.c.b16 %v286, %v276
    %v427 = vpack.c.b16 %v287, %v277
    %v428 = vpack.c.b16 %v288, %v278
    %v429 = vpack.c.b16 %v289, %v279
    %v430 = vpack.c.b16 %v290, %v280
    %v431 = vpack.c.b16 %v291, %v281
    %v432 = vpack.c.b16 %v292, %v282
    %v433 = vpack.c.b16 %v293, %v283
    %v434 = vpack.c.b16 %v294, %v284
    %v435 = vpack.c.b16 %v305, %v295
    %v436 = vpack.c.b16 %v306, %v296
    %v437 = vpack.c.b16 %v307, %v297
    %v438 = vpack.c.b16 %v308, %v298
    %v439 = vpack.c.b16 %v309, %v299
    %v440 = vpack.c.b16 %v310, %v300
    %v441 = vpack.c.b16 %v311, %v301
    %v442 = vpack.c.b16 %v312, %v302
    %v443 = vpack.c.b16 %v313, %v303
    %v444 = vpack.c.b16 %v314, %v304
    %v445 = vpack.c.b16 %v325, %v315
    %v446 = vpack.c.b16 %v326, %v316
    %v447 = vpack.c.b16 %v327, %v317
    %v448 = vpack.c.b16 %v328, %v318
    %v449 = vpack.c.b16 %v329, %v319
    %v450 = vpack.c.b16 %v330, %v320
    %v451 = vpack.c.b16 %v331, %v321
    %v452 = vpack.c.b16 %v332, %v322
    %v453 = vpack.c.b16 %v333, %v323
    %v454 = vpack.c.b16 %v334, %v324
    %v455 = vpack.c.b16 %v345, %v335
    %v456 = vpack.c.b16 %v346, %v336
    %v457 = vpack.c.b16 %v347, %v337
    %v458 = vpack.c.b16 %v348, %v338
    %v459 = vpack.c.b16 %v349, %v339
    %v460 = vpack.c.b16 %v350, %v340
    %v461 = vpack.c.b16 %v351, %v341
    %v462 = vpack.c.b16 %v352, %v342
    %v463 = vpack.c.b16 %v353, %v343
    %v464 = vpack.c.b16 %v354, %v344
    %v465 = vpack.c.b16 %v365, %v355
    %v466 = vpack.c.b16 %v366, %v356
    %v467 = vpack.c.b16 %v367, %v357
    %v468 = vpack.c.b16 %v368, %v358
    %v469 = vpack.c.b16 %v369, %v359
    %v470 = vpack.c.b16 %v370, %v360
    %v471 = vpack.c.b16 %v371, %v361
    %v472 = vpack.c.b16 %v372, %v362
    %v473 = vpack.c.b16 %v373, %v363
    %v474 = vpack.c.b16 %v374, %v364
    %v475 = vpack.c.b16 %v385, %v375
    %v476 = vpack.c.b16 %v386, %v376
    %v477 = vpack.c.b16 %v387, %v377
    %v478 = vpack.c.b16 %v388, %v378
    %v479 = vpack.c.b16 %v389, %v379
    %v480 = vpack.c.b16 %v390, %v380
    %v481 = vpack.c.b16 %v391, %v381
    %v482 = vpack.c.b16 %v392, %v382
    %v483 = vpack.c.b16 %v393, %v383
    %v484 = vpack.c.b16 %v394, %v384
    %v485 = vpack.c.b16 %v405, %v395
    %v486 = vpack.c.b16 %v406, %v396
    %v487 = vpack.c.b16 %v407, %v397
    %v488 = vpack.c.b16 %v408, %v398
    %v489 = vpack.c.b16 %v409, %v399
    %v490 = vpack.c.b16 %v410, %v400
    %v491 = vpack.c.b16 %v411, %v401
    %v492 = vpack.c.b16 %v412, %v402
    %v493 = vpack.c.b16 %v413, %v403
    %v494 = vpack.c.b16 %v414, %v404
    %575 = vmatpush.bf16.msra.mxu0 %v485
    %576 = vmatpush.bf16.msra.mxu0 %v475
    %577 = vmatpush.bf16.msra.mxu0 %v465
    %578 = vmatpush.bf16.msra.mxu0 %v455
    %579 = vmatpush.bf16.msra.mxu0 %v445
    %580 = vmatpush.bf16.msra.mxu0 %v435
    %581 = vmatpush.bf16.msra.mxu0 %v425
    %582 = vmatpush.bf16.msra.mxu0 %v415
    %583 = vmatmul.bf16.gmra.mxu0 %v159
    %v584 = vpop.f32.mrf.mxu0
    %v585 = vadd.f32 0.0, %v584
    %v586 = vpop.f32.mrf.mxu0
    %v587 = vadd.f32 0.0, %v586
    %588 = vmatmul.bf16.gmra.mxu0 %v160
    %v589 = vpop.f32.mrf.mxu0
    %v590 = vadd.f32 0.0, %v589
    %v591 = vpop.f32.mrf.mxu0
    %v592 = vadd.f32 0.0, %v591
    %593 = vmatmul.bf16.gmra.mxu0 %v161
    %v594 = vpop.f32.mrf.mxu0
    %v595 = vadd.f32 0.0, %v594
    %v596 = vpop.f32.mrf.mxu0
    %v597 = vadd.f32 0.0, %v596
    %598 = vmatmul.bf16.gmra.mxu0 %v162
    %v599 = vpop.f32.mrf.mxu0
    %v600 = vadd.f32 0.0, %v599
    %v601 = vpop.f32.mrf.mxu0
    %v602 = vadd.f32 0.0, %v601
    %603 = vmatmul.bf16.gmra.mxu0 %v163
    %v604 = vpop.f32.mrf.mxu0
    %v605 = vadd.f32 0.0, %v604
    %v606 = vpop.f32.mrf.mxu0
    %v607 = vadd.f32 0.0, %v606
    %608 = vmatmul.bf16.gmra.mxu0 %v164
    %v609 = vpop.f32.mrf.mxu0
    %v610 = vadd.f32 0.0, %v609
    %v611 = vpop.f32.mrf.mxu0
    %v612 = vadd.f32 0.0, %v611
    %613 = vmatmul.bf16.gmra.mxu0 %v165
    %v614 = vpop.f32.mrf.mxu0
    %v615 = vadd.f32 0.0, %v614
    %v616 = vpop.f32.mrf.mxu0
    %v617 = vadd.f32 0.0, %v616
    %618 = vmatmul.bf16.gmra.mxu0 %v166
    %v619 = vpop.f32.mrf.mxu0
    %v620 = vadd.f32 0.0, %v619
    %v621 = vpop.f32.mrf.mxu0
    %v622 = vadd.f32 0.0, %v621
    %623 = vdwg.mxu0
    %624 = vmatpush.bf16.msra.mxu0 %v486
    %625 = vmatpush.bf16.msra.mxu0 %v476
    %626 = vmatpush.bf16.msra.mxu0 %v466
    %627 = vmatpush.bf16.msra.mxu0 %v456
    %628 = vmatpush.bf16.msra.mxu0 %v446
    %629 = vmatpush.bf16.msra.mxu0 %v436
    %630 = vmatpush.bf16.msra.mxu0 %v426
    %631 = vmatpush.bf16.msra.mxu0 %v416
    %632 = vmatmul.bf16.gmra.mxu0 %v159
    %v633 = vpop.f32.mrf.mxu0
    %v634 = vadd.f32 0.0, %v633
    %v635 = vpop.f32.mrf.mxu0
    %v636 = vadd.f32 0.0, %v635
    %637 = vmatmul.bf16.gmra.mxu0 %v160
    %v638 = vpop.f32.mrf.mxu0
    %v639 = vadd.f32 0.0, %v638
    %v640 = vpop.f32.mrf.mxu0
    %v641 = vadd.f32 0.0, %v640
    %642 = vmatmul.bf16.gmra.mxu0 %v161
    %v643 = vpop.f32.mrf.mxu0
    %v644 = vadd.f32 0.0, %v643
    %v645 = vpop.f32.mrf.mxu0
    %v646 = vadd.f32 0.0, %v645
    %647 = vmatmul.bf16.gmra.mxu0 %v162
    %v648 = vpop.f32.mrf.mxu0
    %v649 = vadd.f32 0.0, %v648
    %v650 = vpop.f32.mrf.mxu0
    %v651 = vadd.f32 0.0, %v650
    %652 = vmatmul.bf16.gmra.mxu0 %v163
    %v653 = vpop.f32.mrf.mxu0
    %v654 = vadd.f32 0.0, %v653
    %v655 = vpop.f32.mrf.mxu0
    %v656 = vadd.f32 0.0, %v655
    %657 = vmatmul.bf16.gmra.mxu0 %v164
    %v658 = vpop.f32.mrf.mxu0
    %v659 = vadd.f32 0.0, %v658
    %v660 = vpop.f32.mrf.mxu0
    %v661 = vadd.f32 0.0, %v660
    %662 = vmatmul.bf16.gmra.mxu0 %v165
    %v663 = vpop.f32.mrf.mxu0
    %v664 = vadd.f32 0.0, %v663
    %v665 = vpop.f32.mrf.mxu0
    %v666 = vadd.f32 0.0, %v665
    %667 = vmatmul.bf16.gmra.mxu0 %v166
    %v668 = vpop.f32.mrf.mxu0
    %v669 = vadd.f32 0.0, %v668
    %v670 = vpop.f32.mrf.mxu0
    %v671 = vadd.f32 0.0, %v670
    %672 = vdwg.mxu0
    %673 = vmatpush.bf16.msra.mxu0 %v487
    %674 = vmatpush.bf16.msra.mxu0 %v477
    %675 = vmatpush.bf16.msra.mxu0 %v467
    %676 = vmatpush.bf16.msra.mxu0 %v457
    %677 = vmatpush.bf16.msra.mxu0 %v447
    %678 = vmatpush.bf16.msra.mxu0 %v437
    %679 = vmatpush.bf16.msra.mxu0 %v427
    %680 = vmatpush.bf16.msra.mxu0 %v417
    %681 = vmatmul.bf16.gmra.mxu0 %v159
    %v682 = vpop.f32.mrf.mxu0
    %v683 = vadd.f32 0.0, %v682
    %v684 = vpop.f32.mrf.mxu0
    %v685 = vadd.f32 0.0, %v684
    %686 = vmatmul.bf16.gmra.mxu0 %v160
    %v687 = vpop.f32.mrf.mxu0
    %v688 = vadd.f32 0.0, %v687
    %v689 = vpop.f32.mrf.mxu0
    %v690 = vadd.f32 0.0, %v689
    %691 = vmatmul.bf16.gmra.mxu0 %v161
    %v692 = vpop.f32.mrf.mxu0
    %v693 = vadd.f32 0.0, %v692
    %v694 = vpop.f32.mrf.mxu0
    %v695 = vadd.f32 0.0, %v694
    %696 = vmatmul.bf16.gmra.mxu0 %v162
    %v697 = vpop.f32.mrf.mxu0
    %v698 = vadd.f32 0.0, %v697
    %v699 = vpop.f32.mrf.mxu0
    %v700 = vadd.f32 0.0, %v699
    %701 = vmatmul.bf16.gmra.mxu0 %v163
    %v702 = vpop.f32.mrf.mxu0
    %v703 = vadd.f32 0.0, %v702
    %v704 = vpop.f32.mrf.mxu0
    %v705 = vadd.f32 0.0, %v704
    %706 = vmatmul.bf16.gmra.mxu0 %v164
    %v707 = vpop.f32.mrf.mxu0
    %v708 = vadd.f32 0.0, %v707
    %v709 = vpop.f32.mrf.mxu0
    %v710 = vadd.f32 0.0, %v709
    %711 = vmatmul.bf16.gmra.mxu0 %v165
    %v712 = vpop.f32.mrf.mxu0
    %v713 = vadd.f32 0.0, %v712
    %v714 = vpop.f32.mrf.mxu0
    %v715 = vadd.f32 0.0, %v714
    %716 = vmatmul.bf16.gmra.mxu0 %v166
    %v717 = vpop.f32.mrf.mxu0
    %v718 = vadd.f32 0.0, %v717
    %v719 = vpop.f32.mrf.mxu0
    %v720 = vadd.f32 0.0, %v719
    %721 = vdwg.mxu0
    %722 = vmatpush.bf16.msra.mxu0 %v488
    %723 = vmatpush.bf16.msra.mxu0 %v478
    %724 = vmatpush.bf16.msra.mxu0 %v468
    %725 = vmatpush.bf16.msra.mxu0 %v458
    %726 = vmatpush.bf16.msra.mxu0 %v448
    %727 = vmatpush.bf16.msra.mxu0 %v438
    %728 = vmatpush.bf16.msra.mxu0 %v428
    %729 = vmatpush.bf16.msra.mxu0 %v418
    %730 = vmatmul.bf16.gmra.mxu0 %v159
    %v731 = vpop.f32.mrf.mxu0
    %v732 = vadd.f32 0.0, %v731
    %v733 = vpop.f32.mrf.mxu0
    %v734 = vadd.f32 0.0, %v733
    %735 = vmatmul.bf16.gmra.mxu0 %v160
    %v736 = vpop.f32.mrf.mxu0
    %v737 = vadd.f32 0.0, %v736
    %v738 = vpop.f32.mrf.mxu0
    %v739 = vadd.f32 0.0, %v738
    %740 = vmatmul.bf16.gmra.mxu0 %v161
    %v741 = vpop.f32.mrf.mxu0
    %v742 = vadd.f32 0.0, %v741
    %v743 = vpop.f32.mrf.mxu0
    %v744 = vadd.f32 0.0, %v743
    %745 = vmatmul.bf16.gmra.mxu0 %v162
    %v746 = vpop.f32.mrf.mxu0
    %v747 = vadd.f32 0.0, %v746
    %v748 = vpop.f32.mrf.mxu0
    %v749 = vadd.f32 0.0, %v748
    %750 = vmatmul.bf16.gmra.mxu0 %v163
    %v751 = vpop.f32.mrf.mxu0
    %v752 = vadd.f32 0.0, %v751
    %v753 = vpop.f32.mrf.mxu0
    %v754 = vadd.f32 0.0, %v753
    %755 = vmatmul.bf16.gmra.mxu0 %v164
    %v756 = vpop.f32.mrf.mxu0
    %v757 = vadd.f32 0.0, %v756
    %v758 = vpop.f32.mrf.mxu0
    %v759 = vadd.f32 0.0, %v758
    %760 = vmatmul.bf16.gmra.mxu0 %v165
    %v761 = vpop.f32.mrf.mxu0
    %v762 = vadd.f32 0.0, %v761
    %v763 = vpop.f32.mrf.mxu0
    %v764 = vadd.f32 0.0, %v763
    %765 = vmatmul.bf16.gmra.mxu0 %v166
    %v766 = vpop.f32.mrf.mxu0
    %v767 = vadd.f32 0.0, %v766
    %v768 = vpop.f32.mrf.mxu0
    %v769 = vadd.f32 0.0, %v768
    %770 = vdwg.mxu0
    %771 = vmatpush.bf16.msra.mxu0 %v489
    %772 = vmatpush.bf16.msra.mxu0 %v479
    %773 = vmatpush.bf16.msra.mxu0 %v469
    %774 = vmatpush.bf16.msra.mxu0 %v459
    %775 = vmatpush.bf16.msra.mxu0 %v449
    %776 = vmatpush.bf16.msra.mxu0 %v439
    %777 = vmatpush.bf16.msra.mxu0 %v429
    %778 = vmatpush.bf16.msra.mxu0 %v419
    %779 = vmatmul.bf16.gmra.mxu0 %v159
    %v780 = vpop.f32.mrf.mxu0
    %v781 = vadd.f32 0.0, %v780
    %v782 = vpop.f32.mrf.mxu0
    %v783 = vadd.f32 0.0, %v782
    %784 = vmatmul.bf16.gmra.mxu0 %v160
    %v785 = vpop.f32.mrf.mxu0
    %v786 = vadd.f32 0.0, %v785
    %v787 = vpop.f32.mrf.mxu0
    %v788 = vadd.f32 0.0, %v787
    %789 = vmatmul.bf16.gmra.mxu0 %v161
    %v790 = vpop.f32.mrf.mxu0
    %v791 = vadd.f32 0.0, %v790
    %v792 = vpop.f32.mrf.mxu0
    %v793 = vadd.f32 0.0, %v792
    %794 = vmatmul.bf16.gmra.mxu0 %v162
    %v795 = vpop.f32.mrf.mxu0
    %v796 = vadd.f32 0.0, %v795
    %v797 = vpop.f32.mrf.mxu0
    %v798 = vadd.f32 0.0, %v797
    %799 = vmatmul.bf16.gmra.mxu0 %v163
    %v800 = vpop.f32.mrf.mxu0
    %v801 = vadd.f32 0.0, %v800
    %v802 = vpop.f32.mrf.mxu0
    %v803 = vadd.f32 0.0, %v802
    %804 = vmatmul.bf16.gmra.mxu0 %v164
    %v805 = vpop.f32.mrf.mxu0
    %v806 = vadd.f32 0.0, %v805
    %v807 = vpop.f32.mrf.mxu0
    %v808 = vadd.f32 0.0, %v807
    %809 = vmatmul.bf16.gmra.mxu0 %v165
    %v810 = vpop.f32.mrf.mxu0
    %v811 = vadd.f32 0.0, %v810
    %v812 = vpop.f32.mrf.mxu0
    %v813 = vadd.f32 0.0, %v812
    %814 = vmatmul.bf16.gmra.mxu0 %v166
    %v815 = vpop.f32.mrf.mxu0
    %v816 = vadd.f32 0.0, %v815
    %v817 = vpop.f32.mrf.mxu0
    %v818 = vadd.f32 0.0, %v817
    %819 = vdwg.mxu0
    %820 = vmatpush.bf16.msra.mxu0 %v490
    %821 = vmatpush.bf16.msra.mxu0 %v480
    %822 = vmatpush.bf16.msra.mxu0 %v470
    %823 = vmatpush.bf16.msra.mxu0 %v460
    %824 = vmatpush.bf16.msra.mxu0 %v450
    %825 = vmatpush.bf16.msra.mxu0 %v440
    %826 = vmatpush.bf16.msra.mxu0 %v430
    %827 = vmatpush.bf16.msra.mxu0 %v420
    %828 = vmatmul.bf16.gmra.mxu0 %v159
    %v829 = vpop.f32.mrf.mxu0
    %v830 = vadd.f32 0.0, %v829
    %v831 = vpop.f32.mrf.mxu0
    %v832 = vadd.f32 0.0, %v831
    %833 = vmatmul.bf16.gmra.mxu0 %v160
    %v834 = vpop.f32.mrf.mxu0
    %v835 = vadd.f32 0.0, %v834
    %v836 = vpop.f32.mrf.mxu0
    %v837 = vadd.f32 0.0, %v836
    %838 = vmatmul.bf16.gmra.mxu0 %v161
    %v839 = vpop.f32.mrf.mxu0
    %v840 = vadd.f32 0.0, %v839
    %v841 = vpop.f32.mrf.mxu0
    %v842 = vadd.f32 0.0, %v841
    %843 = vmatmul.bf16.gmra.mxu0 %v162
    %v844 = vpop.f32.mrf.mxu0
    %v845 = vadd.f32 0.0, %v844
    %v846 = vpop.f32.mrf.mxu0
    %v847 = vadd.f32 0.0, %v846
    %848 = vmatmul.bf16.gmra.mxu0 %v163
    %v849 = vpop.f32.mrf.mxu0
    %v850 = vadd.f32 0.0, %v849
    %v851 = vpop.f32.mrf.mxu0
    %v852 = vadd.f32 0.0, %v851
    %853 = vmatmul.bf16.gmra.mxu0 %v164
    %v854 = vpop.f32.mrf.mxu0
    %v855 = vadd.f32 0.0, %v854
    %v856 = vpop.f32.mrf.mxu0
    %v857 = vadd.f32 0.0, %v856
    %858 = vmatmul.bf16.gmra.mxu0 %v165
    %v859 = vpop.f32.mrf.mxu0
    %v860 = vadd.f32 0.0, %v859
    %v861 = vpop.f32.mrf.mxu0
    %v862 = vadd.f32 0.0, %v861
    %863 = vmatmul.bf16.gmra.mxu0 %v166
    %v864 = vpop.f32.mrf.mxu0
    %v865 = vadd.f32 0.0, %v864
    %v866 = vpop.f32.mrf.mxu0
    %v867 = vadd.f32 0.0, %v866
    %868 = vdwg.mxu0
    %869 = vmatpush.bf16.msra.mxu0 %v491
    %870 = vmatpush.bf16.msra.mxu0 %v481
    %871 = vmatpush.bf16.msra.mxu0 %v471
    %872 = vmatpush.bf16.msra.mxu0 %v461
    %873 = vmatpush.bf16.msra.mxu0 %v451
    %874 = vmatpush.bf16.msra.mxu0 %v441
    %875 = vmatpush.bf16.msra.mxu0 %v431
    %876 = vmatpush.bf16.msra.mxu0 %v421
    %877 = vmatmul.bf16.gmra.mxu0 %v159
    %v878 = vpop.f32.mrf.mxu0
    %v879 = vadd.f32 0.0, %v878
    %v880 = vpop.f32.mrf.mxu0
    %v881 = vadd.f32 0.0, %v880
    %882 = vmatmul.bf16.gmra.mxu0 %v160
    %v883 = vpop.f32.mrf.mxu0
    %v884 = vadd.f32 0.0, %v883
    %v885 = vpop.f32.mrf.mxu0
    %v886 = vadd.f32 0.0, %v885
    %887 = vmatmul.bf16.gmra.mxu0 %v161
    %v888 = vpop.f32.mrf.mxu0
    %v889 = vadd.f32 0.0, %v888
    %v890 = vpop.f32.mrf.mxu0
    %v891 = vadd.f32 0.0, %v890
    %892 = vmatmul.bf16.gmra.mxu0 %v162
    %v893 = vpop.f32.mrf.mxu0
    %v894 = vadd.f32 0.0, %v893
    %v895 = vpop.f32.mrf.mxu0
    %v896 = vadd.f32 0.0, %v895
    %897 = vmatmul.bf16.gmra.mxu0 %v163
    %v898 = vpop.f32.mrf.mxu0
    %v899 = vadd.f32 0.0, %v898
    %v900 = vpop.f32.mrf.mxu0
    %v901 = vadd.f32 0.0, %v900
    %902 = vmatmul.bf16.gmra.mxu0 %v164
    %v903 = vpop.f32.mrf.mxu0
    %v904 = vadd.f32 0.0, %v903
    %v905 = vpop.f32.mrf.mxu0
    %v906 = vadd.f32 0.0, %v905
    %907 = vmatmul.bf16.gmra.mxu0 %v165
    %v908 = vpop.f32.mrf.mxu0
    %v909 = vadd.f32 0.0, %v908
    %v910 = vpop.f32.mrf.mxu0
    %v911 = vadd.f32 0.0, %v910
    %912 = vmatmul.bf16.gmra.mxu0 %v166
    %v913 = vpop.f32.mrf.mxu0
    %v914 = vadd.f32 0.0, %v913
    %v915 = vpop.f32.mrf.mxu0
    %v916 = vadd.f32 0.0, %v915
    %917 = vdwg.mxu0
    %918 = vmatpush.bf16.msra.mxu0 %v492
    %919 = vmatpush.bf16.msra.mxu0 %v482
    %920 = vmatpush.bf16.msra.mxu0 %v472
    %921 = vmatpush.bf16.msra.mxu0 %v462
    %922 = vmatpush.bf16.msra.mxu0 %v452
    %923 = vmatpush.bf16.msra.mxu0 %v442
    %924 = vmatpush.bf16.msra.mxu0 %v432
    %925 = vmatpush.bf16.msra.mxu0 %v422
    %926 = vmatmul.bf16.gmra.mxu0 %v159
    %v927 = vpop.f32.mrf.mxu0
    %v928 = vadd.f32 0.0, %v927
    %v929 = vpop.f32.mrf.mxu0
    %v930 = vadd.f32 0.0, %v929
    %931 = vmatmul.bf16.gmra.mxu0 %v160
    %v932 = vpop.f32.mrf.mxu0
    %v933 = vadd.f32 0.0, %v932
    %v934 = vpop.f32.mrf.mxu0
    %v935 = vadd.f32 0.0, %v934
    %936 = vmatmul.bf16.gmra.mxu0 %v161
    %v937 = vpop.f32.mrf.mxu0
    %v938 = vadd.f32 0.0, %v937
    %v939 = vpop.f32.mrf.mxu0
    %v940 = vadd.f32 0.0, %v939
    %941 = vmatmul.bf16.gmra.mxu0 %v162
    %v942 = vpop.f32.mrf.mxu0
    %v943 = vadd.f32 0.0, %v942
    %v944 = vpop.f32.mrf.mxu0
    %v945 = vadd.f32 0.0, %v944
    %946 = vmatmul.bf16.gmra.mxu0 %v163
    %v947 = vpop.f32.mrf.mxu0
    %v948 = vadd.f32 0.0, %v947
    %v949 = vpop.f32.mrf.mxu0
    %v950 = vadd.f32 0.0, %v949
    %951 = vmatmul.bf16.gmra.mxu0 %v164
    %v952 = vpop.f32.mrf.mxu0
    %v953 = vadd.f32 0.0, %v952
    %v954 = vpop.f32.mrf.mxu0
    %v955 = vadd.f32 0.0, %v954
    %956 = vmatmul.bf16.gmra.mxu0 %v165
    %v957 = vpop.f32.mrf.mxu0
    %v958 = vadd.f32 0.0, %v957
    %v959 = vpop.f32.mrf.mxu0
    %v960 = vadd.f32 0.0, %v959
    %961 = vmatmul.bf16.gmra.mxu0 %v166
    %v962 = vpop.f32.mrf.mxu0
    %v963 = vadd.f32 0.0, %v962
    %v964 = vpop.f32.mrf.mxu0
    %v965 = vadd.f32 0.0, %v964
    %966 = vdwg.mxu0
    %967 = vmatpush.bf16.msra.mxu0 %v493
    %968 = vmatpush.bf16.msra.mxu0 %v483
    %969 = vmatpush.bf16.msra.mxu0 %v473
    %970 = vmatpush.bf16.msra.mxu0 %v463
    %971 = vmatpush.bf16.msra.mxu0 %v453
    %972 = vmatpush.bf16.msra.mxu0 %v443
    %973 = vmatpush.bf16.msra.mxu0 %v433
    %974 = vmatpush.bf16.msra.mxu0 %v423
    %975 = vmatmul.bf16.gmra.mxu0 %v159
    %v976 = vpop.f32.mrf.mxu0
    %v977 = vadd.f32 0.0, %v976
    %v978 = vpop.f32.mrf.mxu0
    %v979 = vadd.f32 0.0, %v978
    %980 = vmatmul.bf16.gmra.mxu0 %v160
    %v981 = vpop.f32.mrf.mxu0
    %v982 = vadd.f32 0.0, %v981
    %v983 = vpop.f32.mrf.mxu0
    %v984 = vadd.f32 0.0, %v983
    %985 = vmatmul.bf16.gmra.mxu0 %v161
    %v986 = vpop.f32.mrf.mxu0
    %v987 = vadd.f32 0.0, %v986
    %v988 = vpop.f32.mrf.mxu0
    %v989 = vadd.f32 0.0, %v988
    %990 = vmatmul.bf16.gmra.mxu0 %v162
    %v991 = vpop.f32.mrf.mxu0
    %v992 = vadd.f32 0.0, %v991
    %v993 = vpop.f32.mrf.mxu0
    %v994 = vadd.f32 0.0, %v993
    %995 = vmatmul.bf16.gmra.mxu0 %v163
    %v996 = vpop.f32.mrf.mxu0
    %v997 = vadd.f32 0.0, %v996
    %v998 = vpop.f32.mrf.mxu0
    %v999 = vadd.f32 0.0, %v998
    %1000 = vmatmul.bf16.gmra.mxu0 %v164
    %v1001 = vpop.f32.mrf.mxu0
    %v1002 = vadd.f32 0.0, %v1001
    %v1003 = vpop.f32.mrf.mxu0
    %v1004 = vadd.f32 0.0, %v1003
    %1005 = vmatmul.bf16.gmra.mxu0 %v165
    %v1006 = vpop.f32.mrf.mxu0
    %v1007 = vadd.f32 0.0, %v1006
    %v1008 = vpop.f32.mrf.mxu0
    %v1009 = vadd.f32 0.0, %v1008
    %1010 = vmatmul.bf16.gmra.mxu0 %v166
    %v1011 = vpop.f32.mrf.mxu0
    %v1012 = vadd.f32 0.0, %v1011
    %v1013 = vpop.f32.mrf.mxu0
    %v1014 = vadd.f32 0.0, %v1013
    %1015 = vdwg.mxu0
    %1016 = vmatpush.bf16.msra.mxu0 %v494
    %1017 = vmatpush.bf16.msra.mxu0 %v484
    %1018 = vmatpush.bf16.msra.mxu0 %v474
    %1019 = vmatpush.bf16.msra.mxu0 %v464
    %1020 = vmatpush.bf16.msra.mxu0 %v454
    %1021 = vmatpush.bf16.msra.mxu0 %v444
    %1022 = vmatpush.bf16.msra.mxu0 %v434
    %1023 = vmatpush.bf16.msra.mxu0 %v424
    %1024 = vmatmul.bf16.gmra.mxu0 %v159
    %v1025 = vpop.f32.mrf.mxu0
    %v1026 = vadd.f32 0.0, %v1025
    %v1027 = vpop.f32.mrf.mxu0
    %v1028 = vadd.f32 0.0, %v1027
    %1029 = vmatmul.bf16.gmra.mxu0 %v160
    %v1030 = vpop.f32.mrf.mxu0
    %v1031 = vadd.f32 0.0, %v1030
    %v1032 = vpop.f32.mrf.mxu0
    %v1033 = vadd.f32 0.0, %v1032
    %1034 = vmatmul.bf16.gmra.mxu0 %v161
    %v1035 = vpop.f32.mrf.mxu0
    %v1036 = vadd.f32 0.0, %v1035
    %v1037 = vpop.f32.mrf.mxu0
    %v1038 = vadd.f32 0.0, %v1037
    %1039 = vmatmul.bf16.gmra.mxu0 %v162
    %v1040 = vpop.f32.mrf.mxu0
    %v1041 = vadd.f32 0.0, %v1040
    %v1042 = vpop.f32.mrf.mxu0
    %v1043 = vadd.f32 0.0, %v1042
    %1044 = vmatmul.bf16.gmra.mxu0 %v163
    %v1045 = vpop.f32.mrf.mxu0
    %v1046 = vadd.f32 0.0, %v1045
    %v1047 = vpop.f32.mrf.mxu0
    %v1048 = vadd.f32 0.0, %v1047
    %1049 = vmatmul.bf16.gmra.mxu0 %v164
    %v1050 = vpop.f32.mrf.mxu0
    %v1051 = vadd.f32 0.0, %v1050
    %v1052 = vpop.f32.mrf.mxu0
    %v1053 = vadd.f32 0.0, %v1052
    %1054 = vmatmul.bf16.gmra.mxu0 %v165
    %v1055 = vpop.f32.mrf.mxu0
    %v1056 = vadd.f32 0.0, %v1055
    %v1057 = vpop.f32.mrf.mxu0
    %v1058 = vadd.f32 0.0, %v1057
    %1059 = vmatmul.bf16.gmra.mxu0 %v166
    %v1060 = vpop.f32.mrf.mxu0
    %v1061 = vadd.f32 0.0, %v1060
    %v1062 = vpop.f32.mrf.mxu0
    %v1063 = vadd.f32 0.0, %v1062
    %1064 = vdwg.mxu0
    %1065 = vst [vmem:[#allocation2] sm:$0xff] %v585
    %1066 = vst [vmem:[#allocation2 + $0x8] sm:$0xff] %v634
    %1067 = vst [vmem:[#allocation2 + $0x10] sm:$0xff] %v683
    %1068 = vst [vmem:[#allocation2 + $0x18] sm:$0xff] %v732
    %1069 = vst [vmem:[#allocation2 + $0x20] sm:$0xff] %v781
    %1070 = vst [vmem:[#allocation2 + $0x28] sm:$0xff] %v830
    %1071 = vst [vmem:[#allocation2 + $0x30] sm:$0xff] %v879
    %1072 = vst [vmem:[#allocation2 + $0x38] sm:$0xff] %v928
    %1073 = vst [vmem:[#allocation2 + $0x40] sm:$0xff] %v977
    %1074 = vst [vmem:[#allocation2 + $0x48] sm:$0xff] %v1026
    %1075 = vst [vmem:[#allocation2 + $0x50] sm:$0xff] %v587
    %1076 = vst [vmem:[#allocation2 + $0x58] sm:$0xff] %v636
    %1077 = vst [vmem:[#allocation2 + $0x60] sm:$0xff] %v685
    %1078 = vst [vmem:[#allocation2 + $0x68] sm:$0xff] %v734
    %1079 = vst [vmem:[#allocation2 + $0x70] sm:$0xff] %v783
    %1080 = vst [vmem:[#allocation2 + $0x78] sm:$0xff] %v832
    %1081 = vst [vmem:[#allocation2 + $0x80] sm:$0xff] %v881
    %1082 = vst [vmem:[#allocation2 + $0x88] sm:$0xff] %v930
    %1083 = vst [vmem:[#allocation2 + $0x90] sm:$0xff] %v979
    %1084 = vst [vmem:[#allocation2 + $0x98] sm:$0xff] %v1028
    %1085 = vst [vmem:[#allocation2 + $0xa0] sm:$0xff] %v590
    %1086 = vst [vmem:[#allocation2 + $0xa8] sm:$0xff] %v639
    %1087 = vst [vmem:[#allocation2 + $0xb0] sm:$0xff] %v688
    %1088 = vst [vmem:[#allocation2 + $0xb8] sm:$0xff] %v737
    %1089 = vst [vmem:[#allocation2 + $0xc0] sm:$0xff] %v786
    %1090 = vst [vmem:[#allocation2 + $0xc8] sm:$0xff] %v835
    %1091 = vst [vmem:[#allocation2 + $0xd0] sm:$0xff] %v884
    %1092 = vst [vmem:[#allocation2 + $0xd8] sm:$0xff] %v933
    %1093 = vst [vmem:[#allocation2 + $0xe0] sm:$0xff] %v982
    %1094 = vst [vmem:[#allocation2 + $0xe8] sm:$0xff] %v1031
    %1095 = vst [vmem:[#allocation2 + $0xf0] sm:$0xff] %v592
    %1096 = vst [vmem:[#allocation2 + $0xf8] sm:$0xff] %v641
    %1097 = vst [vmem:[#allocation2 + $0x100] sm:$0xff] %v690
    %1098 = vst [vmem:[#allocation2 + $0x108] sm:$0xff] %v739
    %1099 = vst [vmem:[#allocation2 + $0x110] sm:$0xff] %v788
    %1100 = vst [vmem:[#allocation2 + $0x118] sm:$0xff] %v837
    %1101 = vst [vmem:[#allocation2 + $0x120] sm:$0xff] %v886
    %1102 = vst [vmem:[#allocation2 + $0x128] sm:$0xff] %v935
    %1103 = vst [vmem:[#allocation2 + $0x130] sm:$0xff] %v984
    %1104 = vst [vmem:[#allocation2 + $0x138] sm:$0xff] %v1033
    %1105 = vst [vmem:[#allocation2 + $0x140] sm:$0xff] %v595
    %1106 = vst [vmem:[#allocation2 + $0x148] sm:$0xff] %v644
    %1107 = vst [vmem:[#allocation2 + $0x150] sm:$0xff] %v693
    %1108 = vst [vmem:[#allocation2 + $0x158] sm:$0xff] %v742
    %1109 = vst [vmem:[#allocation2 + $0x160] sm:$0xff] %v791
    %1110 = vst [vmem:[#allocation2 + $0x168] sm:$0xff] %v840
    %1111 = vst [vmem:[#allocation2 + $0x170] sm:$0xff] %v889
    %1112 = vst [vmem:[#allocation2 + $0x178] sm:$0xff] %v938
    %1113 = vst [vmem:[#allocation2 + $0x180] sm:$0xff] %v987
    %1114 = vst [vmem:[#allocation2 + $0x188] sm:$0xff] %v1036
    %1115 = vst [vmem:[#allocation2 + $0x190] sm:$0xff] %v597
    %1116 = vst [vmem:[#allocation2 + $0x198] sm:$0xff] %v646
    %1117 = vst [vmem:[#allocation2 + $0x1a0] sm:$0xff] %v695
    %1118 = vst [vmem:[#allocation2 + $0x1a8] sm:$0xff] %v744
    %1119 = vst [vmem:[#allocation2 + $0x1b0] sm:$0xff] %v793
    %1120 = vst [vmem:[#allocation2 + $0x1b8] sm:$0xff] %v842
    %1121 = vst [vmem:[#allocation2 + $0x1c0] sm:$0xff] %v891
    %1122 = vst [vmem:[#allocation2 + $0x1c8] sm:$0xff] %v940
    %1123 = vst [vmem:[#allocation2 + $0x1d0] sm:$0xff] %v989
    %1124 = vst [vmem:[#allocation2 + $0x1d8] sm:$0xff] %v1038
    %1125 = vst [vmem:[#allocation2 + $0x1e0] sm:$0xff] %v600
    %1126 = vst [vmem:[#allocation2 + $0x1e8] sm:$0xff] %v649
    %1127 = vst [vmem:[#allocation2 + $0x1f0] sm:$0xff] %v698
    %1128 = vst [vmem:[#allocation2 + $0x1f8] sm:$0xff] %v747
    %1129 = vst [vmem:[#allocation2 + $0x200] sm:$0xff] %v796
    %1130 = vst [vmem:[#allocation2 + $0x208] sm:$0xff] %v845
    %1131 = vst [vmem:[#allocation2 + $0x210] sm:$0xff] %v894
    %1132 = vst [vmem:[#allocation2 + $0x218] sm:$0xff] %v943
    %1133 = vst [vmem:[#allocation2 + $0x220] sm:$0xff] %v992
    %1134 = vst [vmem:[#allocation2 + $0x228] sm:$0xff] %v1041
    %1135 = vst [vmem:[#allocation2 + $0x230] sm:$0xff] %v602
    %1136 = vst [vmem:[#allocation2 + $0x238] sm:$0xff] %v651
    %1137 = vst [vmem:[#allocation2 + $0x240] sm:$0xff] %v700
    %1138 = vst [vmem:[#allocation2 + $0x248] sm:$0xff] %v749
    %1139 = vst [vmem:[#allocation2 + $0x250] sm:$0xff] %v798
    %1140 = vst [vmem:[#allocation2 + $0x258] sm:$0xff] %v847
    %1141 = vst [vmem:[#allocation2 + $0x260] sm:$0xff] %v896
    %1142 = vst [vmem:[#allocation2 + $0x268] sm:$0xff] %v945
    %1143 = vst [vmem:[#allocation2 + $0x270] sm:$0xff] %v994
    %1144 = vst [vmem:[#allocation2 + $0x278] sm:$0xff] %v1043
    %1145 = vst [vmem:[#allocation2 + $0x280] sm:$0xff] %v605
    %1146 = vst [vmem:[#allocation2 + $0x288] sm:$0xff] %v654
    %1147 = vst [vmem:[#allocation2 + $0x290] sm:$0xff] %v703
    %1148 = vst [vmem:[#allocation2 + $0x298] sm:$0xff] %v752
    %1149 = vst [vmem:[#allocation2 + $0x2a0] sm:$0xff] %v801
    %1150 = vst [vmem:[#allocation2 + $0x2a8] sm:$0xff] %v850
    %1151 = vst [vmem:[#allocation2 + $0x2b0] sm:$0xff] %v899
    %1152 = vst [vmem:[#allocation2 + $0x2b8] sm:$0xff] %v948
    %1153 = vst [vmem:[#allocation2 + $0x2c0] sm:$0xff] %v997
    %1154 = vst [vmem:[#allocation2 + $0x2c8] sm:$0xff] %v1046
    %1155 = vst [vmem:[#allocation2 + $0x2d0] sm:$0xff] %v607
    %1156 = vst [vmem:[#allocation2 + $0x2d8] sm:$0xff] %v656
    %1157 = vst [vmem:[#allocation2 + $0x2e0] sm:$0xff] %v705
    %1158 = vst [vmem:[#allocation2 + $0x2e8] sm:$0xff] %v754
    %1159 = vst [vmem:[#allocation2 + $0x2f0] sm:$0xff] %v803
    %1160 = vst [vmem:[#allocation2 + $0x2f8] sm:$0xff] %v852
    %1161 = vst [vmem:[#allocation2 + $0x300] sm:$0xff] %v901
    %1162 = vst [vmem:[#allocation2 + $0x308] sm:$0xff] %v950
    %1163 = vst [vmem:[#allocation2 + $0x310] sm:$0xff] %v999
    %1164 = vst [vmem:[#allocation2 + $0x318] sm:$0xff] %v1048
    %1165 = vst [vmem:[#allocation2 + $0x320] sm:$0xff] %v610
    %1166 = vst [vmem:[#allocation2 + $0x328] sm:$0xff] %v659
    %1167 = vst [vmem:[#allocation2 + $0x330] sm:$0xff] %v708
    %1168 = vst [vmem:[#allocation2 + $0x338] sm:$0xff] %v757
    %1169 = vst [vmem:[#allocation2 + $0x340] sm:$0xff] %v806
    %1170 = vst [vmem:[#allocation2 + $0x348] sm:$0xff] %v855
    %1171 = vst [vmem:[#allocation2 + $0x350] sm:$0xff] %v904
    %1172 = vst [vmem:[#allocation2 + $0x358] sm:$0xff] %v953
    %1173 = vst [vmem:[#allocation2 + $0x360] sm:$0xff] %v1002
    %1174 = vst [vmem:[#allocation2 + $0x368] sm:$0xff] %v1051
    %1175 = vst [vmem:[#allocation2 + $0x370] sm:$0xff] %v612
    %1176 = vst [vmem:[#allocation2 + $0x378] sm:$0xff] %v661
    %1177 = vst [vmem:[#allocation2 + $0x380] sm:$0xff] %v710
    %1178 = vst [vmem:[#allocation2 + $0x388] sm:$0xff] %v759
    %1179 = vst [vmem:[#allocation2 + $0x390] sm:$0xff] %v808
    %1180 = vst [vmem:[#allocation2 + $0x398] sm:$0xff] %v857
    %1181 = vst [vmem:[#allocation2 + $0x3a0] sm:$0xff] %v906
    %1182 = vst [vmem:[#allocation2 + $0x3a8] sm:$0xff] %v955
    %1183 = vst [vmem:[#allocation2 + $0x3b0] sm:$0xff] %v1004
    %1184 = vst [vmem:[#allocation2 + $0x3b8] sm:$0xff] %v1053
    %1185 = vst [vmem:[#allocation2 + $0x3c0] sm:$0xff] %v615
    %1186 = vst [vmem:[#allocation2 + $0x3c8] sm:$0xff] %v664
    %1187 = vst [vmem:[#allocation2 + $0x3d0] sm:$0xff] %v713
    %1188 = vst [vmem:[#allocation2 + $0x3d8] sm:$0xff] %v762
    %1189 = vst [vmem:[#allocation2 + $0x3e0] sm:$0xff] %v811
    %1190 = vst [vmem:[#allocation2 + $0x3e8] sm:$0xff] %v860
    %1191 = vst [vmem:[#allocation2 + $0x3f0] sm:$0xff] %v909
    %1192 = vst [vmem:[#allocation2 + $0x3f8] sm:$0xff] %v958
    %1193 = vst [vmem:[#allocation2 + $0x400] sm:$0xff] %v1007
    %1194 = vst [vmem:[#allocation2 + $0x408] sm:$0xff] %v1056
    %1195 = vst [vmem:[#allocation2 + $0x410] sm:$0xff] %v617
    %1196 = vst [vmem:[#allocation2 + $0x418] sm:$0xff] %v666
    %1197 = vst [vmem:[#allocation2 + $0x420] sm:$0xff] %v715
    %1198 = vst [vmem:[#allocation2 + $0x428] sm:$0xff] %v764
    %1199 = vst [vmem:[#allocation2 + $0x430] sm:$0xff] %v813
    %1200 = vst [vmem:[#allocation2 + $0x438] sm:$0xff] %v862
    %1201 = vst [vmem:[#allocation2 + $0x440] sm:$0xff] %v911
    %1202 = vst [vmem:[#allocation2 + $0x448] sm:$0xff] %v960
    %1203 = vst [vmem:[#allocation2 + $0x450] sm:$0xff] %v1009
    %1204 = vst [vmem:[#allocation2 + $0x458] sm:$0xff] %v1058
    %1205 = vst [vmem:[#allocation2 + $0x460] sm:$0xff] %v620
    %1206 = vst [vmem:[#allocation2 + $0x468] sm:$0xff] %v669
    %1207 = vst [vmem:[#allocation2 + $0x470] sm:$0xff] %v718
    %1208 = vst [vmem:[#allocation2 + $0x478] sm:$0xff] %v767
    %1209 = vst [vmem:[#allocation2 + $0x480] sm:$0xff] %v816
    %1210 = vst [vmem:[#allocation2 + $0x488] sm:$0xff] %v865
    %1211 = vst [vmem:[#allocation2 + $0x490] sm:$0xff] %v914
    %1212 = vst [vmem:[#allocation2 + $0x498] sm:$0xff] %v963
    %1213 = vst [vmem:[#allocation2 + $0x4a0] sm:$0xff] %v1012
    %1214 = vst [vmem:[#allocation2 + $0x4a8] sm:$0xff] %v1061
    %1215 = vst [vmem:[#allocation2 + $0x4b0] sm:$0xff] %v622
    %1216 = vst [vmem:[#allocation2 + $0x4b8] sm:$0xff] %v671
    %1217 = vst [vmem:[#allocation2 + $0x4c0] sm:$0xff] %v720
    %1218 = vst [vmem:[#allocation2 + $0x4c8] sm:$0xff] %v769
    %1219 = vst [vmem:[#allocation2 + $0x4d0] sm:$0xff] %v818
    %1220 = vst [vmem:[#allocation2 + $0x4d8] sm:$0xff] %v867
    %1221 = vst [vmem:[#allocation2 + $0x4e0] sm:$0xff] %v916
    %1222 = vst [vmem:[#allocation2 + $0x4e8] sm:$0xff] %v965
    %1223 = vst [vmem:[#allocation2 + $0x4f0] sm:$0xff] %v1014
    %1224 = vst [vmem:[#allocation2 + $0x4f8] sm:$0xff] %v1063
    %v1225 = vld [vmem:[%s1] sm:$0xf]
    %v1226 = vld [vmem:[%s1 + $0x4] sm:$0xf]
    %v1227 = vld [vmem:[%s1 + $0x8] sm:$0xf]
    %v1228 = vld [vmem:[%s1 + $0xc] sm:$0xf]
    %v1229 = vld [vmem:[%s1 + $0x10] sm:$0xf]
    %v1230 = vld [vmem:[%s1 + $0x14] sm:$0xf]
    %v1231 = vld [vmem:[%s1 + $0x18] sm:$0xf]
    %v1232 = vld [vmem:[%s1 + $0x1c] sm:$0xf]
    %v1233 = vld [vmem:[%s1 + $0x20] sm:$0xf]
    %v1234 = vld [vmem:[%s1 + $0x24] sm:$0xf]
    %v1235 = vld [vmem:[%s1 + $0x28] sm:$0xf]
    %v1236 = vld [vmem:[%s1 + $0x2c] sm:$0xf]
    %v1237 = vld [vmem:[%s1 + $0x30] sm:$0xf]
    %v1238 = vld [vmem:[%s1 + $0x34] sm:$0xf]
    %v1239 = vld [vmem:[%s1 + $0x38] sm:$0xf]
    %v1240 = vld [vmem:[%s1 + $0x3c] sm:$0xf]
    %v1257 = vunpack.c.l.b16 %v1225
    %v1258 = vunpack.c.l.b16 %v1226
    %v1259 = vunpack.c.l.b16 %v1227
    %v1260 = vunpack.c.l.b16 %v1228
    %v1261 = vunpack.c.l.b16 %v1229
    %v1262 = vunpack.c.l.b16 %v1230
    %v1263 = vunpack.c.l.b16 %v1231
    %v1264 = vunpack.c.l.b16 %v1232
    %v1265 = vunpack.c.l.b16 %v1233
    %v1266 = vunpack.c.l.b16 %v1234
    %v1267 = vunpack.c.l.b16 %v1235
    %v1268 = vunpack.c.l.b16 %v1236
    %v1269 = vunpack.c.l.b16 %v1237
    %v1270 = vunpack.c.l.b16 %v1238
    %v1271 = vunpack.c.l.b16 %v1239
    %v1272 = vunpack.c.l.b16 %v1240
    %v1273 = vpack.c.b16 %v1258, %v1257
    %v1274 = vpack.c.b16 %v1260, %v1259
    %v1275 = vpack.c.b16 %v1262, %v1261
    %v1276 = vpack.c.b16 %v1264, %v1263
    %v1277 = vpack.c.b16 %v1266, %v1265
    %v1278 = vpack.c.b16 %v1268, %v1267
    %v1279 = vpack.c.b16 %v1270, %v1269
    %v1280 = vpack.c.b16 %v1272, %v1271
    %1289 = vmatpush.bf16.msra.mxu0 %v485
    %1290 = vmatpush.bf16.msra.mxu0 %v475
    %1291 = vmatpush.bf16.msra.mxu0 %v465
    %1292 = vmatpush.bf16.msra.mxu0 %v455
    %1293 = vmatpush.bf16.msra.mxu0 %v445
    %1294 = vmatpush.bf16.msra.mxu0 %v435
    %1295 = vmatpush.bf16.msra.mxu0 %v425
    %1296 = vmatpush.bf16.msra.mxu0 %v415
    %1297 = vmatmul.bf16.gmra.mxu0 %v1273
    %v1298 = vpop.f32.mrf.mxu0
    %v1299 = vadd.f32 0.0, %v1298
    %v1300 = vpop.f32.mrf.mxu0
    %v1301 = vadd.f32 0.0, %v1300
    %1302 = vmatmul.bf16.gmra.mxu0 %v1274
    %v1303 = vpop.f32.mrf.mxu0
    %v1304 = vadd.f32 0.0, %v1303
    %v1305 = vpop.f32.mrf.mxu0
    %v1306 = vadd.f32 0.0, %v1305
    %1307 = vmatmul.bf16.gmra.mxu0 %v1275
    %v1308 = vpop.f32.mrf.mxu0
    %v1309 = vadd.f32 0.0, %v1308
    %v1310 = vpop.f32.mrf.mxu0
    %v1311 = vadd.f32 0.0, %v1310
    %1312 = vmatmul.bf16.gmra.mxu0 %v1276
    %v1313 = vpop.f32.mrf.mxu0
    %v1314 = vadd.f32 0.0, %v1313
    %v1315 = vpop.f32.mrf.mxu0
    %v1316 = vadd.f32 0.0, %v1315
    %1317 = vmatmul.bf16.gmra.mxu0 %v1277
    %v1318 = vpop.f32.mrf.mxu0
    %v1319 = vadd.f32 0.0, %v1318
    %v1320 = vpop.f32.mrf.mxu0
    %v1321 = vadd.f32 0.0, %v1320
    %1322 = vmatmul.bf16.gmra.mxu0 %v1278
    %v1323 = vpop.f32.mrf.mxu0
    %v1324 = vadd.f32 0.0, %v1323
    %v1325 = vpop.f32.mrf.mxu0
    %v1326 = vadd.f32 0.0, %v1325
    %1327 = vmatmul.bf16.gmra.mxu0 %v1279
    %v1328 = vpop.f32.mrf.mxu0
    %v1329 = vadd.f32 0.0, %v1328
    %v1330 = vpop.f32.mrf.mxu0
    %v1331 = vadd.f32 0.0, %v1330
    %1332 = vmatmul.bf16.gmra.mxu0 %v1280
    %v1333 = vpop.f32.mrf.mxu0
    %v1334 = vadd.f32 0.0, %v1333
    %v1335 = vpop.f32.mrf.mxu0
    %v1336 = vadd.f32 0.0, %v1335
    %1337 = vdwg.mxu0
    %1338 = vmatpush.bf16.msra.mxu0 %v486
    %1339 = vmatpush.bf16.msra.mxu0 %v476
    %1340 = vmatpush.bf16.msra.mxu0 %v466
    %1341 = vmatpush.bf16.msra.mxu0 %v456
    %1342 = vmatpush.bf16.msra.mxu0 %v446
    %1343 = vmatpush.bf16.msra.mxu0 %v436
    %1344 = vmatpush.bf16.msra.mxu0 %v426
    %1345 = vmatpush.bf16.msra.mxu0 %v416
    %1346 = vmatmul.bf16.gmra.mxu0 %v1273
    %v1347 = vpop.f32.mrf.mxu0
    %v1348 = vadd.f32 0.0, %v1347
    %v1349 = vpop.f32.mrf.mxu0
    %v1350 = vadd.f32 0.0, %v1349
    %1351 = vmatmul.bf16.gmra.mxu0 %v1274
    %v1352 = vpop.f32.mrf.mxu0
    %v1353 = vadd.f32 0.0, %v1352
    %v1354 = vpop.f32.mrf.mxu0
    %v1355 = vadd.f32 0.0, %v1354
    %1356 = vmatmul.bf16.gmra.mxu0 %v1275
    %v1357 = vpop.f32.mrf.mxu0
    %v1358 = vadd.f32 0.0, %v1357
    %v1359 = vpop.f32.mrf.mxu0
    %v1360 = vadd.f32 0.0, %v1359
    %1361 = vmatmul.bf16.gmra.mxu0 %v1276
    %v1362 = vpop.f32.mrf.mxu0
    %v1363 = vadd.f32 0.0, %v1362
    %v1364 = vpop.f32.mrf.mxu0
    %v1365 = vadd.f32 0.0, %v1364
    %1366 = vmatmul.bf16.gmra.mxu0 %v1277
    %v1367 = vpop.f32.mrf.mxu0
    %v1368 = vadd.f32 0.0, %v1367
    %v1369 = vpop.f32.mrf.mxu0
    %v1370 = vadd.f32 0.0, %v1369
    %1371 = vmatmul.bf16.gmra.mxu0 %v1278
    %v1372 = vpop.f32.mrf.mxu0
    %v1373 = vadd.f32 0.0, %v1372
    %v1374 = vpop.f32.mrf.mxu0
    %v1375 = vadd.f32 0.0, %v1374
    %1376 = vmatmul.bf16.gmra.mxu0 %v1279
    %v1377 = vpop.f32.mrf.mxu0
    %v1378 = vadd.f32 0.0, %v1377
    %v1379 = vpop.f32.mrf.mxu0
    %v1380 = vadd.f32 0.0, %v1379
    %1381 = vmatmul.bf16.gmra.mxu0 %v1280
    %v1382 = vpop.f32.mrf.mxu0
    %v1383 = vadd.f32 0.0, %v1382
    %v1384 = vpop.f32.mrf.mxu0
    %v1385 = vadd.f32 0.0, %v1384
    %1386 = vdwg.mxu0
    %1387 = vmatpush.bf16.msra.mxu0 %v487
    %1388 = vmatpush.bf16.msra.mxu0 %v477
    %1389 = vmatpush.bf16.msra.mxu0 %v467
    %1390 = vmatpush.bf16.msra.mxu0 %v457
    %1391 = vmatpush.bf16.msra.mxu0 %v447
    %1392 = vmatpush.bf16.msra.mxu0 %v437
    %1393 = vmatpush.bf16.msra.mxu0 %v427
    %1394 = vmatpush.bf16.msra.mxu0 %v417
    %1395 = vmatmul.bf16.gmra.mxu0 %v1273
    %v1396 = vpop.f32.mrf.mxu0
    %v1397 = vadd.f32 0.0, %v1396
    %v1398 = vpop.f32.mrf.mxu0
    %v1399 = vadd.f32 0.0, %v1398
    %1400 = vmatmul.bf16.gmra.mxu0 %v1274
    %v1401 = vpop.f32.mrf.mxu0
    %v1402 = vadd.f32 0.0, %v1401
    %v1403 = vpop.f32.mrf.mxu0
    %v1404 = vadd.f32 0.0, %v1403
    %1405 = vmatmul.bf16.gmra.mxu0 %v1275
    %v1406 = vpop.f32.mrf.mxu0
    %v1407 = vadd.f32 0.0, %v1406
    %v1408 = vpop.f32.mrf.mxu0
    %v1409 = vadd.f32 0.0, %v1408
    %1410 = vmatmul.bf16.gmra.mxu0 %v1276
    %v1411 = vpop.f32.mrf.mxu0
    %v1412 = vadd.f32 0.0, %v1411
    %v1413 = vpop.f32.mrf.mxu0
    %v1414 = vadd.f32 0.0, %v1413
    %1415 = vmatmul.bf16.gmra.mxu0 %v1277
    %v1416 = vpop.f32.mrf.mxu0
    %v1417 = vadd.f32 0.0, %v1416
    %v1418 = vpop.f32.mrf.mxu0
    %v1419 = vadd.f32 0.0, %v1418
    %1420 = vmatmul.bf16.gmra.mxu0 %v1278
    %v1421 = vpop.f32.mrf.mxu0
    %v1422 = vadd.f32 0.0, %v1421
    %v1423 = vpop.f32.mrf.mxu0
    %v1424 = vadd.f32 0.0, %v1423
    %1425 = vmatmul.bf16.gmra.mxu0 %v1279
    %v1426 = vpop.f32.mrf.mxu0
    %v1427 = vadd.f32 0.0, %v1426
    %v1428 = vpop.f32.mrf.mxu0
    %v1429 = vadd.f32 0.0, %v1428
    %1430 = vmatmul.bf16.gmra.mxu0 %v1280
    %v1431 = vpop.f32.mrf.mxu0
    %v1432 = vadd.f32 0.0, %v1431
    %v1433 = vpop.f32.mrf.mxu0
    %v1434 = vadd.f32 0.0, %v1433
    %1435 = vdwg.mxu0
    %1436 = vmatpush.bf16.msra.mxu0 %v488
    %1437 = vmatpush.bf16.msra.mxu0 %v478
    %1438 = vmatpush.bf16.msra.mxu0 %v468
    %1439 = vmatpush.bf16.msra.mxu0 %v458
    %1440 = vmatpush.bf16.msra.mxu0 %v448
    %1441 = vmatpush.bf16.msra.mxu0 %v438
    %1442 = vmatpush.bf16.msra.mxu0 %v428
    %1443 = vmatpush.bf16.msra.mxu0 %v418
    %1444 = vmatmul.bf16.gmra.mxu0 %v1273
    %v1445 = vpop.f32.mrf.mxu0
    %v1446 = vadd.f32 0.0, %v1445
    %v1447 = vpop.f32.mrf.mxu0
    %v1448 = vadd.f32 0.0, %v1447
    %1449 = vmatmul.bf16.gmra.mxu0 %v1274
    %v1450 = vpop.f32.mrf.mxu0
    %v1451 = vadd.f32 0.0, %v1450
    %v1452 = vpop.f32.mrf.mxu0
    %v1453 = vadd.f32 0.0, %v1452
    %1454 = vmatmul.bf16.gmra.mxu0 %v1275
    %v1455 = vpop.f32.mrf.mxu0
    %v1456 = vadd.f32 0.0, %v1455
    %v1457 = vpop.f32.mrf.mxu0
    %v1458 = vadd.f32 0.0, %v1457
    %1459 = vmatmul.bf16.gmra.mxu0 %v1276
    %v1460 = vpop.f32.mrf.mxu0
    %v1461 = vadd.f32 0.0, %v1460
    %v1462 = vpop.f32.mrf.mxu0
    %v1463 = vadd.f32 0.0, %v1462
    %1464 = vmatmul.bf16.gmra.mxu0 %v1277
    %v1465 = vpop.f32.mrf.mxu0
    %v1466 = vadd.f32 0.0, %v1465
    %v1467 = vpop.f32.mrf.mxu0
    %v1468 = vadd.f32 0.0, %v1467
    %1469 = vmatmul.bf16.gmra.mxu0 %v1278
    %v1470 = vpop.f32.mrf.mxu0
    %v1471 = vadd.f32 0.0, %v1470
    %v1472 = vpop.f32.mrf.mxu0
    %v1473 = vadd.f32 0.0, %v1472
    %1474 = vmatmul.bf16.gmra.mxu0 %v1279
    %v1475 = vpop.f32.mrf.mxu0
    %v1476 = vadd.f32 0.0, %v1475
    %v1477 = vpop.f32.mrf.mxu0
    %v1478 = vadd.f32 0.0, %v1477
    %1479 = vmatmul.bf16.gmra.mxu0 %v1280
    %v1480 = vpop.f32.mrf.mxu0
    %v1481 = vadd.f32 0.0, %v1480
    %v1482 = vpop.f32.mrf.mxu0
    %v1483 = vadd.f32 0.0, %v1482
    %1484 = vdwg.mxu0
    %1485 = vmatpush.bf16.msra.mxu0 %v489
    %1486 = vmatpush.bf16.msra.mxu0 %v479
    %1487 = vmatpush.bf16.msra.mxu0 %v469
    %1488 = vmatpush.bf16.msra.mxu0 %v459
    %1489 = vmatpush.bf16.msra.mxu0 %v449
    %1490 = vmatpush.bf16.msra.mxu0 %v439
    %1491 = vmatpush.bf16.msra.mxu0 %v429
    %1492 = vmatpush.bf16.msra.mxu0 %v419
    %1493 = vmatmul.bf16.gmra.mxu0 %v1273
    %v1494 = vpop.f32.mrf.mxu0
    %v1495 = vadd.f32 0.0, %v1494
    %v1496 = vpop.f32.mrf.mxu0
    %v1497 = vadd.f32 0.0, %v1496
    %1498 = vmatmul.bf16.gmra.mxu0 %v1274
    %v1499 = vpop.f32.mrf.mxu0
    %v1500 = vadd.f32 0.0, %v1499
    %v1501 = vpop.f32.mrf.mxu0
    %v1502 = vadd.f32 0.0, %v1501
    %1503 = vmatmul.bf16.gmra.mxu0 %v1275
    %v1504 = vpop.f32.mrf.mxu0
    %v1505 = vadd.f32 0.0, %v1504
    %v1506 = vpop.f32.mrf.mxu0
    %v1507 = vadd.f32 0.0, %v1506
    %1508 = vmatmul.bf16.gmra.mxu0 %v1276
    %v1509 = vpop.f32.mrf.mxu0
    %v1510 = vadd.f32 0.0, %v1509
    %v1511 = vpop.f32.mrf.mxu0
    %v1512 = vadd.f32 0.0, %v1511
    %1513 = vmatmul.bf16.gmra.mxu0 %v1277
    %v1514 = vpop.f32.mrf.mxu0
    %v1515 = vadd.f32 0.0, %v1514
    %v1516 = vpop.f32.mrf.mxu0
    %v1517 = vadd.f32 0.0, %v1516
    %1518 = vmatmul.bf16.gmra.mxu0 %v1278
    %v1519 = vpop.f32.mrf.mxu0
    %v1520 = vadd.f32 0.0, %v1519
    %v1521 = vpop.f32.mrf.mxu0
    %v1522 = vadd.f32 0.0, %v1521
    %1523 = vmatmul.bf16.gmra.mxu0 %v1279
    %v1524 = vpop.f32.mrf.mxu0
    %v1525 = vadd.f32 0.0, %v1524
    %v1526 = vpop.f32.mrf.mxu0
    %v1527 = vadd.f32 0.0, %v1526
    %1528 = vmatmul.bf16.gmra.mxu0 %v1280
    %v1529 = vpop.f32.mrf.mxu0
    %v1530 = vadd.f32 0.0, %v1529
    %v1531 = vpop.f32.mrf.mxu0
    %v1532 = vadd.f32 0.0, %v1531
    %1533 = vdwg.mxu0
    %1534 = vmatpush.bf16.msra.mxu0 %v490
    %1535 = vmatpush.bf16.msra.mxu0 %v480
    %1536 = vmatpush.bf16.msra.mxu0 %v470
    %1537 = vmatpush.bf16.msra.mxu0 %v460
    %1538 = vmatpush.bf16.msra.mxu0 %v450
    %1539 = vmatpush.bf16.msra.mxu0 %v440
    %1540 = vmatpush.bf16.msra.mxu0 %v430
    %1541 = vmatpush.bf16.msra.mxu0 %v420
    %1542 = vmatmul.bf16.gmra.mxu0 %v1273
    %v1543 = vpop.f32.mrf.mxu0
    %v1544 = vadd.f32 0.0, %v1543
    %v1545 = vpop.f32.mrf.mxu0
    %v1546 = vadd.f32 0.0, %v1545
    %1547 = vmatmul.bf16.gmra.mxu0 %v1274
    %v1548 = vpop.f32.mrf.mxu0
    %v1549 = vadd.f32 0.0, %v1548
    %v1550 = vpop.f32.mrf.mxu0
    %v1551 = vadd.f32 0.0, %v1550
    %1552 = vmatmul.bf16.gmra.mxu0 %v1275
    %v1553 = vpop.f32.mrf.mxu0
    %v1554 = vadd.f32 0.0, %v1553
    %v1555 = vpop.f32.mrf.mxu0
    %v1556 = vadd.f32 0.0, %v1555
    %1557 = vmatmul.bf16.gmra.mxu0 %v1276
    %v1558 = vpop.f32.mrf.mxu0
    %v1559 = vadd.f32 0.0, %v1558
    %v1560 = vpop.f32.mrf.mxu0
    %v1561 = vadd.f32 0.0, %v1560
    %1562 = vmatmul.bf16.gmra.mxu0 %v1277
    %v1563 = vpop.f32.mrf.mxu0
    %v1564 = vadd.f32 0.0, %v1563
    %v1565 = vpop.f32.mrf.mxu0
    %v1566 = vadd.f32 0.0, %v1565
    %1567 = vmatmul.bf16.gmra.mxu0 %v1278
    %v1568 = vpop.f32.mrf.mxu0
    %v1569 = vadd.f32 0.0, %v1568
    %v1570 = vpop.f32.mrf.mxu0
    %v1571 = vadd.f32 0.0, %v1570
    %1572 = vmatmul.bf16.gmra.mxu0 %v1279
    %v1573 = vpop.f32.mrf.mxu0
    %v1574 = vadd.f32 0.0, %v1573
    %v1575 = vpop.f32.mrf.mxu0
    %v1576 = vadd.f32 0.0, %v1575
    %1577 = vmatmul.bf16.gmra.mxu0 %v1280
    %v1578 = vpop.f32.mrf.mxu0
    %v1579 = vadd.f32 0.0, %v1578
    %v1580 = vpop.f32.mrf.mxu0
    %v1581 = vadd.f32 0.0, %v1580
    %1582 = vdwg.mxu0
    %1583 = vmatpush.bf16.msra.mxu0 %v491
    %1584 = vmatpush.bf16.msra.mxu0 %v481
    %1585 = vmatpush.bf16.msra.mxu0 %v471
    %1586 = vmatpush.bf16.msra.mxu0 %v461
    %1587 = vmatpush.bf16.msra.mxu0 %v451
    %1588 = vmatpush.bf16.msra.mxu0 %v441
    %1589 = vmatpush.bf16.msra.mxu0 %v431
    %1590 = vmatpush.bf16.msra.mxu0 %v421
    %1591 = vmatmul.bf16.gmra.mxu0 %v1273
    %v1592 = vpop.f32.mrf.mxu0
    %v1593 = vadd.f32 0.0, %v1592
    %v1594 = vpop.f32.mrf.mxu0
    %v1595 = vadd.f32 0.0, %v1594
    %1596 = vmatmul.bf16.gmra.mxu0 %v1274
    %v1597 = vpop.f32.mrf.mxu0
    %v1598 = vadd.f32 0.0, %v1597
    %v1599 = vpop.f32.mrf.mxu0
    %v1600 = vadd.f32 0.0, %v1599
    %1601 = vmatmul.bf16.gmra.mxu0 %v1275
    %v1602 = vpop.f32.mrf.mxu0
    %v1603 = vadd.f32 0.0, %v1602
    %v1604 = vpop.f32.mrf.mxu0
    %v1605 = vadd.f32 0.0, %v1604
    %1606 = vmatmul.bf16.gmra.mxu0 %v1276
    %v1607 = vpop.f32.mrf.mxu0
    %v1608 = vadd.f32 0.0, %v1607
    %v1609 = vpop.f32.mrf.mxu0
    %v1610 = vadd.f32 0.0, %v1609
    %1611 = vmatmul.bf16.gmra.mxu0 %v1277
    %v1612 = vpop.f32.mrf.mxu0
    %v1613 = vadd.f32 0.0, %v1612
    %v1614 = vpop.f32.mrf.mxu0
    %v1615 = vadd.f32 0.0, %v1614
    %1616 = vmatmul.bf16.gmra.mxu0 %v1278
    %v1617 = vpop.f32.mrf.mxu0
    %v1618 = vadd.f32 0.0, %v1617
    %v1619 = vpop.f32.mrf.mxu0
    %v1620 = vadd.f32 0.0, %v1619
    %1621 = vmatmul.bf16.gmra.mxu0 %v1279
    %v1622 = vpop.f32.mrf.mxu0
    %v1623 = vadd.f32 0.0, %v1622
    %v1624 = vpop.f32.mrf.mxu0
    %v1625 = vadd.f32 0.0, %v1624
    %1626 = vmatmul.bf16.gmra.mxu0 %v1280
    %v1627 = vpop.f32.mrf.mxu0
    %v1628 = vadd.f32 0.0, %v1627
    %v1629 = vpop.f32.mrf.mxu0
    %v1630 = vadd.f32 0.0, %v1629
    %1631 = vdwg.mxu0
    %1632 = vmatpush.bf16.msra.mxu0 %v492
    %1633 = vmatpush.bf16.msra.mxu0 %v482
    %1634 = vmatpush.bf16.msra.mxu0 %v472
    %1635 = vmatpush.bf16.msra.mxu0 %v462
    %1636 = vmatpush.bf16.msra.mxu0 %v452
    %1637 = vmatpush.bf16.msra.mxu0 %v442
    %1638 = vmatpush.bf16.msra.mxu0 %v432
    %1639 = vmatpush.bf16.msra.mxu0 %v422
    %1640 = vmatmul.bf16.gmra.mxu0 %v1273
    %v1641 = vpop.f32.mrf.mxu0
    %v1642 = vadd.f32 0.0, %v1641
    %v1643 = vpop.f32.mrf.mxu0
    %v1644 = vadd.f32 0.0, %v1643
    %1645 = vmatmul.bf16.gmra.mxu0 %v1274
    %v1646 = vpop.f32.mrf.mxu0
    %v1647 = vadd.f32 0.0, %v1646
    %v1648 = vpop.f32.mrf.mxu0
    %v1649 = vadd.f32 0.0, %v1648
    %1650 = vmatmul.bf16.gmra.mxu0 %v1275
    %v1651 = vpop.f32.mrf.mxu0
    %v1652 = vadd.f32 0.0, %v1651
    %v1653 = vpop.f32.mrf.mxu0
    %v1654 = vadd.f32 0.0, %v1653
    %1655 = vmatmul.bf16.gmra.mxu0 %v1276
    %v1656 = vpop.f32.mrf.mxu0
    %v1657 = vadd.f32 0.0, %v1656
    %v1658 = vpop.f32.mrf.mxu0
    %v1659 = vadd.f32 0.0, %v1658
    %1660 = vmatmul.bf16.gmra.mxu0 %v1277
    %v1661 = vpop.f32.mrf.mxu0
    %v1662 = vadd.f32 0.0, %v1661
    %v1663 = vpop.f32.mrf.mxu0
    %v1664 = vadd.f32 0.0, %v1663
    %1665 = vmatmul.bf16.gmra.mxu0 %v1278
    %v1666 = vpop.f32.mrf.mxu0
    %v1667 = vadd.f32 0.0, %v1666
    %v1668 = vpop.f32.mrf.mxu0
    %v1669 = vadd.f32 0.0, %v1668
    %1670 = vmatmul.bf16.gmra.mxu0 %v1279
    %v1671 = vpop.f32.mrf.mxu0
    %v1672 = vadd.f32 0.0, %v1671
    %v1673 = vpop.f32.mrf.mxu0
    %v1674 = vadd.f32 0.0, %v1673
    %1675 = vmatmul.bf16.gmra.mxu0 %v1280
    %v1676 = vpop.f32.mrf.mxu0
    %v1677 = vadd.f32 0.0, %v1676
    %v1678 = vpop.f32.mrf.mxu0
    %v1679 = vadd.f32 0.0, %v1678
    %1680 = vdwg.mxu0
    %1681 = vmatpush.bf16.msra.mxu0 %v493
    %1682 = vmatpush.bf16.msra.mxu0 %v483
    %1683 = vmatpush.bf16.msra.mxu0 %v473
    %1684 = vmatpush.bf16.msra.mxu0 %v463
    %1685 = vmatpush.bf16.msra.mxu0 %v453
    %1686 = vmatpush.bf16.msra.mxu0 %v443
    %1687 = vmatpush.bf16.msra.mxu0 %v433
    %1688 = vmatpush.bf16.msra.mxu0 %v423
    %1689 = vmatmul.bf16.gmra.mxu0 %v1273
    %v1690 = vpop.f32.mrf.mxu0
    %v1691 = vadd.f32 0.0, %v1690
    %v1692 = vpop.f32.mrf.mxu0
    %v1693 = vadd.f32 0.0, %v1692
    %1694 = vmatmul.bf16.gmra.mxu0 %v1274
    %v1695 = vpop.f32.mrf.mxu0
    %v1696 = vadd.f32 0.0, %v1695
    %v1697 = vpop.f32.mrf.mxu0
    %v1698 = vadd.f32 0.0, %v1697
    %1699 = vmatmul.bf16.gmra.mxu0 %v1275
    %v1700 = vpop.f32.mrf.mxu0
    %v1701 = vadd.f32 0.0, %v1700
    %v1702 = vpop.f32.mrf.mxu0
    %v1703 = vadd.f32 0.0, %v1702
    %1704 = vmatmul.bf16.gmra.mxu0 %v1276
    %v1705 = vpop.f32.mrf.mxu0
    %v1706 = vadd.f32 0.0, %v1705
    %v1707 = vpop.f32.mrf.mxu0
    %v1708 = vadd.f32 0.0, %v1707
    %1709 = vmatmul.bf16.gmra.mxu0 %v1277
    %v1710 = vpop.f32.mrf.mxu0
    %v1711 = vadd.f32 0.0, %v1710
    %v1712 = vpop.f32.mrf.mxu0
    %v1713 = vadd.f32 0.0, %v1712
    %1714 = vmatmul.bf16.gmra.mxu0 %v1278
    %v1715 = vpop.f32.mrf.mxu0
    %v1716 = vadd.f32 0.0, %v1715
    %v1717 = vpop.f32.mrf.mxu0
    %v1718 = vadd.f32 0.0, %v1717
    %1719 = vmatmul.bf16.gmra.mxu0 %v1279
    %v1720 = vpop.f32.mrf.mxu0
    %v1721 = vadd.f32 0.0, %v1720
    %v1722 = vpop.f32.mrf.mxu0
    %v1723 = vadd.f32 0.0, %v1722
    %1724 = vmatmul.bf16.gmra.mxu0 %v1280
    %v1725 = vpop.f32.mrf.mxu0
    %v1726 = vadd.f32 0.0, %v1725
    %v1727 = vpop.f32.mrf.mxu0
    %v1728 = vadd.f32 0.0, %v1727
    %1729 = vdwg.mxu0
    %1730 = vmatpush.bf16.msra.mxu0 %v494
    %1731 = vmatpush.bf16.msra.mxu0 %v484
    %1732 = vmatpush.bf16.msra.mxu0 %v474
    %1733 = vmatpush.bf16.msra.mxu0 %v464
    %1734 = vmatpush.bf16.msra.mxu0 %v454
    %1735 = vmatpush.bf16.msra.mxu0 %v444
    %1736 = vmatpush.bf16.msra.mxu0 %v434
    %1737 = vmatpush.bf16.msra.mxu0 %v424
    %1738 = vmatmul.bf16.gmra.mxu0 %v1273
    %v1739 = vpop.f32.mrf.mxu0
    %v1740 = vadd.f32 0.0, %v1739
    %v1741 = vpop.f32.mrf.mxu0
    %v1742 = vadd.f32 0.0, %v1741
    %1743 = vmatmul.bf16.gmra.mxu0 %v1274
    %v1744 = vpop.f32.mrf.mxu0
    %v1745 = vadd.f32 0.0, %v1744
    %v1746 = vpop.f32.mrf.mxu0
    %v1747 = vadd.f32 0.0, %v1746
    %1748 = vmatmul.bf16.gmra.mxu0 %v1275
    %v1749 = vpop.f32.mrf.mxu0
    %v1750 = vadd.f32 0.0, %v1749
    %v1751 = vpop.f32.mrf.mxu0
    %v1752 = vadd.f32 0.0, %v1751
    %1753 = vmatmul.bf16.gmra.mxu0 %v1276
    %v1754 = vpop.f32.mrf.mxu0
    %v1755 = vadd.f32 0.0, %v1754
    %v1756 = vpop.f32.mrf.mxu0
    %v1757 = vadd.f32 0.0, %v1756
    %1758 = vmatmul.bf16.gmra.mxu0 %v1277
    %v1759 = vpop.f32.mrf.mxu0
    %v1760 = vadd.f32 0.0, %v1759
    %v1761 = vpop.f32.mrf.mxu0
    %v1762 = vadd.f32 0.0, %v1761
    %1763 = vmatmul.bf16.gmra.mxu0 %v1278
    %v1764 = vpop.f32.mrf.mxu0
    %v1765 = vadd.f32 0.0, %v1764
    %v1766 = vpop.f32.mrf.mxu0
    %v1767 = vadd.f32 0.0, %v1766
    %1768 = vmatmul.bf16.gmra.mxu0 %v1279
    %v1769 = vpop.f32.mrf.mxu0
    %v1770 = vadd.f32 0.0, %v1769
    %v1771 = vpop.f32.mrf.mxu0
    %v1772 = vadd.f32 0.0, %v1771
    %1773 = vmatmul.bf16.gmra.mxu0 %v1280
    %v1774 = vpop.f32.mrf.mxu0
    %v1775 = vadd.f32 0.0, %v1774
    %v1776 = vpop.f32.mrf.mxu0
    %v1777 = vadd.f32 0.0, %v1776
    %1778 = vdwg.mxu0
    %1779 = vst [vmem:[#allocation3] sm:$0xff] %v1299
    %1780 = vst [vmem:[#allocation3 + $0x8] sm:$0xff] %v1348
    %1781 = vst [vmem:[#allocation3 + $0x10] sm:$0xff] %v1397
    %1782 = vst [vmem:[#allocation3 + $0x18] sm:$0xff] %v1446
    %1783 = vst [vmem:[#allocation3 + $0x20] sm:$0xff] %v1495
    %1784 = vst [vmem:[#allocation3 + $0x28] sm:$0xff] %v1544
    %1785 = vst [vmem:[#allocation3 + $0x30] sm:$0xff] %v1593
    %1786 = vst [vmem:[#allocation3 + $0x38] sm:$0xff] %v1642
    %1787 = vst [vmem:[#allocation3 + $0x40] sm:$0xff] %v1691
    %1788 = vst [vmem:[#allocation3 + $0x48] sm:$0xff] %v1740
    %1789 = vst [vmem:[#allocation3 + $0x50] sm:$0xff] %v1301
    %1790 = vst [vmem:[#allocation3 + $0x58] sm:$0xff] %v1350
    %1791 = vst [vmem:[#allocation3 + $0x60] sm:$0xff] %v1399
    %1792 = vst [vmem:[#allocation3 + $0x68] sm:$0xff] %v1448
    %1793 = vst [vmem:[#allocation3 + $0x70] sm:$0xff] %v1497
    %1794 = vst [vmem:[#allocation3 + $0x78] sm:$0xff] %v1546
    %1795 = vst [vmem:[#allocation3 + $0x80] sm:$0xff] %v1595
    %1796 = vst [vmem:[#allocation3 + $0x88] sm:$0xff] %v1644
    %1797 = vst [vmem:[#allocation3 + $0x90] sm:$0xff] %v1693
    %1798 = vst [vmem:[#allocation3 + $0x98] sm:$0xff] %v1742
    %1799 = vst [vmem:[#allocation3 + $0xa0] sm:$0xff] %v1304
    %1800 = vst [vmem:[#allocation3 + $0xa8] sm:$0xff] %v1353
    %1801 = vst [vmem:[#allocation3 + $0xb0] sm:$0xff] %v1402
    %1802 = vst [vmem:[#allocation3 + $0xb8] sm:$0xff] %v1451
    %1803 = vst [vmem:[#allocation3 + $0xc0] sm:$0xff] %v1500
    %1804 = vst [vmem:[#allocation3 + $0xc8] sm:$0xff] %v1549
    %1805 = vst [vmem:[#allocation3 + $0xd0] sm:$0xff] %v1598
    %1806 = vst [vmem:[#allocation3 + $0xd8] sm:$0xff] %v1647
    %1807 = vst [vmem:[#allocation3 + $0xe0] sm:$0xff] %v1696
    %1808 = vst [vmem:[#allocation3 + $0xe8] sm:$0xff] %v1745
    %1809 = vst [vmem:[#allocation3 + $0xf0] sm:$0xff] %v1306
    %1810 = vst [vmem:[#allocation3 + $0xf8] sm:$0xff] %v1355
    %1811 = vst [vmem:[#allocation3 + $0x100] sm:$0xff] %v1404
    %1812 = vst [vmem:[#allocation3 + $0x108] sm:$0xff] %v1453
    %1813 = vst [vmem:[#allocation3 + $0x110] sm:$0xff] %v1502
    %1814 = vst [vmem:[#allocation3 + $0x118] sm:$0xff] %v1551
    %1815 = vst [vmem:[#allocation3 + $0x120] sm:$0xff] %v1600
    %1816 = vst [vmem:[#allocation3 + $0x128] sm:$0xff] %v1649
    %1817 = vst [vmem:[#allocation3 + $0x130] sm:$0xff] %v1698
    %1818 = vst [vmem:[#allocation3 + $0x138] sm:$0xff] %v1747
    %1819 = vst [vmem:[#allocation3 + $0x140] sm:$0xff] %v1309
    %1820 = vst [vmem:[#allocation3 + $0x148] sm:$0xff] %v1358
    %1821 = vst [vmem:[#allocation3 + $0x150] sm:$0xff] %v1407
    %1822 = vst [vmem:[#allocation3 + $0x158] sm:$0xff] %v1456
    %1823 = vst [vmem:[#allocation3 + $0x160] sm:$0xff] %v1505
    %1824 = vst [vmem:[#allocation3 + $0x168] sm:$0xff] %v1554
    %1825 = vst [vmem:[#allocation3 + $0x170] sm:$0xff] %v1603
    %1826 = vst [vmem:[#allocation3 + $0x178] sm:$0xff] %v1652
    %1827 = vst [vmem:[#allocation3 + $0x180] sm:$0xff] %v1701
    %1828 = vst [vmem:[#allocation3 + $0x188] sm:$0xff] %v1750
    %1829 = vst [vmem:[#allocation3 + $0x190] sm:$0xff] %v1311
    %1830 = vst [vmem:[#allocation3 + $0x198] sm:$0xff] %v1360
    %1831 = vst [vmem:[#allocation3 + $0x1a0] sm:$0xff] %v1409
    %1832 = vst [vmem:[#allocation3 + $0x1a8] sm:$0xff] %v1458
    %1833 = vst [vmem:[#allocation3 + $0x1b0] sm:$0xff] %v1507
    %1834 = vst [vmem:[#allocation3 + $0x1b8] sm:$0xff] %v1556
    %1835 = vst [vmem:[#allocation3 + $0x1c0] sm:$0xff] %v1605
    %1836 = vst [vmem:[#allocation3 + $0x1c8] sm:$0xff] %v1654
    %1837 = vst [vmem:[#allocation3 + $0x1d0] sm:$0xff] %v1703
    %1838 = vst [vmem:[#allocation3 + $0x1d8] sm:$0xff] %v1752
    %1839 = vst [vmem:[#allocation3 + $0x1e0] sm:$0xff] %v1314
    %1840 = vst [vmem:[#allocation3 + $0x1e8] sm:$0xff] %v1363
    %1841 = vst [vmem:[#allocation3 + $0x1f0] sm:$0xff] %v1412
    %1842 = vst [vmem:[#allocation3 + $0x1f8] sm:$0xff] %v1461
    %1843 = vst [vmem:[#allocation3 + $0x200] sm:$0xff] %v1510
    %1844 = vst [vmem:[#allocation3 + $0x208] sm:$0xff] %v1559
    %1845 = vst [vmem:[#allocation3 + $0x210] sm:$0xff] %v1608
    %1846 = vst [vmem:[#allocation3 + $0x218] sm:$0xff] %v1657
    %1847 = vst [vmem:[#allocation3 + $0x220] sm:$0xff] %v1706
    %1848 = vst [vmem:[#allocation3 + $0x228] sm:$0xff] %v1755
    %1849 = vst [vmem:[#allocation3 + $0x230] sm:$0xff] %v1316
    %1850 = vst [vmem:[#allocation3 + $0x238] sm:$0xff] %v1365
    %1851 = vst [vmem:[#allocation3 + $0x240] sm:$0xff] %v1414
    %1852 = vst [vmem:[#allocation3 + $0x248] sm:$0xff] %v1463
    %1853 = vst [vmem:[#allocation3 + $0x250] sm:$0xff] %v1512
    %1854 = vst [vmem:[#allocation3 + $0x258] sm:$0xff] %v1561
    %1855 = vst [vmem:[#allocation3 + $0x260] sm:$0xff] %v1610
    %1856 = vst [vmem:[#allocation3 + $0x268] sm:$0xff] %v1659
    %1857 = vst [vmem:[#allocation3 + $0x270] sm:$0xff] %v1708
    %1858 = vst [vmem:[#allocation3 + $0x278] sm:$0xff] %v1757
    %1859 = vst [vmem:[#allocation3 + $0x280] sm:$0xff] %v1319
    %1860 = vst [vmem:[#allocation3 + $0x288] sm:$0xff] %v1368
    %1861 = vst [vmem:[#allocation3 + $0x290] sm:$0xff] %v1417
    %1862 = vst [vmem:[#allocation3 + $0x298] sm:$0xff] %v1466
    %1863 = vst [vmem:[#allocation3 + $0x2a0] sm:$0xff] %v1515
    %1864 = vst [vmem:[#allocation3 + $0x2a8] sm:$0xff] %v1564
    %1865 = vst [vmem:[#allocation3 + $0x2b0] sm:$0xff] %v1613
    %1866 = vst [vmem:[#allocation3 + $0x2b8] sm:$0xff] %v1662
    %1867 = vst [vmem:[#allocation3 + $0x2c0] sm:$0xff] %v1711
    %1868 = vst [vmem:[#allocation3 + $0x2c8] sm:$0xff] %v1760
    %1869 = vst [vmem:[#allocation3 + $0x2d0] sm:$0xff] %v1321
    %1870 = vst [vmem:[#allocation3 + $0x2d8] sm:$0xff] %v1370
    %1871 = vst [vmem:[#allocation3 + $0x2e0] sm:$0xff] %v1419
    %1872 = vst [vmem:[#allocation3 + $0x2e8] sm:$0xff] %v1468
    %1873 = vst [vmem:[#allocation3 + $0x2f0] sm:$0xff] %v1517
    %1874 = vst [vmem:[#allocation3 + $0x2f8] sm:$0xff] %v1566
    %1875 = vst [vmem:[#allocation3 + $0x300] sm:$0xff] %v1615
    %1876 = vst [vmem:[#allocation3 + $0x308] sm:$0xff] %v1664
    %1877 = vst [vmem:[#allocation3 + $0x310] sm:$0xff] %v1713
    %1878 = vst [vmem:[#allocation3 + $0x318] sm:$0xff] %v1762
    %1879 = vst [vmem:[#allocation3 + $0x320] sm:$0xff] %v1324
    %1880 = vst [vmem:[#allocation3 + $0x328] sm:$0xff] %v1373
    %1881 = vst [vmem:[#allocation3 + $0x330] sm:$0xff] %v1422
    %1882 = vst [vmem:[#allocation3 + $0x338] sm:$0xff] %v1471
    %1883 = vst [vmem:[#allocation3 + $0x340] sm:$0xff] %v1520
    %1884 = vst [vmem:[#allocation3 + $0x348] sm:$0xff] %v1569
    %1885 = vst [vmem:[#allocation3 + $0x350] sm:$0xff] %v1618
    %1886 = vst [vmem:[#allocation3 + $0x358] sm:$0xff] %v1667
    %1887 = vst [vmem:[#allocation3 + $0x360] sm:$0xff] %v1716
    %1888 = vst [vmem:[#allocation3 + $0x368] sm:$0xff] %v1765
    %1889 = vst [vmem:[#allocation3 + $0x370] sm:$0xff] %v1326
    %1890 = vst [vmem:[#allocation3 + $0x378] sm:$0xff] %v1375
    %1891 = vst [vmem:[#allocation3 + $0x380] sm:$0xff] %v1424
    %1892 = vst [vmem:[#allocation3 + $0x388] sm:$0xff] %v1473
    %1893 = vst [vmem:[#allocation3 + $0x390] sm:$0xff] %v1522
    %1894 = vst [vmem:[#allocation3 + $0x398] sm:$0xff] %v1571
    %1895 = vst [vmem:[#allocation3 + $0x3a0] sm:$0xff] %v1620
    %1896 = vst [vmem:[#allocation3 + $0x3a8] sm:$0xff] %v1669
    %1897 = vst [vmem:[#allocation3 + $0x3b0] sm:$0xff] %v1718
    %1898 = vst [vmem:[#allocation3 + $0x3b8] sm:$0xff] %v1767
    %1899 = vst [vmem:[#allocation3 + $0x3c0] sm:$0xff] %v1329
    %1900 = vst [vmem:[#allocation3 + $0x3c8] sm:$0xff] %v1378
    %1901 = vst [vmem:[#allocation3 + $0x3d0] sm:$0xff] %v1427
    %1902 = vst [vmem:[#allocation3 + $0x3d8] sm:$0xff] %v1476
    %1903 = vst [vmem:[#allocation3 + $0x3e0] sm:$0xff] %v1525
    %1904 = vst [vmem:[#allocation3 + $0x3e8] sm:$0xff] %v1574
    %1905 = vst [vmem:[#allocation3 + $0x3f0] sm:$0xff] %v1623
    %1906 = vst [vmem:[#allocation3 + $0x3f8] sm:$0xff] %v1672
    %1907 = vst [vmem:[#allocation3 + $0x400] sm:$0xff] %v1721
    %1908 = vst [vmem:[#allocation3 + $0x408] sm:$0xff] %v1770
    %1909 = vst [vmem:[#allocation3 + $0x410] sm:$0xff] %v1331
    %1910 = vst [vmem:[#allocation3 + $0x418] sm:$0xff] %v1380
    %1911 = vst [vmem:[#allocation3 + $0x420] sm:$0xff] %v1429
    %1912 = vst [vmem:[#allocation3 + $0x428] sm:$0xff] %v1478
    %1913 = vst [vmem:[#allocation3 + $0x430] sm:$0xff] %v1527
    %1914 = vst [vmem:[#allocation3 + $0x438] sm:$0xff] %v1576
    %1915 = vst [vmem:[#allocation3 + $0x440] sm:$0xff] %v1625
    %1916 = vst [vmem:[#allocation3 + $0x448] sm:$0xff] %v1674
    %1917 = vst [vmem:[#allocation3 + $0x450] sm:$0xff] %v1723
    %1918 = vst [vmem:[#allocation3 + $0x458] sm:$0xff] %v1772
    %1919 = vst [vmem:[#allocation3 + $0x460] sm:$0xff] %v1334
    %1920 = vst [vmem:[#allocation3 + $0x468] sm:$0xff] %v1383
    %1921 = vst [vmem:[#allocation3 + $0x470] sm:$0xff] %v1432
    %1922 = vst [vmem:[#allocation3 + $0x478] sm:$0xff] %v1481
    %1923 = vst [vmem:[#allocation3 + $0x480] sm:$0xff] %v1530
    %1924 = vst [vmem:[#allocation3 + $0x488] sm:$0xff] %v1579
    %1925 = vst [vmem:[#allocation3 + $0x490] sm:$0xff] %v1628
    %1926 = vst [vmem:[#allocation3 + $0x498] sm:$0xff] %v1677
    %1927 = vst [vmem:[#allocation3 + $0x4a0] sm:$0xff] %v1726
    %1928 = vst [vmem:[#allocation3 + $0x4a8] sm:$0xff] %v1775
    %1929 = vst [vmem:[#allocation3 + $0x4b0] sm:$0xff] %v1336
    %1930 = vst [vmem:[#allocation3 + $0x4b8] sm:$0xff] %v1385
    %1931 = vst [vmem:[#allocation3 + $0x4c0] sm:$0xff] %v1434
    %1932 = vst [vmem:[#allocation3 + $0x4c8] sm:$0xff] %v1483
    %1933 = vst [vmem:[#allocation3 + $0x4d0] sm:$0xff] %v1532
    %1934 = vst [vmem:[#allocation3 + $0x4d8] sm:$0xff] %v1581
    %1935 = vst [vmem:[#allocation3 + $0x4e0] sm:$0xff] %v1630
    %1936 = vst [vmem:[#allocation3 + $0x4e8] sm:$0xff] %v1679
    %1937 = vst [vmem:[#allocation3 + $0x4f0] sm:$0xff] %v1728
    %1938 = vst [vmem:[#allocation3 + $0x4f8] sm:$0xff] %v1777
    %v1939 = vld [vmem:[#allocation2] sm:$0xff]
    %v1940 = vld [vmem:[#allocation2 + $0x50] sm:$0x3f]
    %v1941 = vld [vmem:[#allocation2 + $0xa0] sm:$0xff]
    %v1942 = vld [vmem:[#allocation2 + $0xf0] sm:$0x3f]
    %v1943 = vld [vmem:[#allocation2 + $0x140] sm:$0xff]
    %v1944 = vld [vmem:[#allocation2 + $0x190] sm:$0x3f]
    %v1945 = vld [vmem:[#allocation2 + $0x1e0] sm:$0xff]
    %v1946 = vld [vmem:[#allocation2 + $0x230] sm:$0x3f]
    %v1947 = vld [vmem:[#allocation2 + $0x280] sm:$0xff]
    %v1948 = vld [vmem:[#allocation2 + $0x2d0] sm:$0x3f]
    %v1949 = vld [vmem:[#allocation2 + $0x320] sm:$0xff]
    %v1950 = vld [vmem:[#allocation2 + $0x370] sm:$0x3f]
    %v1951 = vld [vmem:[#allocation2 + $0x3c0] sm:$0xff]
    %v1952 = vld [vmem:[#allocation2 + $0x410] sm:$0x3f]
    %v1953 = vld [vmem:[#allocation2 + $0x460] sm:$0xff]
    %v1954 = vld [vmem:[#allocation2 + $0x4b0] sm:$0x3f]
    %v1955 = vld [vmem:[#allocation3 + $0x10] sm:$0xff]
    %v1956 = vld [vmem:[#allocation3 + $0x60] sm:$0x3f]
    %v1957 = vld [vmem:[#allocation3 + $0xb0] sm:$0xff]
    %v1958 = vld [vmem:[#allocation3 + $0x100] sm:$0x3f]
    %v1959 = vld [vmem:[#allocation3 + $0x150] sm:$0xff]
    %v1960 = vld [vmem:[#allocation3 + $0x1a0] sm:$0x3f]
    %v1961 = vld [vmem:[#allocation3 + $0x1f0] sm:$0xff]
    %v1962 = vld [vmem:[#allocation3 + $0x240] sm:$0x3f]
    %v1963 = vld [vmem:[#allocation3 + $0x290] sm:$0xff]
    %v1964 = vld [vmem:[#allocation3 + $0x2e0] sm:$0x3f]
    %v1965 = vld [vmem:[#allocation3 + $0x330] sm:$0xff]
    %v1966 = vld [vmem:[#allocation3 + $0x380] sm:$0x3f]
    %v1967 = vld [vmem:[#allocation3 + $0x3d0] sm:$0xff]
    %v1968 = vld [vmem:[#allocation3 + $0x420] sm:$0x3f]
    %v1969 = vld [vmem:[#allocation3 + $0x470] sm:$0xff]
    %v1970 = vld [vmem:[#allocation3 + $0x4c0] sm:$0x3f]
    %v1971 = vadd.f32 %v1939, %v1955
    %v1972 = vadd.f32 %v1940, %v1956
    %v1973 = vadd.f32 %v1941, %v1957
    %v1974 = vadd.f32 %v1942, %v1958
    %v1975 = vadd.f32 %v1943, %v1959
    %v1976 = vadd.f32 %v1944, %v1960
    %v1977 = vadd.f32 %v1945, %v1961
    %v1978 = vadd.f32 %v1946, %v1962
    %v1979 = vadd.f32 %v1947, %v1963
    %v1980 = vadd.f32 %v1948, %v1964
    %v1981 = vadd.f32 %v1949, %v1965
    %v1982 = vadd.f32 %v1950, %v1966
    %v1983 = vadd.f32 %v1951, %v1967
    %v1984 = vadd.f32 %v1952, %v1968
    %v1985 = vadd.f32 %v1953, %v1969
    %v1986 = vadd.f32 %v1954, %v1970
    %v1987 = vld [vmem:[#allocation2 + $0x20] sm:$0xfe]
    %v1988 = vld [vmem:[#allocation2 + $0x70] sm:$0x7f]
    %v1989 = vld [vmem:[#allocation2 + $0xc0] sm:$0xfe]
    %v1990 = vld [vmem:[#allocation2 + $0x110] sm:$0x7f]
    %v1991 = vld [vmem:[#allocation2 + $0x160] sm:$0xfe]
    %v1992 = vld [vmem:[#allocation2 + $0x1b0] sm:$0x7f]
    %v1993 = vld [vmem:[#allocation2 + $0x200] sm:$0xfe]
    %v1994 = vld [vmem:[#allocation2 + $0x250] sm:$0x7f]
    %v1995 = vld [vmem:[#allocation2 + $0x2a0] sm:$0xfe]
    %v1996 = vld [vmem:[#allocation2 + $0x2f0] sm:$0x7f]
    %v1997 = vld [vmem:[#allocation2 + $0x340] sm:$0xfe]
    %v1998 = vld [vmem:[#allocation2 + $0x390] sm:$0x7f]
    %v1999 = vld [vmem:[#allocation2 + $0x3e0] sm:$0xfe]
    %v2000 = vld [vmem:[#allocation2 + $0x430] sm:$0x7f]
    %v2001 = vld [vmem:[#allocation2 + $0x480] sm:$0xfe]
    %v2002 = vld [vmem:[#allocation2 + $0x4d0] sm:$0x7f]
    %vm2019 = vcmask 1046528
    %v2020 = vrot.slane %v1987, 1
    %v2021 = vrot.slane %v1988, 1
    %v2022 = vsel %vm2019, %v2020, %v2021
    %v2023 = vrot.slane %v1989, 1
    %v2024 = vrot.slane %v1990, 1
    %v2025 = vsel %vm2019, %v2023, %v2024
    %v2026 = vrot.slane %v1991, 1
    %v2027 = vrot.slane %v1992, 1
    %v2028 = vsel %vm2019, %v2026, %v2027
    %v2029 = vrot.slane %v1993, 1
    %v2030 = vrot.slane %v1994, 1
    %v2031 = vsel %vm2019, %v2029, %v2030
    %v2032 = vrot.slane %v1995, 1
    %v2033 = vrot.slane %v1996, 1
    %v2034 = vsel %vm2019, %v2032, %v2033
    %v2035 = vrot.slane %v1997, 1
    %v2036 = vrot.slane %v1998, 1
    %v2037 = vsel %vm2019, %v2035, %v2036
    %v2038 = vrot.slane %v1999, 1
    %v2039 = vrot.slane %v2000, 1
    %v2040 = vsel %vm2019, %v2038, %v2039
    %v2041 = vrot.slane %v2001, 1
    %v2042 = vrot.slane %v2002, 1
    %v2043 = vsel %vm2019, %v2041, %v2042
    %v2060 = vadd.f32 %v1971, %v2022
    %v2061 = vadd.f32 %v1972, %v2021
    %v2062 = vadd.f32 %v1973, %v2025
    %v2063 = vadd.f32 %v1974, %v2024
    %v2064 = vadd.f32 %v1975, %v2028
    %v2065 = vadd.f32 %v1976, %v2027
    %v2066 = vadd.f32 %v1977, %v2031
    %v2067 = vadd.f32 %v1978, %v2030
    %v2068 = vadd.f32 %v1979, %v2034
    %v2069 = vadd.f32 %v1980, %v2033
    %v2070 = vadd.f32 %v1981, %v2037
    %v2071 = vadd.f32 %v1982, %v2036
    %v2072 = vadd.f32 %v1983, %v2040
    %v2073 = vadd.f32 %v1984, %v2039
    %v2074 = vadd.f32 %v1985, %v2043
    %v2075 = vadd.f32 %v1986, %v2042
    %v2076 = vld [vmem:[#allocation3 + $0x30] sm:$0xfe]
    %v2077 = vld [vmem:[#allocation3 + $0x80] sm:$0x7f]
    %v2078 = vld [vmem:[#allocation3 + $0xd0] sm:$0xfe]
    %v2079 = vld [vmem:[#allocation3 + $0x120] sm:$0x7f]
    %v2080 = vld [vmem:[#allocation3 + $0x170] sm:$0xfe]
    %v2081 = vld [vmem:[#allocation3 + $0x1c0] sm:$0x7f]
    %v2082 = vld [vmem:[#allocation3 + $0x210] sm:$0xfe]
    %v2083 = vld [vmem:[#allocation3 + $0x260] sm:$0x7f]
    %v2084 = vld [vmem:[#allocation3 + $0x2b0] sm:$0xfe]
    %v2085 = vld [vmem:[#allocation3 + $0x300] sm:$0x7f]
    %v2086 = vld [vmem:[#allocation3 + $0x350] sm:$0xfe]
    %v2087 = vld [vmem:[#allocation3 + $0x3a0] sm:$0x7f]
    %v2088 = vld [vmem:[#allocation3 + $0x3f0] sm:$0xfe]
    %v2089 = vld [vmem:[#allocation3 + $0x440] sm:$0x7f]
    %v2090 = vld [vmem:[#allocation3 + $0x490] sm:$0xfe]
    %v2091 = vld [vmem:[#allocation3 + $0x4e0] sm:$0x7f]
    %v2108 = vrot.slane %v2076, 1
    %v2109 = vrot.slane %v2077, 1
    %v2110 = vsel %vm2019, %v2108, %v2109
    %v2111 = vrot.slane %v2078, 1
    %v2112 = vrot.slane %v2079, 1
    %v2113 = vsel %vm2019, %v2111, %v2112
    %v2114 = vrot.slane %v2080, 1
    %v2115 = vrot.slane %v2081, 1
    %v2116 = vsel %vm2019, %v2114, %v2115
    %v2117 = vrot.slane %v2082, 1
    %v2118 = vrot.slane %v2083, 1
    %v2119 = vsel %vm2019, %v2117, %v2118
    %v2120 = vrot.slane %v2084, 1
    %v2121 = vrot.slane %v2085, 1
    %v2122 = vsel %vm2019, %v2120, %v2121
    %v2123 = vrot.slane %v2086, 1
    %v2124 = vrot.slane %v2087, 1
    %v2125 = vsel %vm2019, %v2123, %v2124
    %v2126 = vrot.slane %v2088, 1
    %v2127 = vrot.slane %v2089, 1
    %v2128 = vsel %vm2019, %v2126, %v2127
    %v2129 = vrot.slane %v2090, 1
    %v2130 = vrot.slane %v2091, 1
    %v2131 = vsel %vm2019, %v2129, %v2130
    %v2148 = vadd.f32 %v2060, %v2110
    %v2149 = vadd.f32 %v2061, %v2109
    %v2150 = vadd.f32 %v2062, %v2113
    %v2151 = vadd.f32 %v2063, %v2112
    %v2152 = vadd.f32 %v2064, %v2116
    %v2153 = vadd.f32 %v2065, %v2115
    %v2154 = vadd.f32 %v2066, %v2119
    %v2155 = vadd.f32 %v2067, %v2118
    %v2156 = vadd.f32 %v2068, %v2122
    %v2157 = vadd.f32 %v2069, %v2121
    %v2158 = vadd.f32 %v2070, %v2125
    %v2159 = vadd.f32 %v2071, %v2124
    %v2160 = vadd.f32 %v2072, %v2128
    %v2161 = vadd.f32 %v2073, %v2127
    %v2162 = vadd.f32 %v2074, %v2131
    %v2163 = vadd.f32 %v2075, %v2130
    %v2164 = vld [vmem:[#allocation2 + $0x40] sm:$0xfc]
    %v2165 = vld [vmem:[#allocation2 + $0x90] sm:$0xff]
    %v2166 = vld [vmem:[#allocation2 + $0xe0] sm:$0xfc]
    %v2167 = vld [vmem:[#allocation2 + $0x130] sm:$0xff]
    %v2168 = vld [vmem:[#allocation2 + $0x180] sm:$0xfc]
    %v2169 = vld [vmem:[#allocation2 + $0x1d0] sm:$0xff]
    %v2170 = vld [vmem:[#allocation2 + $0x220] sm:$0xfc]
    %v2171 = vld [vmem:[#allocation2 + $0x270] sm:$0xff]
    %v2172 = vld [vmem:[#allocation2 + $0x2c0] sm:$0xfc]
    %v2173 = vld [vmem:[#allocation2 + $0x310] sm:$0xff]
    %v2174 = vld [vmem:[#allocation2 + $0x360] sm:$0xfc]
    %v2175 = vld [vmem:[#allocation2 + $0x3b0] sm:$0xff]
    %v2176 = vld [vmem:[#allocation2 + $0x400] sm:$0xfc]
    %v2177 = vld [vmem:[#allocation2 + $0x450] sm:$0xff]
    %v2178 = vld [vmem:[#allocation2 + $0x4a0] sm:$0xfc]
    %v2179 = vld [vmem:[#allocation2 + $0x4f0] sm:$0xff]
    %vm2196 = vcmask 1045504
    %v2197 = vrot.slane %v2164, 2
    %v2198 = vrot.slane %v2165, 2
    %v2199 = vsel %vm2196, %v2197, %v2198
    %v2200 = vrot.slane %v2166, 2
    %v2201 = vrot.slane %v2167, 2
    %v2202 = vsel %vm2196, %v2200, %v2201
    %v2203 = vrot.slane %v2168, 2
    %v2204 = vrot.slane %v2169, 2
    %v2205 = vsel %vm2196, %v2203, %v2204
    %v2206 = vrot.slane %v2170, 2
    %v2207 = vrot.slane %v2171, 2
    %v2208 = vsel %vm2196, %v2206, %v2207
    %v2209 = vrot.slane %v2172, 2
    %v2210 = vrot.slane %v2173, 2
    %v2211 = vsel %vm2196, %v2209, %v2210
    %v2212 = vrot.slane %v2174, 2
    %v2213 = vrot.slane %v2175, 2
    %v2214 = vsel %vm2196, %v2212, %v2213
    %v2215 = vrot.slane %v2176, 2
    %v2216 = vrot.slane %v2177, 2
    %v2217 = vsel %vm2196, %v2215, %v2216
    %v2218 = vrot.slane %v2178, 2
    %v2219 = vrot.slane %v2179, 2
    %v2220 = vsel %vm2196, %v2218, %v2219
    %v2237 = vadd.f32 %v2148, %v2199
    %v2238 = vadd.f32 %v2149, %v2198
    %v2239 = vadd.f32 %v2150, %v2202
    %v2240 = vadd.f32 %v2151, %v2201
    %v2241 = vadd.f32 %v2152, %v2205
    %v2242 = vadd.f32 %v2153, %v2204
    %v2243 = vadd.f32 %v2154, %v2208
    %v2244 = vadd.f32 %v2155, %v2207
    %v2245 = vadd.f32 %v2156, %v2211
    %v2246 = vadd.f32 %v2157, %v2210
    %v2247 = vadd.f32 %v2158, %v2214
    %v2248 = vadd.f32 %v2159, %v2213
    %v2249 = vadd.f32 %v2160, %v2217
    %v2250 = vadd.f32 %v2161, %v2216
    %v2251 = vadd.f32 %v2162, %v2220
    %v2252 = vadd.f32 %v2163, %v2219
    %v2253 = vld [vmem:[#allocation2 + $0x8] sm:$0xff]
    %v2254 = vld [vmem:[#allocation2 + $0x58] sm:$0x3f]
    %v2255 = vld [vmem:[#allocation2 + $0xa8] sm:$0xff]
    %v2256 = vld [vmem:[#allocation2 + $0xf8] sm:$0x3f]
    %v2257 = vld [vmem:[#allocation2 + $0x148] sm:$0xff]
    %v2258 = vld [vmem:[#allocation2 + $0x198] sm:$0x3f]
    %v2259 = vld [vmem:[#allocation2 + $0x1e8] sm:$0xff]
    %v2260 = vld [vmem:[#allocation2 + $0x238] sm:$0x3f]
    %v2261 = vld [vmem:[#allocation2 + $0x288] sm:$0xff]
    %v2262 = vld [vmem:[#allocation2 + $0x2d8] sm:$0x3f]
    %v2263 = vld [vmem:[#allocation2 + $0x328] sm:$0xff]
    %v2264 = vld [vmem:[#allocation2 + $0x378] sm:$0x3f]
    %v2265 = vld [vmem:[#allocation2 + $0x3c8] sm:$0xff]
    %v2266 = vld [vmem:[#allocation2 + $0x418] sm:$0x3f]
    %v2267 = vld [vmem:[#allocation2 + $0x468] sm:$0xff]
    %v2268 = vld [vmem:[#allocation2 + $0x4b8] sm:$0x3f]
    %v2269 = vld [vmem:[#allocation3 + $0x18] sm:$0xff]
    %v2270 = vld [vmem:[#allocation3 + $0x68] sm:$0x3f]
    %v2271 = vld [vmem:[#allocation3 + $0xb8] sm:$0xff]
    %v2272 = vld [vmem:[#allocation3 + $0x108] sm:$0x3f]
    %v2273 = vld [vmem:[#allocation3 + $0x158] sm:$0xff]
    %v2274 = vld [vmem:[#allocation3 + $0x1a8] sm:$0x3f]
    %v2275 = vld [vmem:[#allocation3 + $0x1f8] sm:$0xff]
    %v2276 = vld [vmem:[#allocation3 + $0x248] sm:$0x3f]
    %v2277 = vld [vmem:[#allocation3 + $0x298] sm:$0xff]
    %v2278 = vld [vmem:[#allocation3 + $0x2e8] sm:$0x3f]
    %v2279 = vld [vmem:[#allocation3 + $0x338] sm:$0xff]
    %v2280 = vld [vmem:[#allocation3 + $0x388] sm:$0x3f]
    %v2281 = vld [vmem:[#allocation3 + $0x3d8] sm:$0xff]
    %v2282 = vld [vmem:[#allocation3 + $0x428] sm:$0x3f]
    %v2283 = vld [vmem:[#allocation3 + $0x478] sm:$0xff]
    %v2284 = vld [vmem:[#allocation3 + $0x4c8] sm:$0x3f]
    %v2285 = vadd.f32 %v2253, %v2269
    %v2286 = vadd.f32 %v2254, %v2270
    %v2287 = vadd.f32 %v2255, %v2271
    %v2288 = vadd.f32 %v2256, %v2272
    %v2289 = vadd.f32 %v2257, %v2273
    %v2290 = vadd.f32 %v2258, %v2274
    %v2291 = vadd.f32 %v2259, %v2275
    %v2292 = vadd.f32 %v2260, %v2276
    %v2293 = vadd.f32 %v2261, %v2277
    %v2294 = vadd.f32 %v2262, %v2278
    %v2295 = vadd.f32 %v2263, %v2279
    %v2296 = vadd.f32 %v2264, %v2280
    %v2297 = vadd.f32 %v2265, %v2281
    %v2298 = vadd.f32 %v2266, %v2282
    %v2299 = vadd.f32 %v2267, %v2283
    %v2300 = vadd.f32 %v2268, %v2284
    %v2301 = vld [vmem:[#allocation2 + $0x28] sm:$0xfe]
    %v2302 = vld [vmem:[#allocation2 + $0x78] sm:$0x7f]
    %v2303 = vld [vmem:[#allocation2 + $0xc8] sm:$0xfe]
    %v2304 = vld [vmem:[#allocation2 + $0x118] sm:$0x7f]
    %v2305 = vld [vmem:[#allocation2 + $0x168] sm:$0xfe]
    %v2306 = vld [vmem:[#allocation2 + $0x1b8] sm:$0x7f]
    %v2307 = vld [vmem:[#allocation2 + $0x208] sm:$0xfe]
    %v2308 = vld [vmem:[#allocation2 + $0x258] sm:$0x7f]
    %v2309 = vld [vmem:[#allocation2 + $0x2a8] sm:$0xfe]
    %v2310 = vld [vmem:[#allocation2 + $0x2f8] sm:$0x7f]
    %v2311 = vld [vmem:[#allocation2 + $0x348] sm:$0xfe]
    %v2312 = vld [vmem:[#allocation2 + $0x398] sm:$0x7f]
    %v2313 = vld [vmem:[#allocation2 + $0x3e8] sm:$0xfe]
    %v2314 = vld [vmem:[#allocation2 + $0x438] sm:$0x7f]
    %v2315 = vld [vmem:[#allocation2 + $0x488] sm:$0xfe]
    %v2316 = vld [vmem:[#allocation2 + $0x4d8] sm:$0x7f]
    %v2333 = vrot.slane %v2301, 1
    %v2334 = vrot.slane %v2302, 1
    %v2335 = vsel %vm2019, %v2333, %v2334
    %v2336 = vrot.slane %v2303, 1
    %v2337 = vrot.slane %v2304, 1
    %v2338 = vsel %vm2019, %v2336, %v2337
    %v2339 = vrot.slane %v2305, 1
    %v2340 = vrot.slane %v2306, 1
    %v2341 = vsel %vm2019, %v2339, %v2340
    %v2342 = vrot.slane %v2307, 1
    %v2343 = vrot.slane %v2308, 1
    %v2344 = vsel %vm2019, %v2342, %v2343
    %v2345 = vrot.slane %v2309, 1
    %v2346 = vrot.slane %v2310, 1
    %v2347 = vsel %vm2019, %v2345, %v2346
    %v2348 = vrot.slane %v2311, 1
    %v2349 = vrot.slane %v2312, 1
    %v2350 = vsel %vm2019, %v2348, %v2349
    %v2351 = vrot.slane %v2313, 1
    %v2352 = vrot.slane %v2314, 1
    %v2353 = vsel %vm2019, %v2351, %v2352
    %v2354 = vrot.slane %v2315, 1
    %v2355 = vrot.slane %v2316, 1
    %v2356 = vsel %vm2019, %v2354, %v2355
    %v2373 = vadd.f32 %v2285, %v2335
    %v2374 = vadd.f32 %v2286, %v2334
    %v2375 = vadd.f32 %v2287, %v2338
    %v2376 = vadd.f32 %v2288, %v2337
    %v2377 = vadd.f32 %v2289, %v2341
    %v2378 = vadd.f32 %v2290, %v2340
    %v2379 = vadd.f32 %v2291, %v2344
    %v2380 = vadd.f32 %v2292, %v2343
    %v2381 = vadd.f32 %v2293, %v2347
    %v2382 = vadd.f32 %v2294, %v2346
    %v2383 = vadd.f32 %v2295, %v2350
    %v2384 = vadd.f32 %v2296, %v2349
    %v2385 = vadd.f32 %v2297, %v2353
    %v2386 = vadd.f32 %v2298, %v2352
    %v2387 = vadd.f32 %v2299, %v2356
    %v2388 = vadd.f32 %v2300, %v2355
    %v2389 = vld [vmem:[#allocation3 + $0x38] sm:$0xfe]
    %v2390 = vld [vmem:[#allocation3 + $0x88] sm:$0x7f]
    %v2391 = vld [vmem:[#allocation3 + $0xd8] sm:$0xfe]
    %v2392 = vld [vmem:[#allocation3 + $0x128] sm:$0x7f]
    %v2393 = vld [vmem:[#allocation3 + $0x178] sm:$0xfe]
    %v2394 = vld [vmem:[#allocation3 + $0x1c8] sm:$0x7f]
    %v2395 = vld [vmem:[#allocation3 + $0x218] sm:$0xfe]
    %v2396 = vld [vmem:[#allocation3 + $0x268] sm:$0x7f]
    %v2397 = vld [vmem:[#allocation3 + $0x2b8] sm:$0xfe]
    %v2398 = vld [vmem:[#allocation3 + $0x308] sm:$0x7f]
    %v2399 = vld [vmem:[#allocation3 + $0x358] sm:$0xfe]
    %v2400 = vld [vmem:[#allocation3 + $0x3a8] sm:$0x7f]
    %v2401 = vld [vmem:[#allocation3 + $0x3f8] sm:$0xfe]
    %v2402 = vld [vmem:[#allocation3 + $0x448] sm:$0x7f]
    %v2403 = vld [vmem:[#allocation3 + $0x498] sm:$0xfe]
    %v2404 = vld [vmem:[#allocation3 + $0x4e8] sm:$0x7f]
    %v2421 = vrot.slane %v2389, 1
    %v2422 = vrot.slane %v2390, 1
    %v2423 = vsel %vm2019, %v2421, %v2422
    %v2424 = vrot.slane %v2391, 1
    %v2425 = vrot.slane %v2392, 1
    %v2426 = vsel %vm2019, %v2424, %v2425
    %v2427 = vrot.slane %v2393, 1
    %v2428 = vrot.slane %v2394, 1
    %v2429 = vsel %vm2019, %v2427, %v2428
    %v2430 = vrot.slane %v2395, 1
    %v2431 = vrot.slane %v2396, 1
    %v2432 = vsel %vm2019, %v2430, %v2431
    %v2433 = vrot.slane %v2397, 1
    %v2434 = vrot.slane %v2398, 1
    %v2435 = vsel %vm2019, %v2433, %v2434
    %v2436 = vrot.slane %v2399, 1
    %v2437 = vrot.slane %v2400, 1
    %v2438 = vsel %vm2019, %v2436, %v2437
    %v2439 = vrot.slane %v2401, 1
    %v2440 = vrot.slane %v2402, 1
    %v2441 = vsel %vm2019, %v2439, %v2440
    %v2442 = vrot.slane %v2403, 1
    %v2443 = vrot.slane %v2404, 1
    %v2444 = vsel %vm2019, %v2442, %v2443
    %v2461 = vadd.f32 %v2373, %v2423
    %v2462 = vadd.f32 %v2374, %v2422
    %v2463 = vadd.f32 %v2375, %v2426
    %v2464 = vadd.f32 %v2376, %v2425
    %v2465 = vadd.f32 %v2377, %v2429
    %v2466 = vadd.f32 %v2378, %v2428
    %v2467 = vadd.f32 %v2379, %v2432
    %v2468 = vadd.f32 %v2380, %v2431
    %v2469 = vadd.f32 %v2381, %v2435
    %v2470 = vadd.f32 %v2382, %v2434
    %v2471 = vadd.f32 %v2383, %v2438
    %v2472 = vadd.f32 %v2384, %v2437
    %v2473 = vadd.f32 %v2385, %v2441
    %v2474 = vadd.f32 %v2386, %v2440
    %v2475 = vadd.f32 %v2387, %v2444
    %v2476 = vadd.f32 %v2388, %v2443
    %v2477 = vld [vmem:[#allocation2 + $0x48] sm:$0xfc]
    %v2478 = vld [vmem:[#allocation2 + $0x98] sm:$0xff]
    %v2479 = vld [vmem:[#allocation2 + $0xe8] sm:$0xfc]
    %v2480 = vld [vmem:[#allocation2 + $0x138] sm:$0xff]
    %v2481 = vld [vmem:[#allocation2 + $0x188] sm:$0xfc]
    %v2482 = vld [vmem:[#allocation2 + $0x1d8] sm:$0xff]
    %v2483 = vld [vmem:[#allocation2 + $0x228] sm:$0xfc]
    %v2484 = vld [vmem:[#allocation2 + $0x278] sm:$0xff]
    %v2485 = vld [vmem:[#allocation2 + $0x2c8] sm:$0xfc]
    %v2486 = vld [vmem:[#allocation2 + $0x318] sm:$0xff]
    %v2487 = vld [vmem:[#allocation2 + $0x368] sm:$0xfc]
    %v2488 = vld [vmem:[#allocation2 + $0x3b8] sm:$0xff]
    %v2489 = vld [vmem:[#allocation2 + $0x408] sm:$0xfc]
    %v2490 = vld [vmem:[#allocation2 + $0x458] sm:$0xff]
    %v2491 = vld [vmem:[#allocation2 + $0x4a8] sm:$0xfc]
    %v2492 = vld [vmem:[#allocation2 + $0x4f8] sm:$0xff]
    %v2509 = vrot.slane %v2477, 2
    %v2510 = vrot.slane %v2478, 2
    %v2511 = vsel %vm2196, %v2509, %v2510
    %v2512 = vrot.slane %v2479, 2
    %v2513 = vrot.slane %v2480, 2
    %v2514 = vsel %vm2196, %v2512, %v2513
    %v2515 = vrot.slane %v2481, 2
    %v2516 = vrot.slane %v2482, 2
    %v2517 = vsel %vm2196, %v2515, %v2516
    %v2518 = vrot.slane %v2483, 2
    %v2519 = vrot.slane %v2484, 2
    %v2520 = vsel %vm2196, %v2518, %v2519
    %v2521 = vrot.slane %v2485, 2
    %v2522 = vrot.slane %v2486, 2
    %v2523 = vsel %vm2196, %v2521, %v2522
    %v2524 = vrot.slane %v2487, 2
    %v2525 = vrot.slane %v2488, 2
    %v2526 = vsel %vm2196, %v2524, %v2525
    %v2527 = vrot.slane %v2489, 2
    %v2528 = vrot.slane %v2490, 2
    %v2529 = vsel %vm2196, %v2527, %v2528
    %v2530 = vrot.slane %v2491, 2
    %v2531 = vrot.slane %v2492, 2
    %v2532 = vsel %vm2196, %v2530, %v2531
    %v2549 = vadd.f32 %v2461, %v2511
    %v2550 = vadd.f32 %v2462, %v2510
    %v2551 = vadd.f32 %v2463, %v2514
    %v2552 = vadd.f32 %v2464, %v2513
    %v2553 = vadd.f32 %v2465, %v2517
    %v2554 = vadd.f32 %v2466, %v2516
    %v2555 = vadd.f32 %v2467, %v2520
    %v2556 = vadd.f32 %v2468, %v2519
    %v2557 = vadd.f32 %v2469, %v2523
    %v2558 = vadd.f32 %v2470, %v2522
    %v2559 = vadd.f32 %v2471, %v2526
    %v2560 = vadd.f32 %v2472, %v2525
    %v2561 = vadd.f32 %v2473, %v2529
    %v2562 = vadd.f32 %v2474, %v2528
    %v2563 = vadd.f32 %v2475, %v2532
    %v2564 = vadd.f32 %v2476, %v2531
    %v2565 = vmax.f32 %v2237, %v2549
    %v2566 = vmax.f32 %v2238, %v2550
    %v2567 = vmax.f32 %v2239, %v2551
    %v2568 = vmax.f32 %v2240, %v2552
    %v2569 = vmax.f32 %v2241, %v2553
    %v2570 = vmax.f32 %v2242, %v2554
    %v2571 = vmax.f32 %v2243, %v2555
    %v2572 = vmax.f32 %v2244, %v2556
    %v2573 = vmax.f32 %v2245, %v2557
    %v2574 = vmax.f32 %v2246, %v2558
    %v2575 = vmax.f32 %v2247, %v2559
    %v2576 = vmax.f32 %v2248, %v2560
    %v2577 = vmax.f32 %v2249, %v2561
    %v2578 = vmax.f32 %v2250, %v2562
    %v2579 = vmax.f32 %v2251, %v2563
    %v2580 = vmax.f32 %v2252, %v2564
    %v2581 = vld [vmem:[#allocation3] sm:$0xff]
    %v2582 = vld [vmem:[#allocation3 + $0x50] sm:$0x3f]
    %v2583 = vld [vmem:[#allocation3 + $0xa0] sm:$0xff]
    %v2584 = vld [vmem:[#allocation3 + $0xf0] sm:$0x3f]
    %v2585 = vld [vmem:[#allocation3 + $0x140] sm:$0xff]
    %v2586 = vld [vmem:[#allocation3 + $0x190] sm:$0x3f]
    %v2587 = vld [vmem:[#allocation3 + $0x1e0] sm:$0xff]
    %v2588 = vld [vmem:[#allocation3 + $0x230] sm:$0x3f]
    %v2589 = vld [vmem:[#allocation3 + $0x280] sm:$0xff]
    %v2590 = vld [vmem:[#allocation3 + $0x2d0] sm:$0x3f]
    %v2591 = vld [vmem:[#allocation3 + $0x320] sm:$0xff]
    %v2592 = vld [vmem:[#allocation3 + $0x370] sm:$0x3f]
    %v2593 = vld [vmem:[#allocation3 + $0x3c0] sm:$0xff]
    %v2594 = vld [vmem:[#allocation3 + $0x410] sm:$0x3f]
    %v2595 = vld [vmem:[#allocation3 + $0x460] sm:$0xff]
    %v2596 = vld [vmem:[#allocation3 + $0x4b0] sm:$0x3f]
    %v2597 = vld [vmem:[#allocation2 + $0x10] sm:$0xfe]
    %v2598 = vld [vmem:[#allocation2 + $0x60] sm:$0x7f]
    %v2599 = vld [vmem:[#allocation2 + $0xb0] sm:$0xfe]
    %v2600 = vld [vmem:[#allocation2 + $0x100] sm:$0x7f]
    %v2601 = vld [vmem:[#allocation2 + $0x150] sm:$0xfe]
    %v2602 = vld [vmem:[#allocation2 + $0x1a0] sm:$0x7f]
    %v2603 = vld [vmem:[#allocation2 + $0x1f0] sm:$0xfe]
    %v2604 = vld [vmem:[#allocation2 + $0x240] sm:$0x7f]
    %v2605 = vld [vmem:[#allocation2 + $0x290] sm:$0xfe]
    %v2606 = vld [vmem:[#allocation2 + $0x2e0] sm:$0x7f]
    %v2607 = vld [vmem:[#allocation2 + $0x330] sm:$0xfe]
    %v2608 = vld [vmem:[#allocation2 + $0x380] sm:$0x7f]
    %v2609 = vld [vmem:[#allocation2 + $0x3d0] sm:$0xfe]
    %v2610 = vld [vmem:[#allocation2 + $0x420] sm:$0x7f]
    %v2611 = vld [vmem:[#allocation2 + $0x470] sm:$0xfe]
    %v2612 = vld [vmem:[#allocation2 + $0x4c0] sm:$0x7f]
    %v2629 = vrot.slane %v2597, 1
    %v2630 = vrot.slane %v2598, 1
    %v2631 = vsel %vm2019, %v2629, %v2630
    %v2632 = vrot.slane %v2599, 1
    %v2633 = vrot.slane %v2600, 1
    %v2634 = vsel %vm2019, %v2632, %v2633
    %v2635 = vrot.slane %v2601, 1
    %v2636 = vrot.slane %v2602, 1
    %v2637 = vsel %vm2019, %v2635, %v2636
    %v2638 = vrot.slane %v2603, 1
    %v2639 = vrot.slane %v2604, 1
    %v2640 = vsel %vm2019, %v2638, %v2639
    %v2641 = vrot.slane %v2605, 1
    %v2642 = vrot.slane %v2606, 1
    %v2643 = vsel %vm2019, %v2641, %v2642
    %v2644 = vrot.slane %v2607, 1
    %v2645 = vrot.slane %v2608, 1
    %v2646 = vsel %vm2019, %v2644, %v2645
    %v2647 = vrot.slane %v2609, 1
    %v2648 = vrot.slane %v2610, 1
    %v2649 = vsel %vm2019, %v2647, %v2648
    %v2650 = vrot.slane %v2611, 1
    %v2651 = vrot.slane %v2612, 1
    %v2652 = vsel %vm2019, %v2650, %v2651
    %v2669 = vadd.f32 %v2581, %v2631
    %v2670 = vadd.f32 %v2582, %v2630
    %v2671 = vadd.f32 %v2583, %v2634
    %v2672 = vadd.f32 %v2584, %v2633
    %v2673 = vadd.f32 %v2585, %v2637
    %v2674 = vadd.f32 %v2586, %v2636
    %v2675 = vadd.f32 %v2587, %v2640
    %v2676 = vadd.f32 %v2588, %v2639
    %v2677 = vadd.f32 %v2589, %v2643
    %v2678 = vadd.f32 %v2590, %v2642
    %v2679 = vadd.f32 %v2591, %v2646
    %v2680 = vadd.f32 %v2592, %v2645
    %v2681 = vadd.f32 %v2593, %v2649
    %v2682 = vadd.f32 %v2594, %v2648
    %v2683 = vadd.f32 %v2595, %v2652
    %v2684 = vadd.f32 %v2596, %v2651
    %v2685 = vld [vmem:[#allocation3 + $0x20] sm:$0xfe]
    %v2686 = vld [vmem:[#allocation3 + $0x70] sm:$0x7f]
    %v2687 = vld [vmem:[#allocation3 + $0xc0] sm:$0xfe]
    %v2688 = vld [vmem:[#allocation3 + $0x110] sm:$0x7f]
    %v2689 = vld [vmem:[#allocation3 + $0x160] sm:$0xfe]
    %v2690 = vld [vmem:[#allocation3 + $0x1b0] sm:$0x7f]
    %v2691 = vld [vmem:[#allocation3 + $0x200] sm:$0xfe]
    %v2692 = vld [vmem:[#allocation3 + $0x250] sm:$0x7f]
    %v2693 = vld [vmem:[#allocation3 + $0x2a0] sm:$0xfe]
    %v2694 = vld [vmem:[#allocation3 + $0x2f0] sm:$0x7f]
    %v2695 = vld [vmem:[#allocation3 + $0x340] sm:$0xfe]
    %v2696 = vld [vmem:[#allocation3 + $0x390] sm:$0x7f]
    %v2697 = vld [vmem:[#allocation3 + $0x3e0] sm:$0xfe]
    %v2698 = vld [vmem:[#allocation3 + $0x430] sm:$0x7f]
    %v2699 = vld [vmem:[#allocation3 + $0x480] sm:$0xfe]
    %v2700 = vld [vmem:[#allocation3 + $0x4d0] sm:$0x7f]
    %v2717 = vrot.slane %v2685, 1
    %v2718 = vrot.slane %v2686, 1
    %v2719 = vsel %vm2019, %v2717, %v2718
    %v2720 = vrot.slane %v2687, 1
    %v2721 = vrot.slane %v2688, 1
    %v2722 = vsel %vm2019, %v2720, %v2721
    %v2723 = vrot.slane %v2689, 1
    %v2724 = vrot.slane %v2690, 1
    %v2725 = vsel %vm2019, %v2723, %v2724
    %v2726 = vrot.slane %v2691, 1
    %v2727 = vrot.slane %v2692, 1
    %v2728 = vsel %vm2019, %v2726, %v2727
    %v2729 = vrot.slane %v2693, 1
    %v2730 = vrot.slane %v2694, 1
    %v2731 = vsel %vm2019, %v2729, %v2730
    %v2732 = vrot.slane %v2695, 1
    %v2733 = vrot.slane %v2696, 1
    %v2734 = vsel %vm2019, %v2732, %v2733
    %v2735 = vrot.slane %v2697, 1
    %v2736 = vrot.slane %v2698, 1
    %v2737 = vsel %vm2019, %v2735, %v2736
    %v2738 = vrot.slane %v2699, 1
    %v2739 = vrot.slane %v2700, 1
    %v2740 = vsel %vm2019, %v2738, %v2739
    %v2757 = vadd.f32 %v2669, %v2719
    %v2758 = vadd.f32 %v2670, %v2718
    %v2759 = vadd.f32 %v2671, %v2722
    %v2760 = vadd.f32 %v2672, %v2721
    %v2761 = vadd.f32 %v2673, %v2725
    %v2762 = vadd.f32 %v2674, %v2724
    %v2763 = vadd.f32 %v2675, %v2728
    %v2764 = vadd.f32 %v2676, %v2727
    %v2765 = vadd.f32 %v2677, %v2731
    %v2766 = vadd.f32 %v2678, %v2730
    %v2767 = vadd.f32 %v2679, %v2734
    %v2768 = vadd.f32 %v2680, %v2733
    %v2769 = vadd.f32 %v2681, %v2737
    %v2770 = vadd.f32 %v2682, %v2736
    %v2771 = vadd.f32 %v2683, %v2740
    %v2772 = vadd.f32 %v2684, %v2739
    %v2773 = vld [vmem:[#allocation2 + $0x30] sm:$0xfc]
    %v2774 = vld [vmem:[#allocation2 + $0x80] sm:$0xff]
    %v2775 = vld [vmem:[#allocation2 + $0xd0] sm:$0xfc]
    %v2776 = vld [vmem:[#allocation2 + $0x120] sm:$0xff]
    %v2777 = vld [vmem:[#allocation2 + $0x170] sm:$0xfc]
    %v2778 = vld [vmem:[#allocation2 + $0x1c0] sm:$0xff]
    %v2779 = vld [vmem:[#allocation2 + $0x210] sm:$0xfc]
    %v2780 = vld [vmem:[#allocation2 + $0x260] sm:$0xff]
    %v2781 = vld [vmem:[#allocation2 + $0x2b0] sm:$0xfc]
    %v2782 = vld [vmem:[#allocation2 + $0x300] sm:$0xff]
    %v2783 = vld [vmem:[#allocation2 + $0x350] sm:$0xfc]
    %v2784 = vld [vmem:[#allocation2 + $0x3a0] sm:$0xff]
    %v2785 = vld [vmem:[#allocation2 + $0x3f0] sm:$0xfc]
    %v2786 = vld [vmem:[#allocation2 + $0x440] sm:$0xff]
    %v2787 = vld [vmem:[#allocation2 + $0x490] sm:$0xfc]
    %v2788 = vld [vmem:[#allocation2 + $0x4e0] sm:$0xff]
    %v2805 = vrot.slane %v2773, 2
    %v2806 = vrot.slane %v2774, 2
    %v2807 = vsel %vm2196, %v2805, %v2806
    %v2808 = vrot.slane %v2775, 2
    %v2809 = vrot.slane %v2776, 2
    %v2810 = vsel %vm2196, %v2808, %v2809
    %v2811 = vrot.slane %v2777, 2
    %v2812 = vrot.slane %v2778, 2
    %v2813 = vsel %vm2196, %v2811, %v2812
    %v2814 = vrot.slane %v2779, 2
    %v2815 = vrot.slane %v2780, 2
    %v2816 = vsel %vm2196, %v2814, %v2815
    %v2817 = vrot.slane %v2781, 2
    %v2818 = vrot.slane %v2782, 2
    %v2819 = vsel %vm2196, %v2817, %v2818
    %v2820 = vrot.slane %v2783, 2
    %v2821 = vrot.slane %v2784, 2
    %v2822 = vsel %vm2196, %v2820, %v2821
    %v2823 = vrot.slane %v2785, 2
    %v2824 = vrot.slane %v2786, 2
    %v2825 = vsel %vm2196, %v2823, %v2824
    %v2826 = vrot.slane %v2787, 2
    %v2827 = vrot.slane %v2788, 2
    %v2828 = vsel %vm2196, %v2826, %v2827
    %v2845 = vadd.f32 %v2757, %v2807
    %v2846 = vadd.f32 %v2758, %v2806
    %v2847 = vadd.f32 %v2759, %v2810
    %v2848 = vadd.f32 %v2760, %v2809
    %v2849 = vadd.f32 %v2761, %v2813
    %v2850 = vadd.f32 %v2762, %v2812
    %v2851 = vadd.f32 %v2763, %v2816
    %v2852 = vadd.f32 %v2764, %v2815
    %v2853 = vadd.f32 %v2765, %v2819
    %v2854 = vadd.f32 %v2766, %v2818
    %v2855 = vadd.f32 %v2767, %v2822
    %v2856 = vadd.f32 %v2768, %v2821
    %v2857 = vadd.f32 %v2769, %v2825
    %v2858 = vadd.f32 %v2770, %v2824
    %v2859 = vadd.f32 %v2771, %v2828
    %v2860 = vadd.f32 %v2772, %v2827
    %v2861 = vld [vmem:[#allocation3 + $0x40] sm:$0xfc]
    %v2862 = vld [vmem:[#allocation3 + $0x90] sm:$0xff]
    %v2863 = vld [vmem:[#allocation3 + $0xe0] sm:$0xfc]
    %v2864 = vld [vmem:[#allocation3 + $0x130] sm:$0xff]
    %v2865 = vld [vmem:[#allocation3 + $0x180] sm:$0xfc]
    %v2866 = vld [vmem:[#allocation3 + $0x1d0] sm:$0xff]
    %v2867 = vld [vmem:[#allocation3 + $0x220] sm:$0xfc]
    %v2868 = vld [vmem:[#allocation3 + $0x270] sm:$0xff]
    %v2869 = vld [vmem:[#allocation3 + $0x2c0] sm:$0xfc]
    %v2870 = vld [vmem:[#allocation3 + $0x310] sm:$0xff]
    %v2871 = vld [vmem:[#allocation3 + $0x360] sm:$0xfc]
    %v2872 = vld [vmem:[#allocation3 + $0x3b0] sm:$0xff]
    %v2873 = vld [vmem:[#allocation3 + $0x400] sm:$0xfc]
    %v2874 = vld [vmem:[#allocation3 + $0x450] sm:$0xff]
    %v2875 = vld [vmem:[#allocation3 + $0x4a0] sm:$0xfc]
    %v2876 = vld [vmem:[#allocation3 + $0x4f0] sm:$0xff]
    %v2893 = vrot.slane %v2861, 2
    %v2894 = vrot.slane %v2862, 2
    %v2895 = vsel %vm2196, %v2893, %v2894
    %v2896 = vrot.slane %v2863, 2
    %v2897 = vrot.slane %v2864, 2
    %v2898 = vsel %vm2196, %v2896, %v2897
    %v2899 = vrot.slane %v2865, 2
    %v2900 = vrot.slane %v2866, 2
    %v2901 = vsel %vm2196, %v2899, %v2900
    %v2902 = vrot.slane %v2867, 2
    %v2903 = vrot.slane %v2868, 2
    %v2904 = vsel %vm2196, %v2902, %v2903
    %v2905 = vrot.slane %v2869, 2
    %v2906 = vrot.slane %v2870, 2
    %v2907 = vsel %vm2196, %v2905, %v2906
    %v2908 = vrot.slane %v2871, 2
    %v2909 = vrot.slane %v2872, 2
    %v2910 = vsel %vm2196, %v2908, %v2909
    %v2911 = vrot.slane %v2873, 2
    %v2912 = vrot.slane %v2874, 2
    %v2913 = vsel %vm2196, %v2911, %v2912
    %v2914 = vrot.slane %v2875, 2
    %v2915 = vrot.slane %v2876, 2
    %v2916 = vsel %vm2196, %v2914, %v2915
    %v2933 = vadd.f32 %v2845, %v2895
    %v2934 = vadd.f32 %v2846, %v2894
    %v2935 = vadd.f32 %v2847, %v2898
    %v2936 = vadd.f32 %v2848, %v2897
    %v2937 = vadd.f32 %v2849, %v2901
    %v2938 = vadd.f32 %v2850, %v2900
    %v2939 = vadd.f32 %v2851, %v2904
    %v2940 = vadd.f32 %v2852, %v2903
    %v2941 = vadd.f32 %v2853, %v2907
    %v2942 = vadd.f32 %v2854, %v2906
    %v2943 = vadd.f32 %v2855, %v2910
    %v2944 = vadd.f32 %v2856, %v2909
    %v2945 = vadd.f32 %v2857, %v2913
    %v2946 = vadd.f32 %v2858, %v2912
    %v2947 = vadd.f32 %v2859, %v2916
    %v2948 = vadd.f32 %v2860, %v2915
    %v2949 = vmax.f32 %v2565, %v2933
    %v2950 = vmax.f32 %v2566, %v2934
    %v2951 = vmax.f32 %v2567, %v2935
    %v2952 = vmax.f32 %v2568, %v2936
    %v2953 = vmax.f32 %v2569, %v2937
    %v2954 = vmax.f32 %v2570, %v2938
    %v2955 = vmax.f32 %v2571, %v2939
    %v2956 = vmax.f32 %v2572, %v2940
    %v2957 = vmax.f32 %v2573, %v2941
    %v2958 = vmax.f32 %v2574, %v2942
    %v2959 = vmax.f32 %v2575, %v2943
    %v2960 = vmax.f32 %v2576, %v2944
    %v2961 = vmax.f32 %v2577, %v2945
    %v2962 = vmax.f32 %v2578, %v2946
    %v2963 = vmax.f32 %v2579, %v2947
    %v2964 = vmax.f32 %v2580, %v2948
    %v2965 = vld [vmem:[#allocation3 + $0x8] sm:$0xff]
    %v2966 = vld [vmem:[#allocation3 + $0x58] sm:$0x3f]
    %v2967 = vld [vmem:[#allocation3 + $0xa8] sm:$0xff]
    %v2968 = vld [vmem:[#allocation3 + $0xf8] sm:$0x3f]
    %v2969 = vld [vmem:[#allocation3 + $0x148] sm:$0xff]
    %v2970 = vld [vmem:[#allocation3 + $0x198] sm:$0x3f]
    %v2971 = vld [vmem:[#allocation3 + $0x1e8] sm:$0xff]
    %v2972 = vld [vmem:[#allocation3 + $0x238] sm:$0x3f]
    %v2973 = vld [vmem:[#allocation3 + $0x288] sm:$0xff]
    %v2974 = vld [vmem:[#allocation3 + $0x2d8] sm:$0x3f]
    %v2975 = vld [vmem:[#allocation3 + $0x328] sm:$0xff]
    %v2976 = vld [vmem:[#allocation3 + $0x378] sm:$0x3f]
    %v2977 = vld [vmem:[#allocation3 + $0x3c8] sm:$0xff]
    %v2978 = vld [vmem:[#allocation3 + $0x418] sm:$0x3f]
    %v2979 = vld [vmem:[#allocation3 + $0x468] sm:$0xff]
    %v2980 = vld [vmem:[#allocation3 + $0x4b8] sm:$0x3f]
    %v2981 = vld [vmem:[#allocation2 + $0x18] sm:$0xfe]
    %v2982 = vld [vmem:[#allocation2 + $0x68] sm:$0x7f]
    %v2983 = vld [vmem:[#allocation2 + $0xb8] sm:$0xfe]
    %v2984 = vld [vmem:[#allocation2 + $0x108] sm:$0x7f]
    %v2985 = vld [vmem:[#allocation2 + $0x158] sm:$0xfe]
    %v2986 = vld [vmem:[#allocation2 + $0x1a8] sm:$0x7f]
    %v2987 = vld [vmem:[#allocation2 + $0x1f8] sm:$0xfe]
    %v2988 = vld [vmem:[#allocation2 + $0x248] sm:$0x7f]
    %v2989 = vld [vmem:[#allocation2 + $0x298] sm:$0xfe]
    %v2990 = vld [vmem:[#allocation2 + $0x2e8] sm:$0x7f]
    %v2991 = vld [vmem:[#allocation2 + $0x338] sm:$0xfe]
    %v2992 = vld [vmem:[#allocation2 + $0x388] sm:$0x7f]
    %v2993 = vld [vmem:[#allocation2 + $0x3d8] sm:$0xfe]
    %v2994 = vld [vmem:[#allocation2 + $0x428] sm:$0x7f]
    %v2995 = vld [vmem:[#allocation2 + $0x478] sm:$0xfe]
    %v2996 = vld [vmem:[#allocation2 + $0x4c8] sm:$0x7f]
    %v3013 = vrot.slane %v2981, 1
    %v3014 = vrot.slane %v2982, 1
    %v3015 = vsel %vm2019, %v3013, %v3014
    %v3016 = vrot.slane %v2983, 1
    %v3017 = vrot.slane %v2984, 1
    %v3018 = vsel %vm2019, %v3016, %v3017
    %v3019 = vrot.slane %v2985, 1
    %v3020 = vrot.slane %v2986, 1
    %v3021 = vsel %vm2019, %v3019, %v3020
    %v3022 = vrot.slane %v2987, 1
    %v3023 = vrot.slane %v2988, 1
    %v3024 = vsel %vm2019, %v3022, %v3023
    %v3025 = vrot.slane %v2989, 1
    %v3026 = vrot.slane %v2990, 1
    %v3027 = vsel %vm2019, %v3025, %v3026
    %v3028 = vrot.slane %v2991, 1
    %v3029 = vrot.slane %v2992, 1
    %v3030 = vsel %vm2019, %v3028, %v3029
    %v3031 = vrot.slane %v2993, 1
    %v3032 = vrot.slane %v2994, 1
    %v3033 = vsel %vm2019, %v3031, %v3032
    %v3034 = vrot.slane %v2995, 1
    %v3035 = vrot.slane %v2996, 1
    %v3036 = vsel %vm2019, %v3034, %v3035
    %v3053 = vadd.f32 %v2965, %v3015
    %v3054 = vadd.f32 %v2966, %v3014
    %v3055 = vadd.f32 %v2967, %v3018
    %v3056 = vadd.f32 %v2968, %v3017
    %v3057 = vadd.f32 %v2969, %v3021
    %v3058 = vadd.f32 %v2970, %v3020
    %v3059 = vadd.f32 %v2971, %v3024
    %v3060 = vadd.f32 %v2972, %v3023
    %v3061 = vadd.f32 %v2973, %v3027
    %v3062 = vadd.f32 %v2974, %v3026
    %v3063 = vadd.f32 %v2975, %v3030
    %v3064 = vadd.f32 %v2976, %v3029
    %v3065 = vadd.f32 %v2977, %v3033
    %v3066 = vadd.f32 %v2978, %v3032
    %v3067 = vadd.f32 %v2979, %v3036
    %v3068 = vadd.f32 %v2980, %v3035
    %v3069 = vld [vmem:[#allocation3 + $0x28] sm:$0xfe]
    %v3070 = vld [vmem:[#allocation3 + $0x78] sm:$0x7f]
    %v3071 = vld [vmem:[#allocation3 + $0xc8] sm:$0xfe]
    %v3072 = vld [vmem:[#allocation3 + $0x118] sm:$0x7f]
    %v3073 = vld [vmem:[#allocation3 + $0x168] sm:$0xfe]
    %v3074 = vld [vmem:[#allocation3 + $0x1b8] sm:$0x7f]
    %v3075 = vld [vmem:[#allocation3 + $0x208] sm:$0xfe]
    %v3076 = vld [vmem:[#allocation3 + $0x258] sm:$0x7f]
    %v3077 = vld [vmem:[#allocation3 + $0x2a8] sm:$0xfe]
    %v3078 = vld [vmem:[#allocation3 + $0x2f8] sm:$0x7f]
    %v3079 = vld [vmem:[#allocation3 + $0x348] sm:$0xfe]
    %v3080 = vld [vmem:[#allocation3 + $0x398] sm:$0x7f]
    %v3081 = vld [vmem:[#allocation3 + $0x3e8] sm:$0xfe]
    %v3082 = vld [vmem:[#allocation3 + $0x438] sm:$0x7f]
    %v3083 = vld [vmem:[#allocation3 + $0x488] sm:$0xfe]
    %v3084 = vld [vmem:[#allocation3 + $0x4d8] sm:$0x7f]
    %v3101 = vrot.slane %v3069, 1
    %v3102 = vrot.slane %v3070, 1
    %v3103 = vsel %vm2019, %v3101, %v3102
    %v3104 = vrot.slane %v3071, 1
    %v3105 = vrot.slane %v3072, 1
    %v3106 = vsel %vm2019, %v3104, %v3105
    %v3107 = vrot.slane %v3073, 1
    %v3108 = vrot.slane %v3074, 1
    %v3109 = vsel %vm2019, %v3107, %v3108
    %v3110 = vrot.slane %v3075, 1
    %v3111 = vrot.slane %v3076, 1
    %v3112 = vsel %vm2019, %v3110, %v3111
    %v3113 = vrot.slane %v3077, 1
    %v3114 = vrot.slane %v3078, 1
    %v3115 = vsel %vm2019, %v3113, %v3114
    %v3116 = vrot.slane %v3079, 1
    %v3117 = vrot.slane %v3080, 1
    %v3118 = vsel %vm2019, %v3116, %v3117
    %v3119 = vrot.slane %v3081, 1
    %v3120 = vrot.slane %v3082, 1
    %v3121 = vsel %vm2019, %v3119, %v3120
    %v3122 = vrot.slane %v3083, 1
    %v3123 = vrot.slane %v3084, 1
    %v3124 = vsel %vm2019, %v3122, %v3123
    %v3141 = vadd.f32 %v3053, %v3103
    %v3142 = vadd.f32 %v3054, %v3102
    %v3143 = vadd.f32 %v3055, %v3106
    %v3144 = vadd.f32 %v3056, %v3105
    %v3145 = vadd.f32 %v3057, %v3109
    %v3146 = vadd.f32 %v3058, %v3108
    %v3147 = vadd.f32 %v3059, %v3112
    %v3148 = vadd.f32 %v3060, %v3111
    %v3149 = vadd.f32 %v3061, %v3115
    %v3150 = vadd.f32 %v3062, %v3114
    %v3151 = vadd.f32 %v3063, %v3118
    %v3152 = vadd.f32 %v3064, %v3117
    %v3153 = vadd.f32 %v3065, %v3121
    %v3154 = vadd.f32 %v3066, %v3120
    %v3155 = vadd.f32 %v3067, %v3124
    %v3156 = vadd.f32 %v3068, %v3123
    %v3157 = vld [vmem:[#allocation2 + $0x38] sm:$0xfc]
    %v3158 = vld [vmem:[#allocation2 + $0x88] sm:$0xff]
    %v3159 = vld [vmem:[#allocation2 + $0xd8] sm:$0xfc]
    %v3160 = vld [vmem:[#allocation2 + $0x128] sm:$0xff]
    %v3161 = vld [vmem:[#allocation2 + $0x178] sm:$0xfc]
    %v3162 = vld [vmem:[#allocation2 + $0x1c8] sm:$0xff]
    %v3163 = vld [vmem:[#allocation2 + $0x218] sm:$0xfc]
    %v3164 = vld [vmem:[#allocation2 + $0x268] sm:$0xff]
    %v3165 = vld [vmem:[#allocation2 + $0x2b8] sm:$0xfc]
    %v3166 = vld [vmem:[#allocation2 + $0x308] sm:$0xff]
    %v3167 = vld [vmem:[#allocation2 + $0x358] sm:$0xfc]
    %v3168 = vld [vmem:[#allocation2 + $0x3a8] sm:$0xff]
    %v3169 = vld [vmem:[#allocation2 + $0x3f8] sm:$0xfc]
    %v3170 = vld [vmem:[#allocation2 + $0x448] sm:$0xff]
    %v3171 = vld [vmem:[#allocation2 + $0x498] sm:$0xfc]
    %v3172 = vld [vmem:[#allocation2 + $0x4e8] sm:$0xff]
    %v3189 = vrot.slane %v3157, 2
    %v3190 = vrot.slane %v3158, 2
    %v3191 = vsel %vm2196, %v3189, %v3190
    %v3192 = vrot.slane %v3159, 2
    %v3193 = vrot.slane %v3160, 2
    %v3194 = vsel %vm2196, %v3192, %v3193
    %v3195 = vrot.slane %v3161, 2
    %v3196 = vrot.slane %v3162, 2
    %v3197 = vsel %vm2196, %v3195, %v3196
    %v3198 = vrot.slane %v3163, 2
    %v3199 = vrot.slane %v3164, 2
    %v3200 = vsel %vm2196, %v3198, %v3199
    %v3201 = vrot.slane %v3165, 2
    %v3202 = vrot.slane %v3166, 2
    %v3203 = vsel %vm2196, %v3201, %v3202
    %v3204 = vrot.slane %v3167, 2
    %v3205 = vrot.slane %v3168, 2
    %v3206 = vsel %vm2196, %v3204, %v3205
    %v3207 = vrot.slane %v3169, 2
    %v3208 = vrot.slane %v3170, 2
    %v3209 = vsel %vm2196, %v3207, %v3208
    %v3210 = vrot.slane %v3171, 2
    %v3211 = vrot.slane %v3172, 2
    %v3212 = vsel %vm2196, %v3210, %v3211
    %v3229 = vadd.f32 %v3141, %v3191
    %v3230 = vadd.f32 %v3142, %v3190
    %v3231 = vadd.f32 %v3143, %v3194
    %v3232 = vadd.f32 %v3144, %v3193
    %v3233 = vadd.f32 %v3145, %v3197
    %v3234 = vadd.f32 %v3146, %v3196
    %v3235 = vadd.f32 %v3147, %v3200
    %v3236 = vadd.f32 %v3148, %v3199
    %v3237 = vadd.f32 %v3149, %v3203
    %v3238 = vadd.f32 %v3150, %v3202
    %v3239 = vadd.f32 %v3151, %v3206
    %v3240 = vadd.f32 %v3152, %v3205
    %v3241 = vadd.f32 %v3153, %v3209
    %v3242 = vadd.f32 %v3154, %v3208
    %v3243 = vadd.f32 %v3155, %v3212
    %v3244 = vadd.f32 %v3156, %v3211
    %v3245 = vld [vmem:[#allocation3 + $0x48] sm:$0xfc]
    %v3246 = vld [vmem:[#allocation3 + $0x98] sm:$0xff]
    %v3247 = vld [vmem:[#allocation3 + $0xe8] sm:$0xfc]
    %v3248 = vld [vmem:[#allocation3 + $0x138] sm:$0xff]
    %v3249 = vld [vmem:[#allocation3 + $0x188] sm:$0xfc]
    %v3250 = vld [vmem:[#allocation3 + $0x1d8] sm:$0xff]
    %v3251 = vld [vmem:[#allocation3 + $0x228] sm:$0xfc]
    %v3252 = vld [vmem:[#allocation3 + $0x278] sm:$0xff]
    %v3253 = vld [vmem:[#allocation3 + $0x2c8] sm:$0xfc]
    %v3254 = vld [vmem:[#allocation3 + $0x318] sm:$0xff]
    %v3255 = vld [vmem:[#allocation3 + $0x368] sm:$0xfc]
    %v3256 = vld [vmem:[#allocation3 + $0x3b8] sm:$0xff]
    %v3257 = vld [vmem:[#allocation3 + $0x408] sm:$0xfc]
    %v3258 = vld [vmem:[#allocation3 + $0x458] sm:$0xff]
    %v3259 = vld [vmem:[#allocation3 + $0x4a8] sm:$0xfc]
    %v3260 = vld [vmem:[#allocation3 + $0x4f8] sm:$0xff]
    %v3277 = vrot.slane %v3245, 2
    %v3278 = vrot.slane %v3246, 2
    %v3279 = vsel %vm2196, %v3277, %v3278
    %v3280 = vrot.slane %v3247, 2
    %v3281 = vrot.slane %v3248, 2
    %v3282 = vsel %vm2196, %v3280, %v3281
    %v3283 = vrot.slane %v3249, 2
    %v3284 = vrot.slane %v3250, 2
    %v3285 = vsel %vm2196, %v3283, %v3284
    %v3286 = vrot.slane %v3251, 2
    %v3287 = vrot.slane %v3252, 2
    %v3288 = vsel %vm2196, %v3286, %v3287
    %v3289 = vrot.slane %v3253, 2
    %v3290 = vrot.slane %v3254, 2
    %v3291 = vsel %vm2196, %v3289, %v3290
    %v3292 = vrot.slane %v3255, 2
    %v3293 = vrot.slane %v3256, 2
    %v3294 = vsel %vm2196, %v3292, %v3293
    %v3295 = vrot.slane %v3257, 2
    %v3296 = vrot.slane %v3258, 2
    %v3297 = vsel %vm2196, %v3295, %v3296
    %v3298 = vrot.slane %v3259, 2
    %v3299 = vrot.slane %v3260, 2
    %v3300 = vsel %vm2196, %v3298, %v3299
    %v3317 = vadd.f32 %v3229, %v3279
    %v3318 = vadd.f32 %v3230, %v3278
    %v3319 = vadd.f32 %v3231, %v3282
    %v3320 = vadd.f32 %v3232, %v3281
    %v3321 = vadd.f32 %v3233, %v3285
    %v3322 = vadd.f32 %v3234, %v3284
    %v3323 = vadd.f32 %v3235, %v3288
    %v3324 = vadd.f32 %v3236, %v3287
    %v3325 = vadd.f32 %v3237, %v3291
    %v3326 = vadd.f32 %v3238, %v3290
    %v3327 = vadd.f32 %v3239, %v3294
    %v3328 = vadd.f32 %v3240, %v3293
    %v3329 = vadd.f32 %v3241, %v3297
    %v3330 = vadd.f32 %v3242, %v3296
    %v3331 = vadd.f32 %v3243, %v3300
    %v3332 = vadd.f32 %v3244, %v3299
    %v3333 = vmax.f32 %v2949, %v3317
    %v3334 = vmax.f32 %v2950, %v3318
    %v3335 = vmax.f32 %v2951, %v3319
    %v3336 = vmax.f32 %v2952, %v3320
    %v3337 = vmax.f32 %v2953, %v3321
    %v3338 = vmax.f32 %v2954, %v3322
    %v3339 = vmax.f32 %v2955, %v3323
    %v3340 = vmax.f32 %v2956, %v3324
    %v3341 = vmax.f32 %v2957, %v3325
    %v3342 = vmax.f32 %v2958, %v3326
    %v3343 = vmax.f32 %v2959, %v3327
    %v3344 = vmax.f32 %v2960, %v3328
    %v3345 = vmax.f32 %v2961, %v3329
    %v3346 = vmax.f32 %v2962, %v3330
    %v3347 = vmax.f32 %v2963, %v3331
    %v3348 = vmax.f32 %v2964, %v3332
    %v3349 = vld [vmem:[#allocation4] sm:$0x1]
    %v3351 = vperm.slane %v3349, 0
    %v3353 = vadd.f32 %v3333, %v3351
    %v3354 = vadd.f32 %v3334, %v3351
    %v3355 = vadd.f32 %v3335, %v3351
    %v3356 = vadd.f32 %v3336, %v3351
    %v3357 = vadd.f32 %v3337, %v3351
    %v3358 = vadd.f32 %v3338, %v3351
    %v3359 = vadd.f32 %v3339, %v3351
    %v3360 = vadd.f32 %v3340, %v3351
    %v3361 = vadd.f32 %v3341, %v3351
    %v3362 = vadd.f32 %v3342, %v3351
    %v3363 = vadd.f32 %v3343, %v3351
    %v3364 = vadd.f32 %v3344, %v3351
    %v3365 = vadd.f32 %v3345, %v3351
    %v3366 = vadd.f32 %v3346, %v3351
    %v3367 = vadd.f32 %v3347, %v3351
    %v3368 = vadd.f32 %v3348, %v3351
    %v3369 = vmax.f32 %v3353, 0.0
    %v3370 = vmax.f32 %v3354, 0.0
    %v3371 = vmax.f32 %v3355, 0.0
    %v3372 = vmax.f32 %v3356, 0.0
    %v3373 = vmax.f32 %v3357, 0.0
    %v3374 = vmax.f32 %v3358, 0.0
    %v3375 = vmax.f32 %v3359, 0.0
    %v3376 = vmax.f32 %v3360, 0.0
    %v3377 = vmax.f32 %v3361, 0.0
    %v3378 = vmax.f32 %v3362, 0.0
    %v3379 = vmax.f32 %v3363, 0.0
    %v3380 = vmax.f32 %v3364, 0.0
    %v3381 = vmax.f32 %v3365, 0.0
    %v3382 = vmax.f32 %v3366, 0.0
    %v3383 = vmax.f32 %v3367, 0.0
    %v3384 = vmax.f32 %v3368, 0.0
    %v3385 = vpack.c.bf16 %v3369, %v3369
    %v3386 = vpack.c.bf16 %v3370, %v3370
    %v3387 = vpack.c.bf16 %v3371, %v3371
    %v3388 = vpack.c.bf16 %v3372, %v3372
    %v3389 = vpack.c.bf16 %v3373, %v3373
    %v3390 = vpack.c.bf16 %v3374, %v3374
    %v3391 = vpack.c.bf16 %v3375, %v3375
    %v3392 = vpack.c.bf16 %v3376, %v3376
    %v3393 = vpack.c.bf16 %v3377, %v3377
    %v3394 = vpack.c.bf16 %v3378, %v3378
    %v3395 = vpack.c.bf16 %v3379, %v3379
    %v3396 = vpack.c.bf16 %v3380, %v3380
    %v3397 = vpack.c.bf16 %v3381, %v3381
    %v3398 = vpack.c.bf16 %v3382, %v3382
    %v3399 = vpack.c.bf16 %v3383, %v3383
    %v3400 = vpack.c.bf16 %v3384, %v3384
    %3401 = vst [vmem:[%s4] sm:$0xf] %v3385
    %3402 = vst [vmem:[%s4 + $0x4] sm:$0x7] %v3386
    %3403 = vst [vmem:[%s4 + $0x8] sm:$0xf] %v3387
    %3404 = vst [vmem:[%s4 + $0xc] sm:$0x7] %v3388
    %3405 = vst [vmem:[%s4 + $0x10] sm:$0xf] %v3389
    %3406 = vst [vmem:[%s4 + $0x14] sm:$0x7] %v3390
    %3407 = vst [vmem:[%s4 + $0x18] sm:$0xf] %v3391
    %3408 = vst [vmem:[%s4 + $0x1c] sm:$0x7] %v3392
    %3409 = vst [vmem:[%s4 + $0x20] sm:$0xf] %v3393
    %3410 = vst [vmem:[%s4 + $0x24] sm:$0x7] %v3394
    %3411 = vst [vmem:[%s4 + $0x28] sm:$0xf] %v3395
    %3412 = vst [vmem:[%s4 + $0x2c] sm:$0x7] %v3396
    %3413 = vst [vmem:[%s4 + $0x30] sm:$0xf] %v3397
    %3414 = vst [vmem:[%s4 + $0x34] sm:$0x7] %v3398
    %3415 = vst [vmem:[%s4 + $0x38] sm:$0xf] %v3399
    %3416 = vst [vmem:[%s4 + $0x3c] sm:$0x7] %v3400
    // Predicated region
    $region22: #{net_forward.3} parent=1 // pred_check
      _
    $region23: #{net_forward.3} parent=1 // pred_check_branch
      %3418 = sbr.rel (0) target = $region25
    $region24: #{net_forward.3} parent=1 // pred_region
      _
    $region25: #{net_forward.3} parent=1 // pred_fallthru
      _
    // Predicated region
    $region26: #{net_forward.3} parent=1 // pred_check
      _
    $region27: #{net_forward.3} parent=1 // pred_check_branch
      %3420 = sbr.rel (0) target = $region29
    $region28: #{net_forward.3} parent=1 // pred_region
      _
    $region29: #{net_forward.3} parent=1 // pred_fallthru
      _
    %3421 = vsyncpa [#allocation5], 1

</llo_original>
